<compile_context>
chip_gen: v5e
topology: v5e:2x2
jax: 0.10.0
libtpu: 0.0.40
codegen_flags: <defaults>
</compile_context>

<pallas_src>
import jax
import jax.numpy as jnp
import numpy as np
from jax.experimental import pallas as pl
from jax.experimental.pallas import tpu as pltpu

# ---- model hyperparameters (small, consistent with the module) ----
BATCH = 2
SEQ = 8
INPUT_DIM = 4
HIDDEN = 32          # -> 4*H = 128 gate width (lane friendly)
OUTPUT_DIM = 3
NUM_LAYERS = 2       # two stacked LSTM layers hardcoded below
N_ODE_STEPS = 16     # fixed-step RK4 for odeint([0, 1])
LANE = 128           # padded output width (lane-dense final store)
SUBLANE = 8          # padded batch (sublane-dense)

# ---- static row layout of the single packed parameter slab (f32, 8*H lanes wide) ----
ROW_WTOP = 0                           # (H, 8H)  = [W_ih1 | W_hh0], gate cols pre-scaled
ROW_WIH0 = ROW_WTOP + HIDDEN           # (Din, 4H), 8 rows reserved (Din <= 8)
ROW_WHH1 = ROW_WIH0 + SUBLANE          # (H, 4H)
ROW_FCWH = ROW_WHH1 + HIDDEN           # (H, 128)  fc weight (hidden part), lane-padded
ROW_ODEW = ROW_FCWH + HIDDEN           # (H, H)    in lanes 0:H
ROW_B0 = ROW_ODEW + HIDDEN             # (1, 4H)   combined layer-0 bias (scaled)
ROW_B1 = ROW_B0 + 1                    # (1, 4H)   combined layer-1 bias (scaled)
ROW_ODEB = ROW_B1 + 1                  # (1, H)
ROW_FCB = ROW_ODEB + 1                 # (1, 128)  fc bias, lane-padded
ROW_FCWT = ROW_FCB + 1                 # (2, 128)  fc weight (t part), lane-padded
N_ROWS = -(-(ROW_FCWT + 2) // SUBLANE) * SUBLANE


def nodelstm_kernel(data_ref,   # (T*B + B, Din): time-major x rows, then padded t rows
                    slab_ref,   # (N_ROWS, 8H): all weights/biases packed (one DMA)
                    out_ref,    # (B, 128)
                    xproj_ref): # VMEM scratch (T*B, 4H): precomputed layer-0 input proj
    B = out_ref.shape[0]
    H = slab_ref.shape[1] // 8
    H4 = 4 * H
    Din = data_ref.shape[1]
    T = xproj_ref.shape[0] // B

    # ---- layer-0 input projection for all timesteps in one MXU call (b0 folded) ----
    wih0 = slab_ref[ROW_WIH0:ROW_WIH0 + Din, 0:H4]               # (Din, 4H)
    b0 = slab_ref[ROW_B0:ROW_B0 + 1, 0:H4]                       # (1, 4H)
    x = data_ref[0:T * B, :]                                     # (T*B, Din)
    xproj_ref[...] = jnp.dot(x, wih0, preferred_element_type=jnp.float32) + b0

    # ---- recurrence weights / biases (loaded once, hoisted broadcasts) ----
    wtop = slab_ref[ROW_WTOP:ROW_WTOP + H, :]                    # (H, 8H) = [Wih1 | Whh0]
    whh1 = slab_ref[ROW_WHH1:ROW_WHH1 + H, 0:H4]                 # (H, 4H)
    b1b = jnp.broadcast_to(slab_ref[ROW_B1:ROW_B1 + 1, 0:H4], (B, H4))

    def gate_act(g):
        # i/f/o weight columns are pre-scaled by 0.5 in the wrapper, so a single
        # full-width tanh yields sigmoid via 0.5*tanh(x/2)+0.5 (and g directly).
        th = jnp.tanh(g)
        i = 0.5 * th[:, 0:H] + 0.5
        f = 0.5 * th[:, H:2 * H] + 0.5
        gg = th[:, 2 * H:3 * H]
        o = 0.5 * th[:, 3 * H:4 * H] + 0.5
        return i, f, gg, o

    zeros = jnp.zeros((B, H), jnp.float32)
    c0, c1, h1 = zeros, zeros, zeros
    rec0 = None    # h0(t-1) @ Whh0, produced by the fused dot of the previous step
    h1rec = None   # h1(t-1) @ Whh1

    # ---- stacked LSTM recurrence, fully unrolled (T small & static) ----
    for t in range(T):
        # layer 0: precomputed input projection (+ recurrent term from previous step)
        xs = xproj_ref[t * B:(t + 1) * B, :]                     # (B, 4H) load from VMEM
        gates0 = xs if t == 0 else xs + rec0
        i0, f0, g0, o0 = gate_act(gates0)
        c0 = f0 * c0 + i0 * g0
        h0 = o0 * jnp.tanh(c0)

        # fused dot: cols 0:4H -> layer-1 gates(t), cols 4H:8H -> rec0 for step t+1
        big = jnp.dot(h0, wtop, preferred_element_type=jnp.float32)   # (B, 8H)
        gates1 = big[:, 0:H4] + b1b if t == 0 else big[:, 0:H4] + h1rec + b1b
        i1, f1, g1, o1 = gate_act(gates1)
        c1 = f1 * c1 + i1 * g1
        h1 = o1 * jnp.tanh(c1)

        if t + 1 < T:
            rec0 = big[:, H4:2 * H4]
            # depends only on h1(t); overlaps with layer-0 work of step t+1
            h1rec = jnp.dot(h1, whh1, preferred_element_type=jnp.float32)

    # ---- ODE: dh/dt = relu(h @ W + b), fixed-step RK4 over t in [0, 1] ----
    ode_w = slab_ref[ROW_ODEW:ROW_ODEW + H, 0:H]                 # (H, H)
    ode_bb = jnp.broadcast_to(slab_ref[ROW_ODEB:ROW_ODEB + 1, 0:H], (B, H))
    dt = jnp.float32(1.0 / N_ODE_STEPS)

    def f_ode(h):
        return jnp.maximum(
            jnp.dot(h, ode_w, preferred_element_type=jnp.float32) + ode_bb, 0.0)

    h = h1
    for _ in range(N_ODE_STEPS):      # fully unrolled
        k1 = f_ode(h)
        k2 = f_ode(h + (0.5 * dt) * k1)
        k3 = f_ode(h + (0.5 * dt) * k2)
        k4 = f_ode(h + dt * k3)
        h = h + (dt / 6.0) * (k1 + 2.0 * k2 + 2.0 * k3 + k4)

    # ---- final fc on concat(ode_out, t): h-part on MXU, t-part via broadcasts ----
    fc_wh = slab_ref[ROW_FCWH:ROW_FCWH + H, :LANE]               # (H, 128)
    fc_wt = slab_ref[ROW_FCWT:ROW_FCWT + 2, :LANE]               # (2, 128)
    fc_b = slab_ref[ROW_FCB:ROW_FCB + 1, :LANE]                  # (1, 128)
    tfeat = data_ref[T * B:T * B + B, 0:2]                       # (B, 2)
    t_contrib = (tfeat[:, 0:1] * fc_wt[0:1, :] +
                 tfeat[:, 1:2] * fc_wt[1:2, :])                  # (B, 128)
    out_ref[...] = (jnp.dot(h, fc_wh, preferred_element_type=jnp.float32)
                    + t_contrib + fc_b)                          # full (8,128) unmasked store


def nodelstm_forward(x, tfeat, params):
    """x: (B, T, Din) float32, tfeat: (B, 2) float32."""
    (wih0, whh0, b0, wih1, whh1, b1,
     ode_w, ode_b, fc_wh, fc_wt, fc_b) = params
    B, T, Din = x.shape
    H = whh0.shape[0]
    H4, H8 = 4 * H, 8 * H
    Dout = fc_wh.shape[1]
    assert 2 <= Din <= SUBLANE and H4 == LANE

    Bp = -(-B // SUBLANE) * SUBLANE

    # sigmoid(x) = 0.5*tanh(x/2) + 0.5 -> pre-scale i/f/o gate columns by 0.5
    col_scale = jnp.concatenate([jnp.full((2 * H,), 0.5, jnp.float32),
                                 jnp.ones((H,), jnp.float32),
                                 jnp.full((H,), 0.5, jnp.float32)])
    wih0_s, whh0_s, b0_s = wih0 * col_scale, whh0 * col_scale, b0 * col_scale
    wih1_s, whh1_s, b1_s = wih1 * col_scale, whh1 * col_scale, b1 * col_scale

    # fused per-step weight: one (B,H)@(H,8H) dot yields gates1(t) and rec0(t+1)
    wtop = jnp.concatenate([wih1_s, whh0_s], axis=1)             # (H, 8H)

    # ---- data slab: time-major x rows, then padded t rows -> one DMA ----
    x_p = jnp.pad(x, ((0, Bp - B), (0, 0), (0, 0)))
    x_tm = jnp.transpose(x_p, (1, 0, 2)).reshape(T * Bp, Din)
    t_p = jnp.pad(tfeat, ((0, Bp - B), (0, Din - tfeat.shape[1])))
    data = jnp.concatenate([x_tm, t_p], axis=0)                  # (T*Bp + Bp, Din)

    # ---- parameter slab: all weights/biases packed into one (N_ROWS, 8H) array ----
    pad_out = ((0, 0), (0, LANE - Dout))
    slab = jnp.zeros((N_ROWS, H8), jnp.float32)
    slab = slab.at[ROW_WTOP:ROW_WTOP + H, :].set(wtop)
    slab = slab.at[ROW_WIH0:ROW_WIH0 + Din, 0:H4].set(wih0_s)
    slab = slab.at[ROW_WHH1:ROW_WHH1 + H, 0:H4].set(whh1_s)
    slab = slab.at[ROW_FCWH:ROW_FCWH + H, 0:LANE].set(jnp.pad(fc_wh, pad_out))
    slab = slab.at[ROW_ODEW:ROW_ODEW + H, 0:H].set(ode_w)
    slab = slab.at[ROW_B0:ROW_B0 + 1, 0:H4].set(b0_s)
    slab = slab.at[ROW_B1:ROW_B1 + 1, 0:H4].set(b1_s)
    slab = slab.at[ROW_ODEB:ROW_ODEB + 1, 0:H].set(ode_b)
    slab = slab.at[ROW_FCB:ROW_FCB + 1, 0:LANE].set(jnp.pad(fc_b, pad_out))
    slab = slab.at[ROW_FCWT:ROW_FCWT + 2, 0:LANE].set(jnp.pad(fc_wt, pad_out))

    out = pl.pallas_call(
        nodelstm_kernel,
        out_shape=jax.ShapeDtypeStruct((Bp, LANE), jnp.float32),
        scratch_shapes=[pltpu.VMEM((T * Bp, H4), jnp.float32)],
    )(data, slab)
    return out[:B, :Dout]


def reference_forward(x, tfeat, params):
    """Pure-JAX reference with identical math (same fixed-step RK4)."""
    (wih0, whh0, b0, wih1, whh1, b1,
     ode_w, ode_b, fc_wh, fc_wt, fc_b) = params
    B, T, _ = x.shape
    H = whh0.shape[0]

    def cell(xt, h, c, wih, whh, b):
        g = xt @ wih + h @ whh + b
        i = jax.nn.sigmoid(g[:, :H])
        f = jax.nn.sigmoid(g[:, H:2 * H])
        gg = jnp.tanh(g[:, 2 * H:3 * H])
        o = jax.nn.sigmoid(g[:, 3 * H:])
        c = f * c + i * gg
        return o * jnp.tanh(c), c

    h0 = c0 = h1 = c1 = jnp.zeros((B, H), jnp.float32)
    for t in range(T):
        h0, c0 = cell(x[:, t, :], h0, c0, wih0, whh0, b0)
        h1, c1 = cell(h0, h1, c1, wih1, whh1, b1)

    def f_ode(h):
        return jnp.maximum(h @ ode_w + ode_b, 0.0)

    dt = 1.0 / N_ODE_STEPS
    h = h1
    for _ in range(N_ODE_STEPS):
        k1 = f_ode(h)
        k2 = f_ode(h + 0.5 * dt * k1)
        k3 = f_ode(h + 0.5 * dt * k2)
        k4 = f_ode(h + dt * k3)
        h = h + (dt / 6.0) * (k1 + 2.0 * k2 + 2.0 * k3 + k4)

    t_contrib = tfeat[:, 0:1] * fc_wt[0:1, :] + tfeat[:, 1:2] * fc_wt[1:2, :]
    return h @ fc_wh + t_contrib + fc_b


def init_params(key):
    """Deterministic PyTorch-style uniform(-1/sqrt(H), 1/sqrt(H)) init."""
    H, Din, Dout = HIDDEN, INPUT_DIM, OUTPUT_DIM
    k = 1.0 / np.sqrt(H)
    keys = jax.random.split(key, 14)

    def u(kk, shape):
        return jax.random.uniform(kk, shape, jnp.float32, -k, k)

    # PyTorch LSTM parameter shapes (layer 0 and layer 1), then pre-transpose.
    w_ih0 = u(keys[0], (4 * H, Din));  w_hh0 = u(keys[1], (4 * H, H))
    b_ih0 = u(keys[2], (4 * H,));      b_hh0 = u(keys[3], (4 * H,))
    w_ih1 = u(keys[4], (4 * H, H));    w_hh1 = u(keys[5], (4 * H, H))
    b_ih1 = u(keys[6], (4 * H,));      b_hh1 = u(keys[7], (4 * H,))
    ode_w = u(keys[8], (H, H));        ode_b = u(keys[9], (H,))
    fc_w = u(keys[10], (Dout, H + 2)); fc_b = u(keys[11], (Dout,))

    params = (
        w_ih0.T, w_hh0.T, (b_ih0 + b_hh0).reshape(1, 4 * H),
        w_ih1.T, w_hh1.T, (b_ih1 + b_hh1).reshape(1, 4 * H),
        ode_w.T, ode_b.reshape(1, H),
        fc_w[:, :H].T, fc_w[:, H:].T, fc_b.reshape(1, Dout),
    )
    return params


if __name__ == "__main__":
    key = jax.random.PRNGKey(0)
    k_param, k_x, k_t = jax.random.split(key, 3)

    params = init_params(k_param)
    x = jax.random.normal(k_x, (BATCH, SEQ, INPUT_DIM), jnp.float32)
    t_in = jax.random.normal(k_t, (BATCH, 2), jnp.float32)

    out = nodelstm_forward(x, t_in, params)
    out = jax.block_until_ready(out)

    ref = reference_forward(x, t_in, params)
    assert out.shape == (BATCH, OUTPUT_DIM)
    np.testing.assert_allclose(np.asarray(out), np.asarray(ref),
                               rtol=2e-4, atol=2e-4)
    print("KERNEL_OK")
</pallas_src>

<mosaic_0001>
module attributes {stable_mosaic.version = 11 : i64} {
  func.func @nodelstm_kernel(%arg0: memref<72x4xf32, #tpu.memory_space<vmem>>, %arg1: memref<144x256xf32, #tpu.memory_space<vmem>>, %arg2: memref<8x128xf32, #tpu.memory_space<vmem>>, %arg3: memref<64x128xf32, #tpu.memory_space<vmem>>) attributes {dimension_semantics = [], scalar_prefetch = 0 : i64, scratch_operands = 1 : i64, tpu.core_type = #tpu.core_type<tc>} {
    %c32 = arith.constant 32 : index
    %c0 = arith.constant 0 : index
    %0 = vector.load %arg1[%c32, %c0] : memref<144x256xf32, #tpu.memory_space<vmem>>, vector<4x128xf32>
    %c136 = arith.constant 136 : index
    %c0_0 = arith.constant 0 : index
    %1 = vector.load %arg1[%c136, %c0_0] : memref<144x256xf32, #tpu.memory_space<vmem>>, vector<1x128xf32>
    %c0_1 = arith.constant 0 : index
    %c0_2 = arith.constant 0 : index
    %2 = vector.load %arg0[%c0_1, %c0_2] : memref<72x4xf32, #tpu.memory_space<vmem>>, vector<64x4xf32>
    %cst = arith.constant dense<0.000000e+00> : vector<64x128xf32>
    %3 = tpu.matmul %2, %0, %cst {dimension_numbers = #tpu.dot_dimension_numbers<[1], [0], [0], [1], [0, 0, 1, 1], [], []>} : vector<64x4xf32>, vector<4x128xf32>, vector<64x128xf32> -> vector<64x128xf32>
    %4 = vector.broadcast %1 : vector<1x128xf32> to vector<64x128xf32>
    %5 = arith.addf %3, %4 : vector<64x128xf32>
    %c0_3 = arith.constant 0 : index
    %c0_4 = arith.constant 0 : index
    %6 = vector.load %arg3[%c0_3, %c0_4] : memref<64x128xf32, #tpu.memory_space<vmem>>, vector<64x128xf32>
    tpu.vector_store %arg3[%c0_3, %c0_4], %5 {strides = array<i32>} : memref<64x128xf32, #tpu.memory_space<vmem>>, vector<64x128xf32>,
    %c0_5 = arith.constant 0 : index
    %c0_6 = arith.constant 0 : index
    %7 = vector.load %arg1[%c0_5, %c0_6] : memref<144x256xf32, #tpu.memory_space<vmem>>, vector<32x256xf32>
    %c40 = arith.constant 40 : index
    %c0_7 = arith.constant 0 : index
    %8 = vector.load %arg1[%c40, %c0_7] : memref<144x256xf32, #tpu.memory_space<vmem>>, vector<32x128xf32>
    %c137 = arith.constant 137 : index
    %c0_8 = arith.constant 0 : index
    %9 = vector.load %arg1[%c137, %c0_8] : memref<144x256xf32, #tpu.memory_space<vmem>>, vector<1x128xf32>
    %10 = vector.shape_cast %9 : vector<1x128xf32> to vector<1x128xf32>
    %11 = vector.broadcast %10 : vector<1x128xf32> to vector<8x128xf32>
    %cst_9 = arith.constant 0.000000e+00 : f32
    %12 = vector.broadcast %cst_9 : f32 to vector<8x32xf32>
    %c0_10 = arith.constant 0 : index
    %c0_11 = arith.constant 0 : index
    %13 = vector.load %arg3[%c0_10, %c0_11] : memref<64x128xf32, #tpu.memory_space<vmem>>, vector<8x128xf32>
    %14 = math.tanh %13 : vector<8x128xf32>
    %15 = vector.extract_strided_slice %14 {offsets = [0, 0], sizes = [8, 32], strides = [1, 1]} : vector<8x128xf32> to vector<8x32xf32>
    %cst_12 = arith.constant 5.000000e-01 : f32
    %16 = vector.broadcast %cst_12 : f32 to vector<8x32xf32>
    %17 = arith.mulf %16, %15 : vector<8x32xf32>
    %cst_13 = arith.constant 5.000000e-01 : f32
    %18 = vector.broadcast %cst_13 : f32 to vector<8x32xf32>
    %19 = arith.addf %17, %18 : vector<8x32xf32>
    %20 = vector.extract_strided_slice %14 {offsets = [0, 32], sizes = [8, 32], strides = [1, 1]} : vector<8x128xf32> to vector<8x32xf32>
    %cst_14 = arith.constant 5.000000e-01 : f32
    %21 = vector.broadcast %cst_14 : f32 to vector<8x32xf32>
    %22 = arith.mulf %21, %20 : vector<8x32xf32>
    %cst_15 = arith.constant 5.000000e-01 : f32
    %23 = vector.broadcast %cst_15 : f32 to vector<8x32xf32>
    %24 = arith.addf %22, %23 : vector<8x32xf32>
    %25 = vector.extract_strided_slice %14 {offsets = [0, 64], sizes = [8, 32], strides = [1, 1]} : vector<8x128xf32> to vector<8x32xf32>
    %26 = vector.extract_strided_slice %14 {offsets = [0, 96], sizes = [8, 32], strides = [1, 1]} : vector<8x128xf32> to vector<8x32xf32>
    %cst_16 = arith.constant 5.000000e-01 : f32
    %27 = vector.broadcast %cst_16 : f32 to vector<8x32xf32>
    %28 = arith.mulf %27, %26 : vector<8x32xf32>
    %cst_17 = arith.constant 5.000000e-01 : f32
    %29 = vector.broadcast %cst_17 : f32 to vector<8x32xf32>
    %30 = arith.addf %28, %29 : vector<8x32xf32>
    %31 = arith.mulf %24, %12 : vector<8x32xf32>
    %32 = arith.mulf %19, %25 : vector<8x32xf32>
    %33 = arith.addf %31, %32 : vector<8x32xf32>
    %34 = math.tanh %33 : vector<8x32xf32>
    %35 = arith.mulf %30, %34 : vector<8x32xf32>
    %cst_18 = arith.constant dense<0.000000e+00> : vector<8x256xf32>
    %36 = tpu.matmul %35, %7, %cst_18 {dimension_numbers = #tpu.dot_dimension_numbers<[1], [0], [0], [1], [0, 0, 1, 1], [], []>} : vector<8x32xf32>, vector<32x256xf32>, vector<8x256xf32> -> vector<8x256xf32>
    %37 = vector.extract_strided_slice %36 {offsets = [0, 0], sizes = [8, 128], strides = [1, 1]} : vector<8x256xf32> to vector<8x128xf32>
    %38 = arith.addf %37, %11 : vector<8x128xf32>
    %39 = math.tanh %38 : vector<8x128xf32>
    %40 = vector.extract_strided_slice %39 {offsets = [0, 0], sizes = [8, 32], strides = [1, 1]} : vector<8x128xf32> to vector<8x32xf32>
    %cst_19 = arith.constant 5.000000e-01 : f32
    %41 = vector.broadcast %cst_19 : f32 to vector<8x32xf32>
    %42 = arith.mulf %41, %40 : vector<8x32xf32>
    %cst_20 = arith.constant 5.000000e-01 : f32
    %43 = vector.broadcast %cst_20 : f32 to vector<8x32xf32>
    %44 = arith.addf %42, %43 : vector<8x32xf32>
    %45 = vector.extract_strided_slice %39 {offsets = [0, 32], sizes = [8, 32], strides = [1, 1]} : vector<8x128xf32> to vector<8x32xf32>
    %cst_21 = arith.constant 5.000000e-01 : f32
    %46 = vector.broadcast %cst_21 : f32 to vector<8x32xf32>
    %47 = arith.mulf %46, %45 : vector<8x32xf32>
    %cst_22 = arith.constant 5.000000e-01 : f32
    %48 = vector.broadcast %cst_22 : f32 to vector<8x32xf32>
    %49 = arith.addf %47, %48 : vector<8x32xf32>
    %50 = vector.extract_strided_slice %39 {offsets = [0, 64], sizes = [8, 32], strides = [1, 1]} : vector<8x128xf32> to vector<8x32xf32>
    %51 = vector.extract_strided_slice %39 {offsets = [0, 96], sizes = [8, 32], strides = [1, 1]} : vector<8x128xf32> to vector<8x32xf32>
    %cst_23 = arith.constant 5.000000e-01 : f32
    %52 = vector.broadcast %cst_23 : f32 to vector<8x32xf32>
    %53 = arith.mulf %52, %51 : vector<8x32xf32>
    %cst_24 = arith.constant 5.000000e-01 : f32
    %54 = vector.broadcast %cst_24 : f32 to vector<8x32xf32>
    %55 = arith.addf %53, %54 : vector<8x32xf32>
    %56 = arith.mulf %49, %12 : vector<8x32xf32>
    %57 = arith.mulf %44, %50 : vector<8x32xf32>
    %58 = arith.addf %56, %57 : vector<8x32xf32>
    %59 = math.tanh %58 : vector<8x32xf32>
    %60 = arith.mulf %55, %59 : vector<8x32xf32>
    %61 = vector.extract_strided_slice %36 {offsets = [0, 128], sizes = [8, 128], strides = [1, 1]} : vector<8x256xf32> to vector<8x128xf32>
    %cst_25 = arith.constant dense<0.000000e+00> : vector<8x128xf32>
    %62 = tpu.matmul %60, %8, %cst_25 {dimension_numbers = #tpu.dot_dimension_numbers<[1], [0], [0], [1], [0, 0, 1, 1], [], []>} : vector<8x32xf32>, vector<32x128xf32>, vector<8x128xf32> -> vector<8x128xf32>
    %c8 = arith.constant 8 : index
    %c0_26 = arith.constant 0 : index
    %63 = vector.load %arg3[%c8, %c0_26] : memref<64x128xf32, #tpu.memory_space<vmem>>, vector<8x128xf32>
    %64 = arith.addf %63, %61 : vector<8x128xf32>
    %65 = math.tanh %64 : vector<8x128xf32>
    %66 = vector.extract_strided_slice %65 {offsets = [0, 0], sizes = [8, 32], strides = [1, 1]} : vector<8x128xf32> to vector<8x32xf32>
    %cst_27 = arith.constant 5.000000e-01 : f32
    %67 = vector.broadcast %cst_27 : f32 to vector<8x32xf32>
    %68 = arith.mulf %67, %66 : vector<8x32xf32>
    %cst_28 = arith.constant 5.000000e-01 : f32
    %69 = vector.broadcast %cst_28 : f32 to vector<8x32xf32>
    %70 = arith.addf %68, %69 : vector<8x32xf32>
    %71 = vector.extract_strided_slice %65 {offsets = [0, 32], sizes = [8, 32], strides = [1, 1]} : vector<8x128xf32> to vector<8x32xf32>
    %cst_29 = arith.constant 5.000000e-01 : f32
    %72 = vector.broadcast %cst_29 : f32 to vector<8x32xf32>
    %73 = arith.mulf %72, %71 : vector<8x32xf32>
    %cst_30 = arith.constant 5.000000e-01 : f32
    %74 = vector.broadcast %cst_30 : f32 to vector<8x32xf32>
    %75 = arith.addf %73, %74 : vector<8x32xf32>
    %76 = vector.extract_strided_slice %65 {offsets = [0, 64], sizes = [8, 32], strides = [1, 1]} : vector<8x128xf32> to vector<8x32xf32>
    %77 = vector.extract_strided_slice %65 {offsets = [0, 96], sizes = [8, 32], strides = [1, 1]} : vector<8x128xf32> to vector<8x32xf32>
    %cst_31 = arith.constant 5.000000e-01 : f32
    %78 = vector.broadcast %cst_31 : f32 to vector<8x32xf32>
    %79 = arith.mulf %78, %77 : vector<8x32xf32>
    %cst_32 = arith.constant 5.000000e-01 : f32
    %80 = vector.broadcast %cst_32 : f32 to vector<8x32xf32>
    %81 = arith.addf %79, %80 : vector<8x32xf32>
    %82 = arith.mulf %75, %33 : vector<8x32xf32>
    %83 = arith.mulf %70, %76 : vector<8x32xf32>
    %84 = arith.addf %82, %83 : vector<8x32xf32>
    %85 = math.tanh %84 : vector<8x32xf32>
    %86 = arith.mulf %81, %85 : vector<8x32xf32>
    %cst_33 = arith.constant dense<0.000000e+00> : vector<8x256xf32>
    %87 = tpu.matmul %86, %7, %cst_33 {dimension_numbers = #tpu.dot_dimension_numbers<[1], [0], [0], [1], [0, 0, 1, 1], [], []>} : vector<8x32xf32>, vector<32x256xf32>, vector<8x256xf32> -> vector<8x256xf32>
    %88 = vector.extract_strided_slice %87 {offsets = [0, 0], sizes = [8, 128], strides = [1, 1]} : vector<8x256xf32> to vector<8x128xf32>
    %89 = arith.addf %88, %62 : vector<8x128xf32>
    %90 = arith.addf %89, %11 : vector<8x128xf32>
    %91 = math.tanh %90 : vector<8x128xf32>
    %92 = vector.extract_strided_slice %91 {offsets = [0, 0], sizes = [8, 32], strides = [1, 1]} : vector<8x128xf32> to vector<8x32xf32>
    %cst_34 = arith.constant 5.000000e-01 : f32
    %93 = vector.broadcast %cst_34 : f32 to vector<8x32xf32>
    %94 = arith.mulf %93, %92 : vector<8x32xf32>
    %cst_35 = arith.constant 5.000000e-01 : f32
    %95 = vector.broadcast %cst_35 : f32 to vector<8x32xf32>
    %96 = arith.addf %94, %95 : vector<8x32xf32>
    %97 = vector.extract_strided_slice %91 {offsets = [0, 32], sizes = [8, 32], strides = [1, 1]} : vector<8x128xf32> to vector<8x32xf32>
    %cst_36 = arith.constant 5.000000e-01 : f32
    %98 = vector.broadcast %cst_36 : f32 to vector<8x32xf32>
    %99 = arith.mulf %98, %97 : vector<8x32xf32>
    %cst_37 = arith.constant 5.000000e-01 : f32
    %100 = vector.broadcast %cst_37 : f32 to vector<8x32xf32>
    %101 = arith.addf %99, %100 : vector<8x32xf32>
    %102 = vector.extract_strided_slice %91 {offsets = [0, 64], sizes = [8, 32], strides = [1, 1]} : vector<8x128xf32> to vector<8x32xf32>
    %103 = vector.extract_strided_slice %91 {offsets = [0, 96], sizes = [8, 32], strides = [1, 1]} : vector<8x128xf32> to vector<8x32xf32>
    %cst_38 = arith.constant 5.000000e-01 : f32
    %104 = vector.broadcast %cst_38 : f32 to vector<8x32xf32>
    %105 = arith.mulf %104, %103 : vector<8x32xf32>
    %cst_39 = arith.constant 5.000000e-01 : f32
    %106 = vector.broadcast %cst_39 : f32 to vector<8x32xf32>
    %107 = arith.addf %105, %106 : vector<8x32xf32>
    %108 = arith.mulf %101, %58 : vector<8x32xf32>
    %109 = arith.mulf %96, %102 : vector<8x32xf32>
    %110 = arith.addf %108, %109 : vector<8x32xf32>
    %111 = math.tanh %110 : vector<8x32xf32>
    %112 = arith.mulf %107, %111 : vector<8x32xf32>
    %113 = vector.extract_strided_slice %87 {offsets = [0, 128], sizes = [8, 128], strides = [1, 1]} : vector<8x256xf32> to vector<8x128xf32>
    %cst_40 = arith.constant dense<0.000000e+00> : vector<8x128xf32>
    %114 = tpu.matmul %112, %8, %cst_40 {dimension_numbers = #tpu.dot_dimension_numbers<[1], [0], [0], [1], [0, 0, 1, 1], [], []>} : vector<8x32xf32>, vector<32x128xf32>, vector<8x128xf32> -> vector<8x128xf32>
    %c16 = arith.constant 16 : index
    %c0_41 = arith.constant 0 : index
    %115 = vector.load %arg3[%c16, %c0_41] : memref<64x128xf32, #tpu.memory_space<vmem>>, vector<8x128xf32>
    %116 = arith.addf %115, %113 : vector<8x128xf32>
    %117 = math.tanh %116 : vector<8x128xf32>
    %118 = vector.extract_strided_slice %117 {offsets = [0, 0], sizes = [8, 32], strides = [1, 1]} : vector<8x128xf32> to vector<8x32xf32>
    %cst_42 = arith.constant 5.000000e-01 : f32
    %119 = vector.broadcast %cst_42 : f32 to vector<8x32xf32>
    %120 = arith.mulf %119, %118 : vector<8x32xf32>
    %cst_43 = arith.constant 5.000000e-01 : f32
    %121 = vector.broadcast %cst_43 : f32 to vector<8x32xf32>
    %122 = arith.addf %120, %121 : vector<8x32xf32>
    %123 = vector.extract_strided_slice %117 {offsets = [0, 32], sizes = [8, 32], strides = [1, 1]} : vector<8x128xf32> to vector<8x32xf32>
    %cst_44 = arith.constant 5.000000e-01 : f32
    %124 = vector.broadcast %cst_44 : f32 to vector<8x32xf32>
    %125 = arith.mulf %124, %123 : vector<8x32xf32>
    %cst_45 = arith.constant 5.000000e-01 : f32
    %126 = vector.broadcast %cst_45 : f32 to vector<8x32xf32>
    %127 = arith.addf %125, %126 : vector<8x32xf32>
    %128 = vector.extract_strided_slice %117 {offsets = [0, 64], sizes = [8, 32], strides = [1, 1]} : vector<8x128xf32> to vector<8x32xf32>
    %129 = vector.extract_strided_slice %117 {offsets = [0, 96], sizes = [8, 32], strides = [1, 1]} : vector<8x128xf32> to vector<8x32xf32>
    %cst_46 = arith.constant 5.000000e-01 : f32
    %130 = vector.broadcast %cst_46 : f32 to vector<8x32xf32>
    %131 = arith.mulf %130, %129 : vector<8x32xf32>
    %cst_47 = arith.constant 5.000000e-01 : f32
    %132 = vector.broadcast %cst_47 : f32 to vector<8x32xf32>
    %133 = arith.addf %131, %132 : vector<8x32xf32>
    %134 = arith.mulf %127, %84 : vector<8x32xf32>
    %135 = arith.mulf %122, %128 : vector<8x32xf32>
    %136 = arith.addf %134, %135 : vector<8x32xf32>
    %137 = math.tanh %136 : vector<8x32xf32>
    %138 = arith.mulf %133, %137 : vector<8x32xf32>
    %cst_48 = arith.constant dense<0.000000e+00> : vector<8x256xf32>
    %139 = tpu.matmul %138, %7, %cst_48 {dimension_numbers = #tpu.dot_dimension_numbers<[1], [0], [0], [1], [0, 0, 1, 1], [], []>} : vector<8x32xf32>, vector<32x256xf32>, vector<8x256xf32> -> vector<8x256xf32>
    %140 = vector.extract_strided_slice %139 {offsets = [0, 0], sizes = [8, 128], strides = [1, 1]} : vector<8x256xf32> to vector<8x128xf32>
    %141 = arith.addf %140, %114 : vector<8x128xf32>
    %142 = arith.addf %141, %11 : vector<8x128xf32>
    %143 = math.tanh %142 : vector<8x128xf32>
    %144 = vector.extract_strided_slice %143 {offsets = [0, 0], sizes = [8, 32], strides = [1, 1]} : vector<8x128xf32> to vector<8x32xf32>
    %cst_49 = arith.constant 5.000000e-01 : f32
    %145 = vector.broadcast %cst_49 : f32 to vector<8x32xf32>
    %146 = arith.mulf %145, %144 : vector<8x32xf32>
    %cst_50 = arith.constant 5.000000e-01 : f32
    %147 = vector.broadcast %cst_50 : f32 to vector<8x32xf32>
    %148 = arith.addf %146, %147 : vector<8x32xf32>
    %149 = vector.extract_strided_slice %143 {offsets = [0, 32], sizes = [8, 32], strides = [1, 1]} : vector<8x128xf32> to vector<8x32xf32>
    %cst_51 = arith.constant 5.000000e-01 : f32
    %150 = vector.broadcast %cst_51 : f32 to vector<8x32xf32>
    %151 = arith.mulf %150, %149 : vector<8x32xf32>
    %cst_52 = arith.constant 5.000000e-01 : f32
    %152 = vector.broadcast %cst_52 : f32 to vector<8x32xf32>
    %153 = arith.addf %151, %152 : vector<8x32xf32>
    %154 = vector.extract_strided_slice %143 {offsets = [0, 64], sizes = [8, 32], strides = [1, 1]} : vector<8x128xf32> to vector<8x32xf32>
    %155 = vector.extract_strided_slice %143 {offsets = [0, 96], sizes = [8, 32], strides = [1, 1]} : vector<8x128xf32> to vector<8x32xf32>
    %cst_53 = arith.constant 5.000000e-01 : f32
    %156 = vector.broadcast %cst_53 : f32 to vector<8x32xf32>
    %157 = arith.mulf %156, %155 : vector<8x32xf32>
    %cst_54 = arith.constant 5.000000e-01 : f32
    %158 = vector.broadcast %cst_54 : f32 to vector<8x32xf32>
    %159 = arith.addf %157, %158 : vector<8x32xf32>
    %160 = arith.mulf %153, %110 : vector<8x32xf32>
    %161 = arith.mulf %148, %154 : vector<8x32xf32>
    %162 = arith.addf %160, %161 : vector<8x32xf32>
    %163 = math.tanh %162 : vector<8x32xf32>
    %164 = arith.mulf %159, %163 : vector<8x32xf32>
    %165 = vector.extract_strided_slice %139 {offsets = [0, 128], sizes = [8, 128], strides = [1, 1]} : vector<8x256xf32> to vector<8x128xf32>
    %cst_55 = arith.constant dense<0.000000e+00> : vector<8x128xf32>
    %166 = tpu.matmul %164, %8, %cst_55 {dimension_numbers = #tpu.dot_dimension_numbers<[1], [0], [0], [1], [0, 0, 1, 1], [], []>} : vector<8x32xf32>, vector<32x128xf32>, vector<8x128xf32> -> vector<8x128xf32>
    %c24 = arith.constant 24 : index
    %c0_56 = arith.constant 0 : index
    %167 = vector.load %arg3[%c24, %c0_56] : memref<64x128xf32, #tpu.memory_space<vmem>>, vector<8x128xf32>
    %168 = arith.addf %167, %165 : vector<8x128xf32>
    %169 = math.tanh %168 : vector<8x128xf32>
    %170 = vector.extract_strided_slice %169 {offsets = [0, 0], sizes = [8, 32], strides = [1, 1]} : vector<8x128xf32> to vector<8x32xf32>
    %cst_57 = arith.constant 5.000000e-01 : f32
    %171 = vector.broadcast %cst_57 : f32 to vector<8x32xf32>
    %172 = arith.mulf %171, %170 : vector<8x32xf32>
    %cst_58 = arith.constant 5.000000e-01 : f32
    %173 = vector.broadcast %cst_58 : f32 to vector<8x32xf32>
    %174 = arith.addf %172, %173 : vector<8x32xf32>
    %175 = vector.extract_strided_slice %169 {offsets = [0, 32], sizes = [8, 32], strides = [1, 1]} : vector<8x128xf32> to vector<8x32xf32>
    %cst_59 = arith.constant 5.000000e-01 : f32
    %176 = vector.broadcast %cst_59 : f32 to vector<8x32xf32>
    %177 = arith.mulf %176, %175 : vector<8x32xf32>
    %cst_60 = arith.constant 5.000000e-01 : f32
    %178 = vector.broadcast %cst_60 : f32 to vector<8x32xf32>
    %179 = arith.addf %177, %178 : vector<8x32xf32>
    %180 = vector.extract_strided_slice %169 {offsets = [0, 64], sizes = [8, 32], strides = [1, 1]} : vector<8x128xf32> to vector<8x32xf32>
    %181 = vector.extract_strided_slice %169 {offsets = [0, 96], sizes = [8, 32], strides = [1, 1]} : vector<8x128xf32> to vector<8x32xf32>
    %cst_61 = arith.constant 5.000000e-01 : f32
    %182 = vector.broadcast %cst_61 : f32 to vector<8x32xf32>
    %183 = arith.mulf %182, %181 : vector<8x32xf32>
    %cst_62 = arith.constant 5.000000e-01 : f32
    %184 = vector.broadcast %cst_62 : f32 to vector<8x32xf32>
    %185 = arith.addf %183, %184 : vector<8x32xf32>
    %186 = arith.mulf %179, %136 : vector<8x32xf32>
    %187 = arith.mulf %174, %180 : vector<8x32xf32>
    %188 = arith.addf %186, %187 : vector<8x32xf32>
    %189 = math.tanh %188 : vector<8x32xf32>
    %190 = arith.mulf %185, %189 : vector<8x32xf32>
    %cst_63 = arith.constant dense<0.000000e+00> : vector<8x256xf32>
    %191 = tpu.matmul %190, %7, %cst_63 {dimension_numbers = #tpu.dot_dimension_numbers<[1], [0], [0], [1], [0, 0, 1, 1], [], []>} : vector<8x32xf32>, vector<32x256xf32>, vector<8x256xf32> -> vector<8x256xf32>
    %192 = vector.extract_strided_slice %191 {offsets = [0, 0], sizes = [8, 128], strides = [1, 1]} : vector<8x256xf32> to vector<8x128xf32>
    %193 = arith.addf %192, %166 : vector<8x128xf32>
    %194 = arith.addf %193, %11 : vector<8x128xf32>
    %195 = math.tanh %194 : vector<8x128xf32>
    %196 = vector.extract_strided_slice %195 {offsets = [0, 0], sizes = [8, 32], strides = [1, 1]} : vector<8x128xf32> to vector<8x32xf32>
    %cst_64 = arith.constant 5.000000e-01 : f32
    %197 = vector.broadcast %cst_64 : f32 to vector<8x32xf32>
    %198 = arith.mulf %197, %196 : vector<8x32xf32>
    %cst_65 = arith.constant 5.000000e-01 : f32
    %199 = vector.broadcast %cst_65 : f32 to vector<8x32xf32>
    %200 = arith.addf %198, %199 : vector<8x32xf32>
    %201 = vector.extract_strided_slice %195 {offsets = [0, 32], sizes = [8, 32], strides = [1, 1]} : vector<8x128xf32> to vector<8x32xf32>
    %cst_66 = arith.constant 5.000000e-01 : f32
    %202 = vector.broadcast %cst_66 : f32 to vector<8x32xf32>
    %203 = arith.mulf %202, %201 : vector<8x32xf32>
    %cst_67 = arith.constant 5.000000e-01 : f32
    %204 = vector.broadcast %cst_67 : f32 to vector<8x32xf32>
    %205 = arith.addf %203, %204 : vector<8x32xf32>
    %206 = vector.extract_strided_slice %195 {offsets = [0, 64], sizes = [8, 32], strides = [1, 1]} : vector<8x128xf32> to vector<8x32xf32>
    %207 = vector.extract_strided_slice %195 {offsets = [0, 96], sizes = [8, 32], strides = [1, 1]} : vector<8x128xf32> to vector<8x32xf32>
    %cst_68 = arith.constant 5.000000e-01 : f32
    %208 = vector.broadcast %cst_68 : f32 to vector<8x32xf32>
    %209 = arith.mulf %208, %207 : vector<8x32xf32>
    %cst_69 = arith.constant 5.000000e-01 : f32
    %210 = vector.broadcast %cst_69 : f32 to vector<8x32xf32>
    %211 = arith.addf %209, %210 : vector<8x32xf32>
    %212 = arith.mulf %205, %162 : vector<8x32xf32>
    %213 = arith.mulf %200, %206 : vector<8x32xf32>
    %214 = arith.addf %212, %213 : vector<8x32xf32>
    %215 = math.tanh %214 : vector<8x32xf32>
    %216 = arith.mulf %211, %215 : vector<8x32xf32>
    %217 = vector.extract_strided_slice %191 {offsets = [0, 128], sizes = [8, 128], strides = [1, 1]} : vector<8x256xf32> to vector<8x128xf32>
    %cst_70 = arith.constant dense<0.000000e+00> : vector<8x128xf32>
    %218 = tpu.matmul %216, %8, %cst_70 {dimension_numbers = #tpu.dot_dimension_numbers<[1], [0], [0], [1], [0, 0, 1, 1], [], []>} : vector<8x32xf32>, vector<32x128xf32>, vector<8x128xf32> -> vector<8x128xf32>
    %c32_71 = arith.constant 32 : index
    %c0_72 = arith.constant 0 : index
    %219 = vector.load %arg3[%c32_71, %c0_72] : memref<64x128xf32, #tpu.memory_space<vmem>>, vector<8x128xf32>
    %220 = arith.addf %219, %217 : vector<8x128xf32>
    %221 = math.tanh %220 : vector<8x128xf32>
    %222 = vector.extract_strided_slice %221 {offsets = [0, 0], sizes = [8, 32], strides = [1, 1]} : vector<8x128xf32> to vector<8x32xf32>
    %cst_73 = arith.constant 5.000000e-01 : f32
    %223 = vector.broadcast %cst_73 : f32 to vector<8x32xf32>
    %224 = arith.mulf %223, %222 : vector<8x32xf32>
    %cst_74 = arith.constant 5.000000e-01 : f32
    %225 = vector.broadcast %cst_74 : f32 to vector<8x32xf32>
    %226 = arith.addf %224, %225 : vector<8x32xf32>
    %227 = vector.extract_strided_slice %221 {offsets = [0, 32], sizes = [8, 32], strides = [1, 1]} : vector<8x128xf32> to vector<8x32xf32>
    %cst_75 = arith.constant 5.000000e-01 : f32
    %228 = vector.broadcast %cst_75 : f32 to vector<8x32xf32>
    %229 = arith.mulf %228, %227 : vector<8x32xf32>
    %cst_76 = arith.constant 5.000000e-01 : f32
    %230 = vector.broadcast %cst_76 : f32 to vector<8x32xf32>
    %231 = arith.addf %229, %230 : vector<8x32xf32>
    %232 = vector.extract_strided_slice %221 {offsets = [0, 64], sizes = [8, 32], strides = [1, 1]} : vector<8x128xf32> to vector<8x32xf32>
    %233 = vector.extract_strided_slice %221 {offsets = [0, 96], sizes = [8, 32], strides = [1, 1]} : vector<8x128xf32> to vector<8x32xf32>
    %cst_77 = arith.constant 5.000000e-01 : f32
    %234 = vector.broadcast %cst_77 : f32 to vector<8x32xf32>
    %235 = arith.mulf %234, %233 : vector<8x32xf32>
    %cst_78 = arith.constant 5.000000e-01 : f32
    %236 = vector.broadcast %cst_78 : f32 to vector<8x32xf32>
    %237 = arith.addf %235, %236 : vector<8x32xf32>
    %238 = arith.mulf %231, %188 : vector<8x32xf32>
    %239 = arith.mulf %226, %232 : vector<8x32xf32>
    %240 = arith.addf %238, %239 : vector<8x32xf32>
    %241 = math.tanh %240 : vector<8x32xf32>
    %242 = arith.mulf %237, %241 : vector<8x32xf32>
    %cst_79 = arith.constant dense<0.000000e+00> : vector<8x256xf32>
    %243 = tpu.matmul %242, %7, %cst_79 {dimension_numbers = #tpu.dot_dimension_numbers<[1], [0], [0], [1], [0, 0, 1, 1], [], []>} : vector<8x32xf32>, vector<32x256xf32>, vector<8x256xf32> -> vector<8x256xf32>
    %244 = vector.extract_strided_slice %243 {offsets = [0, 0], sizes = [8, 128], strides = [1, 1]} : vector<8x256xf32> to vector<8x128xf32>
    %245 = arith.addf %244, %218 : vector<8x128xf32>
    %246 = arith.addf %245, %11 : vector<8x128xf32>
    %247 = math.tanh %246 : vector<8x128xf32>
    %248 = vector.extract_strided_slice %247 {offsets = [0, 0], sizes = [8, 32], strides = [1, 1]} : vector<8x128xf32> to vector<8x32xf32>
    %cst_80 = arith.constant 5.000000e-01 : f32
    %249 = vector.broadcast %cst_80 : f32 to vector<8x32xf32>
    %250 = arith.mulf %249, %248 : vector<8x32xf32>
    %cst_81 = arith.constant 5.000000e-01 : f32
    %251 = vector.broadcast %cst_81 : f32 to vector<8x32xf32>
    %252 = arith.addf %250, %251 : vector<8x32xf32>
    %253 = vector.extract_strided_slice %247 {offsets = [0, 32], sizes = [8, 32], strides = [1, 1]} : vector<8x128xf32> to vector<8x32xf32>
    %cst_82 = arith.constant 5.000000e-01 : f32
    %254 = vector.broadcast %cst_82 : f32 to vector<8x32xf32>
    %255 = arith.mulf %254, %253 : vector<8x32xf32>
    %cst_83 = arith.constant 5.000000e-01 : f32
    %256 = vector.broadcast %cst_83 : f32 to vector<8x32xf32>
    %257 = arith.addf %255, %256 : vector<8x32xf32>
    %258 = vector.extract_strided_slice %247 {offsets = [0, 64], sizes = [8, 32], strides = [1, 1]} : vector<8x128xf32> to vector<8x32xf32>
    %259 = vector.extract_strided_slice %247 {offsets = [0, 96], sizes = [8, 32], strides = [1, 1]} : vector<8x128xf32> to vector<8x32xf32>
    %cst_84 = arith.constant 5.000000e-01 : f32
    %260 = vector.broadcast %cst_84 : f32 to vector<8x32xf32>
    %261 = arith.mulf %260, %259 : vector<8x32xf32>
    %cst_85 = arith.constant 5.000000e-01 : f32
    %262 = vector.broadcast %cst_85 : f32 to vector<8x32xf32>
    %263 = arith.addf %261, %262 : vector<8x32xf32>
    %264 = arith.mulf %257, %214 : vector<8x32xf32>
    %265 = arith.mulf %252, %258 : vector<8x32xf32>
    %266 = arith.addf %264, %265 : vector<8x32xf32>
    %267 = math.tanh %266 : vector<8x32xf32>
    %268 = arith.mulf %263, %267 : vector<8x32xf32>
    %269 = vector.extract_strided_slice %243 {offsets = [0, 128], sizes = [8, 128], strides = [1, 1]} : vector<8x256xf32> to vector<8x128xf32>
    %cst_86 = arith.constant dense<0.000000e+00> : vector<8x128xf32>
    %270 = tpu.matmul %268, %8, %cst_86 {dimension_numbers = #tpu.dot_dimension_numbers<[1], [0], [0], [1], [0, 0, 1, 1], [], []>} : vector<8x32xf32>, vector<32x128xf32>, vector<8x128xf32> -> vector<8x128xf32>
    %c40_87 = arith.constant 40 : index
    %c0_88 = arith.constant 0 : index
    %271 = vector.load %arg3[%c40_87, %c0_88] : memref<64x128xf32, #tpu.memory_space<vmem>>, vector<8x128xf32>
    %272 = arith.addf %271, %269 : vector<8x128xf32>
    %273 = math.tanh %272 : vector<8x128xf32>
    %274 = vector.extract_strided_slice %273 {offsets = [0, 0], sizes = [8, 32], strides = [1, 1]} : vector<8x128xf32> to vector<8x32xf32>
    %cst_89 = arith.constant 5.000000e-01 : f32
    %275 = vector.broadcast %cst_89 : f32 to vector<8x32xf32>
    %276 = arith.mulf %275, %274 : vector<8x32xf32>
    %cst_90 = arith.constant 5.000000e-01 : f32
    %277 = vector.broadcast %cst_90 : f32 to vector<8x32xf32>
    %278 = arith.addf %276, %277 : vector<8x32xf32>
    %279 = vector.extract_strided_slice %273 {offsets = [0, 32], sizes = [8, 32], strides = [1, 1]} : vector<8x128xf32> to vector<8x32xf32>
    %cst_91 = arith.constant 5.000000e-01 : f32
    %280 = vector.broadcast %cst_91 : f32 to vector<8x32xf32>
    %281 = arith.mulf %280, %279 : vector<8x32xf32>
    %cst_92 = arith.constant 5.000000e-01 : f32
    %282 = vector.broadcast %cst_92 : f32 to vector<8x32xf32>
    %283 = arith.addf %281, %282 : vector<8x32xf32>
    %284 = vector.extract_strided_slice %273 {offsets = [0, 64], sizes = [8, 32], strides = [1, 1]} : vector<8x128xf32> to vector<8x32xf32>
    %285 = vector.extract_strided_slice %273 {offsets = [0, 96], sizes = [8, 32], strides = [1, 1]} : vector<8x128xf32> to vector<8x32xf32>
    %cst_93 = arith.constant 5.000000e-01 : f32
    %286 = vector.broadcast %cst_93 : f32 to vector<8x32xf32>
    %287 = arith.mulf %286, %285 : vector<8x32xf32>
    %cst_94 = arith.constant 5.000000e-01 : f32
    %288 = vector.broadcast %cst_94 : f32 to vector<8x32xf32>
    %289 = arith.addf %287, %288 : vector<8x32xf32>
    %290 = arith.mulf %283, %240 : vector<8x32xf32>
    %291 = arith.mulf %278, %284 : vector<8x32xf32>
    %292 = arith.addf %290, %291 : vector<8x32xf32>
    %293 = math.tanh %292 : vector<8x32xf32>
    %294 = arith.mulf %289, %293 : vector<8x32xf32>
    %cst_95 = arith.constant dense<0.000000e+00> : vector<8x256xf32>
    %295 = tpu.matmul %294, %7, %cst_95 {dimension_numbers = #tpu.dot_dimension_numbers<[1], [0], [0], [1], [0, 0, 1, 1], [], []>} : vector<8x32xf32>, vector<32x256xf32>, vector<8x256xf32> -> vector<8x256xf32>
    %296 = vector.extract_strided_slice %295 {offsets = [0, 0], sizes = [8, 128], strides = [1, 1]} : vector<8x256xf32> to vector<8x128xf32>
    %297 = arith.addf %296, %270 : vector<8x128xf32>
    %298 = arith.addf %297, %11 : vector<8x128xf32>
    %299 = math.tanh %298 : vector<8x128xf32>
    %300 = vector.extract_strided_slice %299 {offsets = [0, 0], sizes = [8, 32], strides = [1, 1]} : vector<8x128xf32> to vector<8x32xf32>
    %cst_96 = arith.constant 5.000000e-01 : f32
    %301 = vector.broadcast %cst_96 : f32 to vector<8x32xf32>
    %302 = arith.mulf %301, %300 : vector<8x32xf32>
    %cst_97 = arith.constant 5.000000e-01 : f32
    %303 = vector.broadcast %cst_97 : f32 to vector<8x32xf32>
    %304 = arith.addf %302, %303 : vector<8x32xf32>
    %305 = vector.extract_strided_slice %299 {offsets = [0, 32], sizes = [8, 32], strides = [1, 1]} : vector<8x128xf32> to vector<8x32xf32>
    %cst_98 = arith.constant 5.000000e-01 : f32
    %306 = vector.broadcast %cst_98 : f32 to vector<8x32xf32>
    %307 = arith.mulf %306, %305 : vector<8x32xf32>
    %cst_99 = arith.constant 5.000000e-01 : f32
    %308 = vector.broadcast %cst_99 : f32 to vector<8x32xf32>
    %309 = arith.addf %307, %308 : vector<8x32xf32>
    %310 = vector.extract_strided_slice %299 {offsets = [0, 64], sizes = [8, 32], strides = [1, 1]} : vector<8x128xf32> to vector<8x32xf32>
    %311 = vector.extract_strided_slice %299 {offsets = [0, 96], sizes = [8, 32], strides = [1, 1]} : vector<8x128xf32> to vector<8x32xf32>
    %cst_100 = arith.constant 5.000000e-01 : f32
    %312 = vector.broadcast %cst_100 : f32 to vector<8x32xf32>
    %313 = arith.mulf %312, %311 : vector<8x32xf32>
    %cst_101 = arith.constant 5.000000e-01 : f32
    %314 = vector.broadcast %cst_101 : f32 to vector<8x32xf32>
    %315 = arith.addf %313, %314 : vector<8x32xf32>
    %316 = arith.mulf %309, %266 : vector<8x32xf32>
    %317 = arith.mulf %304, %310 : vector<8x32xf32>
    %318 = arith.addf %316, %317 : vector<8x32xf32>
    %319 = math.tanh %318 : vector<8x32xf32>
    %320 = arith.mulf %315, %319 : vector<8x32xf32>
    %321 = vector.extract_strided_slice %295 {offsets = [0, 128], sizes = [8, 128], strides = [1, 1]} : vector<8x256xf32> to vector<8x128xf32>
    %cst_102 = arith.constant dense<0.000000e+00> : vector<8x128xf32>
    %322 = tpu.matmul %320, %8, %cst_102 {dimension_numbers = #tpu.dot_dimension_numbers<[1], [0], [0], [1], [0, 0, 1, 1], [], []>} : vector<8x32xf32>, vector<32x128xf32>, vector<8x128xf32> -> vector<8x128xf32>
    %c48 = arith.constant 48 : index
    %c0_103 = arith.constant 0 : index
    %323 = vector.load %arg3[%c48, %c0_103] : memref<64x128xf32, #tpu.memory_space<vmem>>, vector<8x128xf32>
    %324 = arith.addf %323, %321 : vector<8x128xf32>
    %325 = math.tanh %324 : vector<8x128xf32>
    %326 = vector.extract_strided_slice %325 {offsets = [0, 0], sizes = [8, 32], strides = [1, 1]} : vector<8x128xf32> to vector<8x32xf32>
    %cst_104 = arith.constant 5.000000e-01 : f32
    %327 = vector.broadcast %cst_104 : f32 to vector<8x32xf32>
    %328 = arith.mulf %327, %326 : vector<8x32xf32>
    %cst_105 = arith.constant 5.000000e-01 : f32
    %329 = vector.broadcast %cst_105 : f32 to vector<8x32xf32>
    %330 = arith.addf %328, %329 : vector<8x32xf32>
    %331 = vector.extract_strided_slice %325 {offsets = [0, 32], sizes = [8, 32], strides = [1, 1]} : vector<8x128xf32> to vector<8x32xf32>
    %cst_106 = arith.constant 5.000000e-01 : f32
    %332 = vector.broadcast %cst_106 : f32 to vector<8x32xf32>
    %333 = arith.mulf %332, %331 : vector<8x32xf32>
    %cst_107 = arith.constant 5.000000e-01 : f32
    %334 = vector.broadcast %cst_107 : f32 to vector<8x32xf32>
    %335 = arith.addf %333, %334 : vector<8x32xf32>
    %336 = vector.extract_strided_slice %325 {offsets = [0, 64], sizes = [8, 32], strides = [1, 1]} : vector<8x128xf32> to vector<8x32xf32>
    %337 = vector.extract_strided_slice %325 {offsets = [0, 96], sizes = [8, 32], strides = [1, 1]} : vector<8x128xf32> to vector<8x32xf32>
    %cst_108 = arith.constant 5.000000e-01 : f32
    %338 = vector.broadcast %cst_108 : f32 to vector<8x32xf32>
    %339 = arith.mulf %338, %337 : vector<8x32xf32>
    %cst_109 = arith.constant 5.000000e-01 : f32
    %340 = vector.broadcast %cst_109 : f32 to vector<8x32xf32>
    %341 = arith.addf %339, %340 : vector<8x32xf32>
    %342 = arith.mulf %335, %292 : vector<8x32xf32>
    %343 = arith.mulf %330, %336 : vector<8x32xf32>
    %344 = arith.addf %342, %343 : vector<8x32xf32>
    %345 = math.tanh %344 : vector<8x32xf32>
    %346 = arith.mulf %341, %345 : vector<8x32xf32>
    %cst_110 = arith.constant dense<0.000000e+00> : vector<8x256xf32>
    %347 = tpu.matmul %346, %7, %cst_110 {dimension_numbers = #tpu.dot_dimension_numbers<[1], [0], [0], [1], [0, 0, 1, 1], [], []>} : vector<8x32xf32>, vector<32x256xf32>, vector<8x256xf32> -> vector<8x256xf32>
    %348 = vector.extract_strided_slice %347 {offsets = [0, 0], sizes = [8, 128], strides = [1, 1]} : vector<8x256xf32> to vector<8x128xf32>
    %349 = arith.addf %348, %322 : vector<8x128xf32>
    %350 = arith.addf %349, %11 : vector<8x128xf32>
    %351 = math.tanh %350 : vector<8x128xf32>
    %352 = vector.extract_strided_slice %351 {offsets = [0, 0], sizes = [8, 32], strides = [1, 1]} : vector<8x128xf32> to vector<8x32xf32>
    %cst_111 = arith.constant 5.000000e-01 : f32
    %353 = vector.broadcast %cst_111 : f32 to vector<8x32xf32>
    %354 = arith.mulf %353, %352 : vector<8x32xf32>
    %cst_112 = arith.constant 5.000000e-01 : f32
    %355 = vector.broadcast %cst_112 : f32 to vector<8x32xf32>
    %356 = arith.addf %354, %355 : vector<8x32xf32>
    %357 = vector.extract_strided_slice %351 {offsets = [0, 32], sizes = [8, 32], strides = [1, 1]} : vector<8x128xf32> to vector<8x32xf32>
    %cst_113 = arith.constant 5.000000e-01 : f32
    %358 = vector.broadcast %cst_113 : f32 to vector<8x32xf32>
    %359 = arith.mulf %358, %357 : vector<8x32xf32>
    %cst_114 = arith.constant 5.000000e-01 : f32
    %360 = vector.broadcast %cst_114 : f32 to vector<8x32xf32>
    %361 = arith.addf %359, %360 : vector<8x32xf32>
    %362 = vector.extract_strided_slice %351 {offsets = [0, 64], sizes = [8, 32], strides = [1, 1]} : vector<8x128xf32> to vector<8x32xf32>
    %363 = vector.extract_strided_slice %351 {offsets = [0, 96], sizes = [8, 32], strides = [1, 1]} : vector<8x128xf32> to vector<8x32xf32>
    %cst_115 = arith.constant 5.000000e-01 : f32
    %364 = vector.broadcast %cst_115 : f32 to vector<8x32xf32>
    %365 = arith.mulf %364, %363 : vector<8x32xf32>
    %cst_116 = arith.constant 5.000000e-01 : f32
    %366 = vector.broadcast %cst_116 : f32 to vector<8x32xf32>
    %367 = arith.addf %365, %366 : vector<8x32xf32>
    %368 = arith.mulf %361, %318 : vector<8x32xf32>
    %369 = arith.mulf %356, %362 : vector<8x32xf32>
    %370 = arith.addf %368, %369 : vector<8x32xf32>
    %371 = math.tanh %370 : vector<8x32xf32>
    %372 = arith.mulf %367, %371 : vector<8x32xf32>
    %373 = vector.extract_strided_slice %347 {offsets = [0, 128], sizes = [8, 128], strides = [1, 1]} : vector<8x256xf32> to vector<8x128xf32>
    %cst_117 = arith.constant dense<0.000000e+00> : vector<8x128xf32>
    %374 = tpu.matmul %372, %8, %cst_117 {dimension_numbers = #tpu.dot_dimension_numbers<[1], [0], [0], [1], [0, 0, 1, 1], [], []>} : vector<8x32xf32>, vector<32x128xf32>, vector<8x128xf32> -> vector<8x128xf32>
    %c56 = arith.constant 56 : index
    %c0_118 = arith.constant 0 : index
    %375 = vector.load %arg3[%c56, %c0_118] : memref<64x128xf32, #tpu.memory_space<vmem>>, vector<8x128xf32>
    %376 = arith.addf %375, %373 : vector<8x128xf32>
    %377 = math.tanh %376 : vector<8x128xf32>
    %378 = vector.extract_strided_slice %377 {offsets = [0, 0], sizes = [8, 32], strides = [1, 1]} : vector<8x128xf32> to vector<8x32xf32>
    %cst_119 = arith.constant 5.000000e-01 : f32
    %379 = vector.broadcast %cst_119 : f32 to vector<8x32xf32>
    %380 = arith.mulf %379, %378 : vector<8x32xf32>
    %cst_120 = arith.constant 5.000000e-01 : f32
    %381 = vector.broadcast %cst_120 : f32 to vector<8x32xf32>
    %382 = arith.addf %380, %381 : vector<8x32xf32>
    %383 = vector.extract_strided_slice %377 {offsets = [0, 32], sizes = [8, 32], strides = [1, 1]} : vector<8x128xf32> to vector<8x32xf32>
    %cst_121 = arith.constant 5.000000e-01 : f32
    %384 = vector.broadcast %cst_121 : f32 to vector<8x32xf32>
    %385 = arith.mulf %384, %383 : vector<8x32xf32>
    %cst_122 = arith.constant 5.000000e-01 : f32
    %386 = vector.broadcast %cst_122 : f32 to vector<8x32xf32>
    %387 = arith.addf %385, %386 : vector<8x32xf32>
    %388 = vector.extract_strided_slice %377 {offsets = [0, 64], sizes = [8, 32], strides = [1, 1]} : vector<8x128xf32> to vector<8x32xf32>
    %389 = vector.extract_strided_slice %377 {offsets = [0, 96], sizes = [8, 32], strides = [1, 1]} : vector<8x128xf32> to vector<8x32xf32>
    %cst_123 = arith.constant 5.000000e-01 : f32
    %390 = vector.broadcast %cst_123 : f32 to vector<8x32xf32>
    %391 = arith.mulf %390, %389 : vector<8x32xf32>
    %cst_124 = arith.constant 5.000000e-01 : f32
    %392 = vector.broadcast %cst_124 : f32 to vector<8x32xf32>
    %393 = arith.addf %391, %392 : vector<8x32xf32>
    %394 = arith.mulf %387, %344 : vector<8x32xf32>
    %395 = arith.mulf %382, %388 : vector<8x32xf32>
    %396 = arith.addf %394, %395 : vector<8x32xf32>
    %397 = math.tanh %396 : vector<8x32xf32>
    %398 = arith.mulf %393, %397 : vector<8x32xf32>
    %cst_125 = arith.constant dense<0.000000e+00> : vector<8x256xf32>
    %399 = tpu.matmul %398, %7, %cst_125 {dimension_numbers = #tpu.dot_dimension_numbers<[1], [0], [0], [1], [0, 0, 1, 1], [], []>} : vector<8x32xf32>, vector<32x256xf32>, vector<8x256xf32> -> vector<8x256xf32>
    %400 = vector.extract_strided_slice %399 {offsets = [0, 0], sizes = [8, 128], strides = [1, 1]} : vector<8x256xf32> to vector<8x128xf32>
    %401 = arith.addf %400, %374 : vector<8x128xf32>
    %402 = arith.addf %401, %11 : vector<8x128xf32>
    %403 = math.tanh %402 : vector<8x128xf32>
    %404 = vector.extract_strided_slice %403 {offsets = [0, 0], sizes = [8, 32], strides = [1, 1]} : vector<8x128xf32> to vector<8x32xf32>
    %cst_126 = arith.constant 5.000000e-01 : f32
    %405 = vector.broadcast %cst_126 : f32 to vector<8x32xf32>
    %406 = arith.mulf %405, %404 : vector<8x32xf32>
    %cst_127 = arith.constant 5.000000e-01 : f32
    %407 = vector.broadcast %cst_127 : f32 to vector<8x32xf32>
    %408 = arith.addf %406, %407 : vector<8x32xf32>
    %409 = vector.extract_strided_slice %403 {offsets = [0, 32], sizes = [8, 32], strides = [1, 1]} : vector<8x128xf32> to vector<8x32xf32>
    %cst_128 = arith.constant 5.000000e-01 : f32
    %410 = vector.broadcast %cst_128 : f32 to vector<8x32xf32>
    %411 = arith.mulf %410, %409 : vector<8x32xf32>
    %cst_129 = arith.constant 5.000000e-01 : f32
    %412 = vector.broadcast %cst_129 : f32 to vector<8x32xf32>
    %413 = arith.addf %411, %412 : vector<8x32xf32>
    %414 = vector.extract_strided_slice %403 {offsets = [0, 64], sizes = [8, 32], strides = [1, 1]} : vector<8x128xf32> to vector<8x32xf32>
    %415 = vector.extract_strided_slice %403 {offsets = [0, 96], sizes = [8, 32], strides = [1, 1]} : vector<8x128xf32> to vector<8x32xf32>
    %cst_130 = arith.constant 5.000000e-01 : f32
    %416 = vector.broadcast %cst_130 : f32 to vector<8x32xf32>
    %417 = arith.mulf %416, %415 : vector<8x32xf32>
    %cst_131 = arith.constant 5.000000e-01 : f32
    %418 = vector.broadcast %cst_131 : f32 to vector<8x32xf32>
    %419 = arith.addf %417, %418 : vector<8x32xf32>
    %420 = arith.mulf %413, %370 : vector<8x32xf32>
    %421 = arith.mulf %408, %414 : vector<8x32xf32>
    %422 = arith.addf %420, %421 : vector<8x32xf32>
    %423 = math.tanh %422 : vector<8x32xf32>
    %424 = arith.mulf %419, %423 : vector<8x32xf32>
    %c104 = arith.constant 104 : index
    %c0_132 = arith.constant 0 : index
    %425 = vector.load %arg1[%c104, %c0_132] : memref<144x256xf32, #tpu.memory_space<vmem>>, vector<32x32xf32>
    %c138 = arith.constant 138 : index
    %c0_133 = arith.constant 0 : index
    %426 = vector.load %arg1[%c138, %c0_133] : memref<144x256xf32, #tpu.memory_space<vmem>>, vector<1x32xf32>
    %427 = vector.shape_cast %426 : vector<1x32xf32> to vector<1x32xf32>
    %428 = vector.broadcast %427 : vector<1x32xf32> to vector<8x32xf32>
    %cst_134 = arith.constant dense<0.000000e+00> : vector<8x32xf32>
    %429 = tpu.matmul %424, %425, %cst_134 {dimension_numbers = #tpu.dot_dimension_numbers<[1], [0], [0], [1], [0, 0, 1, 1], [], []>} : vector<8x32xf32>, vector<32x32xf32>, vector<8x32xf32> -> vector<8x32xf32>
    %430 = arith.addf %429, %428 : vector<8x32xf32>
    %cst_135 = arith.constant 0.000000e+00 : f32
    %431 = vector.broadcast %cst_135 : f32 to vector<8x32xf32>
    %432 = arith.maximumf %430, %431 : vector<8x32xf32>
    %cst_136 = arith.constant 5.000000e-01 : f32
    %cst_137 = arith.constant 6.250000e-02 : f32
    %433 = arith.mulf %cst_136, %cst_137 : f32
    %434 = vector.broadcast %433 : f32 to vector<8x32xf32>
    %435 = arith.mulf %434, %432 : vector<8x32xf32>
    %436 = arith.addf %424, %435 : vector<8x32xf32>
    %cst_138 = arith.constant dense<0.000000e+00> : vector<8x32xf32>
    %437 = tpu.matmul %436, %425, %cst_138 {dimension_numbers = #tpu.dot_dimension_numbers<[1], [0], [0], [1], [0, 0, 1, 1], [], []>} : vector<8x32xf32>, vector<32x32xf32>, vector<8x32xf32> -> vector<8x32xf32>
    %438 = arith.addf %437, %428 : vector<8x32xf32>
    %cst_139 = arith.constant 0.000000e+00 : f32
    %439 = vector.broadcast %cst_139 : f32 to vector<8x32xf32>
    %440 = arith.maximumf %438, %439 : vector<8x32xf32>
    %cst_140 = arith.constant 5.000000e-01 : f32
    %cst_141 = arith.constant 6.250000e-02 : f32
    %441 = arith.mulf %cst_140, %cst_141 : f32
    %442 = vector.broadcast %441 : f32 to vector<8x32xf32>
    %443 = arith.mulf %442, %440 : vector<8x32xf32>
    %444 = arith.addf %424, %443 : vector<8x32xf32>
    %cst_142 = arith.constant dense<0.000000e+00> : vector<8x32xf32>
    %445 = tpu.matmul %444, %425, %cst_142 {dimension_numbers = #tpu.dot_dimension_numbers<[1], [0], [0], [1], [0, 0, 1, 1], [], []>} : vector<8x32xf32>, vector<32x32xf32>, vector<8x32xf32> -> vector<8x32xf32>
    %446 = arith.addf %445, %428 : vector<8x32xf32>
    %cst_143 = arith.constant 0.000000e+00 : f32
    %447 = vector.broadcast %cst_143 : f32 to vector<8x32xf32>
    %448 = arith.maximumf %446, %447 : vector<8x32xf32>
    %cst_144 = arith.constant 6.250000e-02 : f32
    %449 = vector.broadcast %cst_144 : f32 to vector<8x32xf32>
    %450 = arith.mulf %449, %448 : vector<8x32xf32>
    %451 = arith.addf %424, %450 : vector<8x32xf32>
    %cst_145 = arith.constant dense<0.000000e+00> : vector<8x32xf32>
    %452 = tpu.matmul %451, %425, %cst_145 {dimension_numbers = #tpu.dot_dimension_numbers<[1], [0], [0], [1], [0, 0, 1, 1], [], []>} : vector<8x32xf32>, vector<32x32xf32>, vector<8x32xf32> -> vector<8x32xf32>
    %453 = arith.addf %452, %428 : vector<8x32xf32>
    %cst_146 = arith.constant 0.000000e+00 : f32
    %454 = vector.broadcast %cst_146 : f32 to vector<8x32xf32>
    %455 = arith.maximumf %453, %454 : vector<8x32xf32>
    %cst_147 = arith.constant 6.250000e-02 : f32
    %cst_148 = arith.constant 6.000000e+00 : f32
    %456 = arith.divf %cst_147, %cst_148 : f32
    %cst_149 = arith.constant 2.000000e+00 : f32
    %457 = vector.broadcast %cst_149 : f32 to vector<8x32xf32>
    %458 = arith.mulf %457, %440 : vector<8x32xf32>
    %459 = arith.addf %432, %458 : vector<8x32xf32>
    %cst_150 = arith.constant 2.000000e+00 : f32
    %460 = vector.broadcast %cst_150 : f32 to vector<8x32xf32>
    %461 = arith.mulf %460, %448 : vector<8x32xf32>
    %462 = arith.addf %459, %461 : vector<8x32xf32>
    %463 = arith.addf %462, %455 : vector<8x32xf32>
    %464 = vector.broadcast %456 : f32 to vector<8x32xf32>
    %465 = arith.mulf %464, %463 : vector<8x32xf32>
    %466 = arith.addf %424, %465 : vector<8x32xf32>
    %cst_151 = arith.constant dense<0.000000e+00> : vector<8x32xf32>
    %467 = tpu.matmul %466, %425, %cst_151 {dimension_numbers = #tpu.dot_dimension_numbers<[1], [0], [0], [1], [0, 0, 1, 1], [], []>} : vector<8x32xf32>, vector<32x32xf32>, vector<8x32xf32> -> vector<8x32xf32>
    %468 = arith.addf %467, %428 : vector<8x32xf32>
    %cst_152 = arith.constant 0.000000e+00 : f32
    %469 = vector.broadcast %cst_152 : f32 to vector<8x32xf32>
    %470 = arith.maximumf %468, %469 : vector<8x32xf32>
    %cst_153 = arith.constant 5.000000e-01 : f32
    %cst_154 = arith.constant 6.250000e-02 : f32
    %471 = arith.mulf %cst_153, %cst_154 : f32
    %472 = vector.broadcast %471 : f32 to vector<8x32xf32>
    %473 = arith.mulf %472, %470 : vector<8x32xf32>
    %474 = arith.addf %466, %473 : vector<8x32xf32>
    %cst_155 = arith.constant dense<0.000000e+00> : vector<8x32xf32>
    %475 = tpu.matmul %474, %425, %cst_155 {dimension_numbers = #tpu.dot_dimension_numbers<[1], [0], [0], [1], [0, 0, 1, 1], [], []>} : vector<8x32xf32>, vector<32x32xf32>, vector<8x32xf32> -> vector<8x32xf32>
    %476 = arith.addf %475, %428 : vector<8x32xf32>
    %cst_156 = arith.constant 0.000000e+00 : f32
    %477 = vector.broadcast %cst_156 : f32 to vector<8x32xf32>
    %478 = arith.maximumf %476, %477 : vector<8x32xf32>
    %cst_157 = arith.constant 5.000000e-01 : f32
    %cst_158 = arith.constant 6.250000e-02 : f32
    %479 = arith.mulf %cst_157, %cst_158 : f32
    %480 = vector.broadcast %479 : f32 to vector<8x32xf32>
    %481 = arith.mulf %480, %478 : vector<8x32xf32>
    %482 = arith.addf %466, %481 : vector<8x32xf32>
    %cst_159 = arith.constant dense<0.000000e+00> : vector<8x32xf32>
    %483 = tpu.matmul %482, %425, %cst_159 {dimension_numbers = #tpu.dot_dimension_numbers<[1], [0], [0], [1], [0, 0, 1, 1], [], []>} : vector<8x32xf32>, vector<32x32xf32>, vector<8x32xf32> -> vector<8x32xf32>
    %484 = arith.addf %483, %428 : vector<8x32xf32>
    %cst_160 = arith.constant 0.000000e+00 : f32
    %485 = vector.broadcast %cst_160 : f32 to vector<8x32xf32>
    %486 = arith.maximumf %484, %485 : vector<8x32xf32>
    %cst_161 = arith.constant 6.250000e-02 : f32
    %487 = vector.broadcast %cst_161 : f32 to vector<8x32xf32>
    %488 = arith.mulf %487, %486 : vector<8x32xf32>
    %489 = arith.addf %466, %488 : vector<8x32xf32>
    %cst_162 = arith.constant dense<0.000000e+00> : vector<8x32xf32>
    %490 = tpu.matmul %489, %425, %cst_162 {dimension_numbers = #tpu.dot_dimension_numbers<[1], [0], [0], [1], [0, 0, 1, 1], [], []>} : vector<8x32xf32>, vector<32x32xf32>, vector<8x32xf32> -> vector<8x32xf32>
    %491 = arith.addf %490, %428 : vector<8x32xf32>
    %cst_163 = arith.constant 0.000000e+00 : f32
    %492 = vector.broadcast %cst_163 : f32 to vector<8x32xf32>
    %493 = arith.maximumf %491, %492 : vector<8x32xf32>
    %cst_164 = arith.constant 6.250000e-02 : f32
    %cst_165 = arith.constant 6.000000e+00 : f32
    %494 = arith.divf %cst_164, %cst_165 : f32
    %cst_166 = arith.constant 2.000000e+00 : f32
    %495 = vector.broadcast %cst_166 : f32 to vector<8x32xf32>
    %496 = arith.mulf %495, %478 : vector<8x32xf32>
    %497 = arith.addf %470, %496 : vector<8x32xf32>
    %cst_167 = arith.constant 2.000000e+00 : f32
    %498 = vector.broadcast %cst_167 : f32 to vector<8x32xf32>
    %499 = arith.mulf %498, %486 : vector<8x32xf32>
    %500 = arith.addf %497, %499 : vector<8x32xf32>
    %501 = arith.addf %500, %493 : vector<8x32xf32>
    %502 = vector.broadcast %494 : f32 to vector<8x32xf32>
    %503 = arith.mulf %502, %501 : vector<8x32xf32>
    %504 = arith.addf %466, %503 : vector<8x32xf32>
    %cst_168 = arith.constant dense<0.000000e+00> : vector<8x32xf32>
    %505 = tpu.matmul %504, %425, %cst_168 {dimension_numbers = #tpu.dot_dimension_numbers<[1], [0], [0], [1], [0, 0, 1, 1], [], []>} : vector<8x32xf32>, vector<32x32xf32>, vector<8x32xf32> -> vector<8x32xf32>
    %506 = arith.addf %505, %428 : vector<8x32xf32>
    %cst_169 = arith.constant 0.000000e+00 : f32
    %507 = vector.broadcast %cst_169 : f32 to vector<8x32xf32>
    %508 = arith.maximumf %506, %507 : vector<8x32xf32>
    %cst_170 = arith.constant 5.000000e-01 : f32
    %cst_171 = arith.constant 6.250000e-02 : f32
    %509 = arith.mulf %cst_170, %cst_171 : f32
    %510 = vector.broadcast %509 : f32 to vector<8x32xf32>
    %511 = arith.mulf %510, %508 : vector<8x32xf32>
    %512 = arith.addf %504, %511 : vector<8x32xf32>
    %cst_172 = arith.constant dense<0.000000e+00> : vector<8x32xf32>
    %513 = tpu.matmul %512, %425, %cst_172 {dimension_numbers = #tpu.dot_dimension_numbers<[1], [0], [0], [1], [0, 0, 1, 1], [], []>} : vector<8x32xf32>, vector<32x32xf32>, vector<8x32xf32> -> vector<8x32xf32>
    %514 = arith.addf %513, %428 : vector<8x32xf32>
    %cst_173 = arith.constant 0.000000e+00 : f32
    %515 = vector.broadcast %cst_173 : f32 to vector<8x32xf32>
    %516 = arith.maximumf %514, %515 : vector<8x32xf32>
    %cst_174 = arith.constant 5.000000e-01 : f32
    %cst_175 = arith.constant 6.250000e-02 : f32
    %517 = arith.mulf %cst_174, %cst_175 : f32
    %518 = vector.broadcast %517 : f32 to vector<8x32xf32>
    %519 = arith.mulf %518, %516 : vector<8x32xf32>
    %520 = arith.addf %504, %519 : vector<8x32xf32>
    %cst_176 = arith.constant dense<0.000000e+00> : vector<8x32xf32>
    %521 = tpu.matmul %520, %425, %cst_176 {dimension_numbers = #tpu.dot_dimension_numbers<[1], [0], [0], [1], [0, 0, 1, 1], [], []>} : vector<8x32xf32>, vector<32x32xf32>, vector<8x32xf32> -> vector<8x32xf32>
    %522 = arith.addf %521, %428 : vector<8x32xf32>
    %cst_177 = arith.constant 0.000000e+00 : f32
    %523 = vector.broadcast %cst_177 : f32 to vector<8x32xf32>
    %524 = arith.maximumf %522, %523 : vector<8x32xf32>
    %cst_178 = arith.constant 6.250000e-02 : f32
    %525 = vector.broadcast %cst_178 : f32 to vector<8x32xf32>
    %526 = arith.mulf %525, %524 : vector<8x32xf32>
    %527 = arith.addf %504, %526 : vector<8x32xf32>
    %cst_179 = arith.constant dense<0.000000e+00> : vector<8x32xf32>
    %528 = tpu.matmul %527, %425, %cst_179 {dimension_numbers = #tpu.dot_dimension_numbers<[1], [0], [0], [1], [0, 0, 1, 1], [], []>} : vector<8x32xf32>, vector<32x32xf32>, vector<8x32xf32> -> vector<8x32xf32>
    %529 = arith.addf %528, %428 : vector<8x32xf32>
    %cst_180 = arith.constant 0.000000e+00 : f32
    %530 = vector.broadcast %cst_180 : f32 to vector<8x32xf32>
    %531 = arith.maximumf %529, %530 : vector<8x32xf32>
    %cst_181 = arith.constant 6.250000e-02 : f32
    %cst_182 = arith.constant 6.000000e+00 : f32
    %532 = arith.divf %cst_181, %cst_182 : f32
    %cst_183 = arith.constant 2.000000e+00 : f32
    %533 = vector.broadcast %cst_183 : f32 to vector<8x32xf32>
    %534 = arith.mulf %533, %516 : vector<8x32xf32>
    %535 = arith.addf %508, %534 : vector<8x32xf32>
    %cst_184 = arith.constant 2.000000e+00 : f32
    %536 = vector.broadcast %cst_184 : f32 to vector<8x32xf32>
    %537 = arith.mulf %536, %524 : vector<8x32xf32>
    %538 = arith.addf %535, %537 : vector<8x32xf32>
    %539 = arith.addf %538, %531 : vector<8x32xf32>
    %540 = vector.broadcast %532 : f32 to vector<8x32xf32>
    %541 = arith.mulf %540, %539 : vector<8x32xf32>
    %542 = arith.addf %504, %541 : vector<8x32xf32>
    %cst_185 = arith.constant dense<0.000000e+00> : vector<8x32xf32>
    %543 = tpu.matmul %542, %425, %cst_185 {dimension_numbers = #tpu.dot_dimension_numbers<[1], [0], [0], [1], [0, 0, 1, 1], [], []>} : vector<8x32xf32>, vector<32x32xf32>, vector<8x32xf32> -> vector<8x32xf32>
    %544 = arith.addf %543, %428 : vector<8x32xf32>
    %cst_186 = arith.constant 0.000000e+00 : f32
    %545 = vector.broadcast %cst_186 : f32 to vector<8x32xf32>
    %546 = arith.maximumf %544, %545 : vector<8x32xf32>
    %cst_187 = arith.constant 5.000000e-01 : f32
    %cst_188 = arith.constant 6.250000e-02 : f32
    %547 = arith.mulf %cst_187, %cst_188 : f32
    %548 = vector.broadcast %547 : f32 to vector<8x32xf32>
    %549 = arith.mulf %548, %546 : vector<8x32xf32>
    %550 = arith.addf %542, %549 : vector<8x32xf32>
    %cst_189 = arith.constant dense<0.000000e+00> : vector<8x32xf32>
    %551 = tpu.matmul %550, %425, %cst_189 {dimension_numbers = #tpu.dot_dimension_numbers<[1], [0], [0], [1], [0, 0, 1, 1], [], []>} : vector<8x32xf32>, vector<32x32xf32>, vector<8x32xf32> -> vector<8x32xf32>
    %552 = arith.addf %551, %428 : vector<8x32xf32>
    %cst_190 = arith.constant 0.000000e+00 : f32
    %553 = vector.broadcast %cst_190 : f32 to vector<8x32xf32>
    %554 = arith.maximumf %552, %553 : vector<8x32xf32>
    %cst_191 = arith.constant 5.000000e-01 : f32
    %cst_192 = arith.constant 6.250000e-02 : f32
    %555 = arith.mulf %cst_191, %cst_192 : f32
    %556 = vector.broadcast %555 : f32 to vector<8x32xf32>
    %557 = arith.mulf %556, %554 : vector<8x32xf32>
    %558 = arith.addf %542, %557 : vector<8x32xf32>
    %cst_193 = arith.constant dense<0.000000e+00> : vector<8x32xf32>
    %559 = tpu.matmul %558, %425, %cst_193 {dimension_numbers = #tpu.dot_dimension_numbers<[1], [0], [0], [1], [0, 0, 1, 1], [], []>} : vector<8x32xf32>, vector<32x32xf32>, vector<8x32xf32> -> vector<8x32xf32>
    %560 = arith.addf %559, %428 : vector<8x32xf32>
    %cst_194 = arith.constant 0.000000e+00 : f32
    %561 = vector.broadcast %cst_194 : f32 to vector<8x32xf32>
    %562 = arith.maximumf %560, %561 : vector<8x32xf32>
    %cst_195 = arith.constant 6.250000e-02 : f32
    %563 = vector.broadcast %cst_195 : f32 to vector<8x32xf32>
    %564 = arith.mulf %563, %562 : vector<8x32xf32>
    %565 = arith.addf %542, %564 : vector<8x32xf32>
    %cst_196 = arith.constant dense<0.000000e+00> : vector<8x32xf32>
    %566 = tpu.matmul %565, %425, %cst_196 {dimension_numbers = #tpu.dot_dimension_numbers<[1], [0], [0], [1], [0, 0, 1, 1], [], []>} : vector<8x32xf32>, vector<32x32xf32>, vector<8x32xf32> -> vector<8x32xf32>
    %567 = arith.addf %566, %428 : vector<8x32xf32>
    %cst_197 = arith.constant 0.000000e+00 : f32
    %568 = vector.broadcast %cst_197 : f32 to vector<8x32xf32>
    %569 = arith.maximumf %567, %568 : vector<8x32xf32>
    %cst_198 = arith.constant 6.250000e-02 : f32
    %cst_199 = arith.constant 6.000000e+00 : f32
    %570 = arith.divf %cst_198, %cst_199 : f32
    %cst_200 = arith.constant 2.000000e+00 : f32
    %571 = vector.broadcast %cst_200 : f32 to vector<8x32xf32>
    %572 = arith.mulf %571, %554 : vector<8x32xf32>
    %573 = arith.addf %546, %572 : vector<8x32xf32>
    %cst_201 = arith.constant 2.000000e+00 : f32
    %574 = vector.broadcast %cst_201 : f32 to vector<8x32xf32>
    %575 = arith.mulf %574, %562 : vector<8x32xf32>
    %576 = arith.addf %573, %575 : vector<8x32xf32>
    %577 = arith.addf %576, %569 : vector<8x32xf32>
    %578 = vector.broadcast %570 : f32 to vector<8x32xf32>
    %579 = arith.mulf %578, %577 : vector<8x32xf32>
    %580 = arith.addf %542, %579 : vector<8x32xf32>
    %cst_202 = arith.constant dense<0.000000e+00> : vector<8x32xf32>
    %581 = tpu.matmul %580, %425, %cst_202 {dimension_numbers = #tpu.dot_dimension_numbers<[1], [0], [0], [1], [0, 0, 1, 1], [], []>} : vector<8x32xf32>, vector<32x32xf32>, vector<8x32xf32> -> vector<8x32xf32>
    %582 = arith.addf %581, %428 : vector<8x32xf32>
    %cst_203 = arith.constant 0.000000e+00 : f32
    %583 = vector.broadcast %cst_203 : f32 to vector<8x32xf32>
    %584 = arith.maximumf %582, %583 : vector<8x32xf32>
    %cst_204 = arith.constant 5.000000e-01 : f32
    %cst_205 = arith.constant 6.250000e-02 : f32
    %585 = arith.mulf %cst_204, %cst_205 : f32
    %586 = vector.broadcast %585 : f32 to vector<8x32xf32>
    %587 = arith.mulf %586, %584 : vector<8x32xf32>
    %588 = arith.addf %580, %587 : vector<8x32xf32>
    %cst_206 = arith.constant dense<0.000000e+00> : vector<8x32xf32>
    %589 = tpu.matmul %588, %425, %cst_206 {dimension_numbers = #tpu.dot_dimension_numbers<[1], [0], [0], [1], [0, 0, 1, 1], [], []>} : vector<8x32xf32>, vector<32x32xf32>, vector<8x32xf32> -> vector<8x32xf32>
    %590 = arith.addf %589, %428 : vector<8x32xf32>
    %cst_207 = arith.constant 0.000000e+00 : f32
    %591 = vector.broadcast %cst_207 : f32 to vector<8x32xf32>
    %592 = arith.maximumf %590, %591 : vector<8x32xf32>
    %cst_208 = arith.constant 5.000000e-01 : f32
    %cst_209 = arith.constant 6.250000e-02 : f32
    %593 = arith.mulf %cst_208, %cst_209 : f32
    %594 = vector.broadcast %593 : f32 to vector<8x32xf32>
    %595 = arith.mulf %594, %592 : vector<8x32xf32>
    %596 = arith.addf %580, %595 : vector<8x32xf32>
    %cst_210 = arith.constant dense<0.000000e+00> : vector<8x32xf32>
    %597 = tpu.matmul %596, %425, %cst_210 {dimension_numbers = #tpu.dot_dimension_numbers<[1], [0], [0], [1], [0, 0, 1, 1], [], []>} : vector<8x32xf32>, vector<32x32xf32>, vector<8x32xf32> -> vector<8x32xf32>
    %598 = arith.addf %597, %428 : vector<8x32xf32>
    %cst_211 = arith.constant 0.000000e+00 : f32
    %599 = vector.broadcast %cst_211 : f32 to vector<8x32xf32>
    %600 = arith.maximumf %598, %599 : vector<8x32xf32>
    %cst_212 = arith.constant 6.250000e-02 : f32
    %601 = vector.broadcast %cst_212 : f32 to vector<8x32xf32>
    %602 = arith.mulf %601, %600 : vector<8x32xf32>
    %603 = arith.addf %580, %602 : vector<8x32xf32>
    %cst_213 = arith.constant dense<0.000000e+00> : vector<8x32xf32>
    %604 = tpu.matmul %603, %425, %cst_213 {dimension_numbers = #tpu.dot_dimension_numbers<[1], [0], [0], [1], [0, 0, 1, 1], [], []>} : vector<8x32xf32>, vector<32x32xf32>, vector<8x32xf32> -> vector<8x32xf32>
    %605 = arith.addf %604, %428 : vector<8x32xf32>
    %cst_214 = arith.constant 0.000000e+00 : f32
    %606 = vector.broadcast %cst_214 : f32 to vector<8x32xf32>
    %607 = arith.maximumf %605, %606 : vector<8x32xf32>
    %cst_215 = arith.constant 6.250000e-02 : f32
    %cst_216 = arith.constant 6.000000e+00 : f32
    %608 = arith.divf %cst_215, %cst_216 : f32
    %cst_217 = arith.constant 2.000000e+00 : f32
    %609 = vector.broadcast %cst_217 : f32 to vector<8x32xf32>
    %610 = arith.mulf %609, %592 : vector<8x32xf32>
    %611 = arith.addf %584, %610 : vector<8x32xf32>
    %cst_218 = arith.constant 2.000000e+00 : f32
    %612 = vector.broadcast %cst_218 : f32 to vector<8x32xf32>
    %613 = arith.mulf %612, %600 : vector<8x32xf32>
    %614 = arith.addf %611, %613 : vector<8x32xf32>
    %615 = arith.addf %614, %607 : vector<8x32xf32>
    %616 = vector.broadcast %608 : f32 to vector<8x32xf32>
    %617 = arith.mulf %616, %615 : vector<8x32xf32>
    %618 = arith.addf %580, %617 : vector<8x32xf32>
    %cst_219 = arith.constant dense<0.000000e+00> : vector<8x32xf32>
    %619 = tpu.matmul %618, %425, %cst_219 {dimension_numbers = #tpu.dot_dimension_numbers<[1], [0], [0], [1], [0, 0, 1, 1], [], []>} : vector<8x32xf32>, vector<32x32xf32>, vector<8x32xf32> -> vector<8x32xf32>
    %620 = arith.addf %619, %428 : vector<8x32xf32>
    %cst_220 = arith.constant 0.000000e+00 : f32
    %621 = vector.broadcast %cst_220 : f32 to vector<8x32xf32>
    %622 = arith.maximumf %620, %621 : vector<8x32xf32>
    %cst_221 = arith.constant 5.000000e-01 : f32
    %cst_222 = arith.constant 6.250000e-02 : f32
    %623 = arith.mulf %cst_221, %cst_222 : f32
    %624 = vector.broadcast %623 : f32 to vector<8x32xf32>
    %625 = arith.mulf %624, %622 : vector<8x32xf32>
    %626 = arith.addf %618, %625 : vector<8x32xf32>
    %cst_223 = arith.constant dense<0.000000e+00> : vector<8x32xf32>
    %627 = tpu.matmul %626, %425, %cst_223 {dimension_numbers = #tpu.dot_dimension_numbers<[1], [0], [0], [1], [0, 0, 1, 1], [], []>} : vector<8x32xf32>, vector<32x32xf32>, vector<8x32xf32> -> vector<8x32xf32>
    %628 = arith.addf %627, %428 : vector<8x32xf32>
    %cst_224 = arith.constant 0.000000e+00 : f32
    %629 = vector.broadcast %cst_224 : f32 to vector<8x32xf32>
    %630 = arith.maximumf %628, %629 : vector<8x32xf32>
    %cst_225 = arith.constant 5.000000e-01 : f32
    %cst_226 = arith.constant 6.250000e-02 : f32
    %631 = arith.mulf %cst_225, %cst_226 : f32
    %632 = vector.broadcast %631 : f32 to vector<8x32xf32>
    %633 = arith.mulf %632, %630 : vector<8x32xf32>
    %634 = arith.addf %618, %633 : vector<8x32xf32>
    %cst_227 = arith.constant dense<0.000000e+00> : vector<8x32xf32>
    %635 = tpu.matmul %634, %425, %cst_227 {dimension_numbers = #tpu.dot_dimension_numbers<[1], [0], [0], [1], [0, 0, 1, 1], [], []>} : vector<8x32xf32>, vector<32x32xf32>, vector<8x32xf32> -> vector<8x32xf32>
    %636 = arith.addf %635, %428 : vector<8x32xf32>
    %cst_228 = arith.constant 0.000000e+00 : f32
    %637 = vector.broadcast %cst_228 : f32 to vector<8x32xf32>
    %638 = arith.maximumf %636, %637 : vector<8x32xf32>
    %cst_229 = arith.constant 6.250000e-02 : f32
    %639 = vector.broadcast %cst_229 : f32 to vector<8x32xf32>
    %640 = arith.mulf %639, %638 : vector<8x32xf32>
    %641 = arith.addf %618, %640 : vector<8x32xf32>
    %cst_230 = arith.constant dense<0.000000e+00> : vector<8x32xf32>
    %642 = tpu.matmul %641, %425, %cst_230 {dimension_numbers = #tpu.dot_dimension_numbers<[1], [0], [0], [1], [0, 0, 1, 1], [], []>} : vector<8x32xf32>, vector<32x32xf32>, vector<8x32xf32> -> vector<8x32xf32>
    %643 = arith.addf %642, %428 : vector<8x32xf32>
    %cst_231 = arith.constant 0.000000e+00 : f32
    %644 = vector.broadcast %cst_231 : f32 to vector<8x32xf32>
    %645 = arith.maximumf %643, %644 : vector<8x32xf32>
    %cst_232 = arith.constant 6.250000e-02 : f32
    %cst_233 = arith.constant 6.000000e+00 : f32
    %646 = arith.divf %cst_232, %cst_233 : f32
    %cst_234 = arith.constant 2.000000e+00 : f32
    %647 = vector.broadcast %cst_234 : f32 to vector<8x32xf32>
    %648 = arith.mulf %647, %630 : vector<8x32xf32>
    %649 = arith.addf %622, %648 : vector<8x32xf32>
    %cst_235 = arith.constant 2.000000e+00 : f32
    %650 = vector.broadcast %cst_235 : f32 to vector<8x32xf32>
    %651 = arith.mulf %650, %638 : vector<8x32xf32>
    %652 = arith.addf %649, %651 : vector<8x32xf32>
    %653 = arith.addf %652, %645 : vector<8x32xf32>
    %654 = vector.broadcast %646 : f32 to vector<8x32xf32>
    %655 = arith.mulf %654, %653 : vector<8x32xf32>
    %656 = arith.addf %618, %655 : vector<8x32xf32>
    %cst_236 = arith.constant dense<0.000000e+00> : vector<8x32xf32>
    %657 = tpu.matmul %656, %425, %cst_236 {dimension_numbers = #tpu.dot_dimension_numbers<[1], [0], [0], [1], [0, 0, 1, 1], [], []>} : vector<8x32xf32>, vector<32x32xf32>, vector<8x32xf32> -> vector<8x32xf32>
    %658 = arith.addf %657, %428 : vector<8x32xf32>
    %cst_237 = arith.constant 0.000000e+00 : f32
    %659 = vector.broadcast %cst_237 : f32 to vector<8x32xf32>
    %660 = arith.maximumf %658, %659 : vector<8x32xf32>
    %cst_238 = arith.constant 5.000000e-01 : f32
    %cst_239 = arith.constant 6.250000e-02 : f32
    %661 = arith.mulf %cst_238, %cst_239 : f32
    %662 = vector.broadcast %661 : f32 to vector<8x32xf32>
    %663 = arith.mulf %662, %660 : vector<8x32xf32>
    %664 = arith.addf %656, %663 : vector<8x32xf32>
    %cst_240 = arith.constant dense<0.000000e+00> : vector<8x32xf32>
    %665 = tpu.matmul %664, %425, %cst_240 {dimension_numbers = #tpu.dot_dimension_numbers<[1], [0], [0], [1], [0, 0, 1, 1], [], []>} : vector<8x32xf32>, vector<32x32xf32>, vector<8x32xf32> -> vector<8x32xf32>
    %666 = arith.addf %665, %428 : vector<8x32xf32>
    %cst_241 = arith.constant 0.000000e+00 : f32
    %667 = vector.broadcast %cst_241 : f32 to vector<8x32xf32>
    %668 = arith.maximumf %666, %667 : vector<8x32xf32>
    %cst_242 = arith.constant 5.000000e-01 : f32
    %cst_243 = arith.constant 6.250000e-02 : f32
    %669 = arith.mulf %cst_242, %cst_243 : f32
    %670 = vector.broadcast %669 : f32 to vector<8x32xf32>
    %671 = arith.mulf %670, %668 : vector<8x32xf32>
    %672 = arith.addf %656, %671 : vector<8x32xf32>
    %cst_244 = arith.constant dense<0.000000e+00> : vector<8x32xf32>
    %673 = tpu.matmul %672, %425, %cst_244 {dimension_numbers = #tpu.dot_dimension_numbers<[1], [0], [0], [1], [0, 0, 1, 1], [], []>} : vector<8x32xf32>, vector<32x32xf32>, vector<8x32xf32> -> vector<8x32xf32>
    %674 = arith.addf %673, %428 : vector<8x32xf32>
    %cst_245 = arith.constant 0.000000e+00 : f32
    %675 = vector.broadcast %cst_245 : f32 to vector<8x32xf32>
    %676 = arith.maximumf %674, %675 : vector<8x32xf32>
    %cst_246 = arith.constant 6.250000e-02 : f32
    %677 = vector.broadcast %cst_246 : f32 to vector<8x32xf32>
    %678 = arith.mulf %677, %676 : vector<8x32xf32>
    %679 = arith.addf %656, %678 : vector<8x32xf32>
    %cst_247 = arith.constant dense<0.000000e+00> : vector<8x32xf32>
    %680 = tpu.matmul %679, %425, %cst_247 {dimension_numbers = #tpu.dot_dimension_numbers<[1], [0], [0], [1], [0, 0, 1, 1], [], []>} : vector<8x32xf32>, vector<32x32xf32>, vector<8x32xf32> -> vector<8x32xf32>
    %681 = arith.addf %680, %428 : vector<8x32xf32>
    %cst_248 = arith.constant 0.000000e+00 : f32
    %682 = vector.broadcast %cst_248 : f32 to vector<8x32xf32>
    %683 = arith.maximumf %681, %682 : vector<8x32xf32>
    %cst_249 = arith.constant 6.250000e-02 : f32
    %cst_250 = arith.constant 6.000000e+00 : f32
    %684 = arith.divf %cst_249, %cst_250 : f32
    %cst_251 = arith.constant 2.000000e+00 : f32
    %685 = vector.broadcast %cst_251 : f32 to vector<8x32xf32>
    %686 = arith.mulf %685, %668 : vector<8x32xf32>
    %687 = arith.addf %660, %686 : vector<8x32xf32>
    %cst_252 = arith.constant 2.000000e+00 : f32
    %688 = vector.broadcast %cst_252 : f32 to vector<8x32xf32>
    %689 = arith.mulf %688, %676 : vector<8x32xf32>
    %690 = arith.addf %687, %689 : vector<8x32xf32>
    %691 = arith.addf %690, %683 : vector<8x32xf32>
    %692 = vector.broadcast %684 : f32 to vector<8x32xf32>
    %693 = arith.mulf %692, %691 : vector<8x32xf32>
    %694 = arith.addf %656, %693 : vector<8x32xf32>
    %cst_253 = arith.constant dense<0.000000e+00> : vector<8x32xf32>
    %695 = tpu.matmul %694, %425, %cst_253 {dimension_numbers = #tpu.dot_dimension_numbers<[1], [0], [0], [1], [0, 0, 1, 1], [], []>} : vector<8x32xf32>, vector<32x32xf32>, vector<8x32xf32> -> vector<8x32xf32>
    %696 = arith.addf %695, %428 : vector<8x32xf32>
    %cst_254 = arith.constant 0.000000e+00 : f32
    %697 = vector.broadcast %cst_254 : f32 to vector<8x32xf32>
    %698 = arith.maximumf %696, %697 : vector<8x32xf32>
    %cst_255 = arith.constant 5.000000e-01 : f32
    %cst_256 = arith.constant 6.250000e-02 : f32
    %699 = arith.mulf %cst_255, %cst_256 : f32
    %700 = vector.broadcast %699 : f32 to vector<8x32xf32>
    %701 = arith.mulf %700, %698 : vector<8x32xf32>
    %702 = arith.addf %694, %701 : vector<8x32xf32>
    %cst_257 = arith.constant dense<0.000000e+00> : vector<8x32xf32>
    %703 = tpu.matmul %702, %425, %cst_257 {dimension_numbers = #tpu.dot_dimension_numbers<[1], [0], [0], [1], [0, 0, 1, 1], [], []>} : vector<8x32xf32>, vector<32x32xf32>, vector<8x32xf32> -> vector<8x32xf32>
    %704 = arith.addf %703, %428 : vector<8x32xf32>
    %cst_258 = arith.constant 0.000000e+00 : f32
    %705 = vector.broadcast %cst_258 : f32 to vector<8x32xf32>
    %706 = arith.maximumf %704, %705 : vector<8x32xf32>
    %cst_259 = arith.constant 5.000000e-01 : f32
    %cst_260 = arith.constant 6.250000e-02 : f32
    %707 = arith.mulf %cst_259, %cst_260 : f32
    %708 = vector.broadcast %707 : f32 to vector<8x32xf32>
    %709 = arith.mulf %708, %706 : vector<8x32xf32>
    %710 = arith.addf %694, %709 : vector<8x32xf32>
    %cst_261 = arith.constant dense<0.000000e+00> : vector<8x32xf32>
    %711 = tpu.matmul %710, %425, %cst_261 {dimension_numbers = #tpu.dot_dimension_numbers<[1], [0], [0], [1], [0, 0, 1, 1], [], []>} : vector<8x32xf32>, vector<32x32xf32>, vector<8x32xf32> -> vector<8x32xf32>
    %712 = arith.addf %711, %428 : vector<8x32xf32>
    %cst_262 = arith.constant 0.000000e+00 : f32
    %713 = vector.broadcast %cst_262 : f32 to vector<8x32xf32>
    %714 = arith.maximumf %712, %713 : vector<8x32xf32>
    %cst_263 = arith.constant 6.250000e-02 : f32
    %715 = vector.broadcast %cst_263 : f32 to vector<8x32xf32>
    %716 = arith.mulf %715, %714 : vector<8x32xf32>
    %717 = arith.addf %694, %716 : vector<8x32xf32>
    %cst_264 = arith.constant dense<0.000000e+00> : vector<8x32xf32>
    %718 = tpu.matmul %717, %425, %cst_264 {dimension_numbers = #tpu.dot_dimension_numbers<[1], [0], [0], [1], [0, 0, 1, 1], [], []>} : vector<8x32xf32>, vector<32x32xf32>, vector<8x32xf32> -> vector<8x32xf32>
    %719 = arith.addf %718, %428 : vector<8x32xf32>
    %cst_265 = arith.constant 0.000000e+00 : f32
    %720 = vector.broadcast %cst_265 : f32 to vector<8x32xf32>
    %721 = arith.maximumf %719, %720 : vector<8x32xf32>
    %cst_266 = arith.constant 6.250000e-02 : f32
    %cst_267 = arith.constant 6.000000e+00 : f32
    %722 = arith.divf %cst_266, %cst_267 : f32
    %cst_268 = arith.constant 2.000000e+00 : f32
    %723 = vector.broadcast %cst_268 : f32 to vector<8x32xf32>
    %724 = arith.mulf %723, %706 : vector<8x32xf32>
    %725 = arith.addf %698, %724 : vector<8x32xf32>
    %cst_269 = arith.constant 2.000000e+00 : f32
    %726 = vector.broadcast %cst_269 : f32 to vector<8x32xf32>
    %727 = arith.mulf %726, %714 : vector<8x32xf32>
    %728 = arith.addf %725, %727 : vector<8x32xf32>
    %729 = arith.addf %728, %721 : vector<8x32xf32>
    %730 = vector.broadcast %722 : f32 to vector<8x32xf32>
    %731 = arith.mulf %730, %729 : vector<8x32xf32>
    %732 = arith.addf %694, %731 : vector<8x32xf32>
    %cst_270 = arith.constant dense<0.000000e+00> : vector<8x32xf32>
    %733 = tpu.matmul %732, %425, %cst_270 {dimension_numbers = #tpu.dot_dimension_numbers<[1], [0], [0], [1], [0, 0, 1, 1], [], []>} : vector<8x32xf32>, vector<32x32xf32>, vector<8x32xf32> -> vector<8x32xf32>
    %734 = arith.addf %733, %428 : vector<8x32xf32>
    %cst_271 = arith.constant 0.000000e+00 : f32
    %735 = vector.broadcast %cst_271 : f32 to vector<8x32xf32>
    %736 = arith.maximumf %734, %735 : vector<8x32xf32>
    %cst_272 = arith.constant 5.000000e-01 : f32
    %cst_273 = arith.constant 6.250000e-02 : f32
    %737 = arith.mulf %cst_272, %cst_273 : f32
    %738 = vector.broadcast %737 : f32 to vector<8x32xf32>
    %739 = arith.mulf %738, %736 : vector<8x32xf32>
    %740 = arith.addf %732, %739 : vector<8x32xf32>
    %cst_274 = arith.constant dense<0.000000e+00> : vector<8x32xf32>
    %741 = tpu.matmul %740, %425, %cst_274 {dimension_numbers = #tpu.dot_dimension_numbers<[1], [0], [0], [1], [0, 0, 1, 1], [], []>} : vector<8x32xf32>, vector<32x32xf32>, vector<8x32xf32> -> vector<8x32xf32>
    %742 = arith.addf %741, %428 : vector<8x32xf32>
    %cst_275 = arith.constant 0.000000e+00 : f32
    %743 = vector.broadcast %cst_275 : f32 to vector<8x32xf32>
    %744 = arith.maximumf %742, %743 : vector<8x32xf32>
    %cst_276 = arith.constant 5.000000e-01 : f32
    %cst_277 = arith.constant 6.250000e-02 : f32
    %745 = arith.mulf %cst_276, %cst_277 : f32
    %746 = vector.broadcast %745 : f32 to vector<8x32xf32>
    %747 = arith.mulf %746, %744 : vector<8x32xf32>
    %748 = arith.addf %732, %747 : vector<8x32xf32>
    %cst_278 = arith.constant dense<0.000000e+00> : vector<8x32xf32>
    %749 = tpu.matmul %748, %425, %cst_278 {dimension_numbers = #tpu.dot_dimension_numbers<[1], [0], [0], [1], [0, 0, 1, 1], [], []>} : vector<8x32xf32>, vector<32x32xf32>, vector<8x32xf32> -> vector<8x32xf32>
    %750 = arith.addf %749, %428 : vector<8x32xf32>
    %cst_279 = arith.constant 0.000000e+00 : f32
    %751 = vector.broadcast %cst_279 : f32 to vector<8x32xf32>
    %752 = arith.maximumf %750, %751 : vector<8x32xf32>
    %cst_280 = arith.constant 6.250000e-02 : f32
    %753 = vector.broadcast %cst_280 : f32 to vector<8x32xf32>
    %754 = arith.mulf %753, %752 : vector<8x32xf32>
    %755 = arith.addf %732, %754 : vector<8x32xf32>
    %cst_281 = arith.constant dense<0.000000e+00> : vector<8x32xf32>
    %756 = tpu.matmul %755, %425, %cst_281 {dimension_numbers = #tpu.dot_dimension_numbers<[1], [0], [0], [1], [0, 0, 1, 1], [], []>} : vector<8x32xf32>, vector<32x32xf32>, vector<8x32xf32> -> vector<8x32xf32>
    %757 = arith.addf %756, %428 : vector<8x32xf32>
    %cst_282 = arith.constant 0.000000e+00 : f32
    %758 = vector.broadcast %cst_282 : f32 to vector<8x32xf32>
    %759 = arith.maximumf %757, %758 : vector<8x32xf32>
    %cst_283 = arith.constant 6.250000e-02 : f32
    %cst_284 = arith.constant 6.000000e+00 : f32
    %760 = arith.divf %cst_283, %cst_284 : f32
    %cst_285 = arith.constant 2.000000e+00 : f32
    %761 = vector.broadcast %cst_285 : f32 to vector<8x32xf32>
    %762 = arith.mulf %761, %744 : vector<8x32xf32>
    %763 = arith.addf %736, %762 : vector<8x32xf32>
    %cst_286 = arith.constant 2.000000e+00 : f32
    %764 = vector.broadcast %cst_286 : f32 to vector<8x32xf32>
    %765 = arith.mulf %764, %752 : vector<8x32xf32>
    %766 = arith.addf %763, %765 : vector<8x32xf32>
    %767 = arith.addf %766, %759 : vector<8x32xf32>
    %768 = vector.broadcast %760 : f32 to vector<8x32xf32>
    %769 = arith.mulf %768, %767 : vector<8x32xf32>
    %770 = arith.addf %732, %769 : vector<8x32xf32>
    %cst_287 = arith.constant dense<0.000000e+00> : vector<8x32xf32>
    %771 = tpu.matmul %770, %425, %cst_287 {dimension_numbers = #tpu.dot_dimension_numbers<[1], [0], [0], [1], [0, 0, 1, 1], [], []>} : vector<8x32xf32>, vector<32x32xf32>, vector<8x32xf32> -> vector<8x32xf32>
    %772 = arith.addf %771, %428 : vector<8x32xf32>
    %cst_288 = arith.constant 0.000000e+00 : f32
    %773 = vector.broadcast %cst_288 : f32 to vector<8x32xf32>
    %774 = arith.maximumf %772, %773 : vector<8x32xf32>
    %cst_289 = arith.constant 5.000000e-01 : f32
    %cst_290 = arith.constant 6.250000e-02 : f32
    %775 = arith.mulf %cst_289, %cst_290 : f32
    %776 = vector.broadcast %775 : f32 to vector<8x32xf32>
    %777 = arith.mulf %776, %774 : vector<8x32xf32>
    %778 = arith.addf %770, %777 : vector<8x32xf32>
    %cst_291 = arith.constant dense<0.000000e+00> : vector<8x32xf32>
    %779 = tpu.matmul %778, %425, %cst_291 {dimension_numbers = #tpu.dot_dimension_numbers<[1], [0], [0], [1], [0, 0, 1, 1], [], []>} : vector<8x32xf32>, vector<32x32xf32>, vector<8x32xf32> -> vector<8x32xf32>
    %780 = arith.addf %779, %428 : vector<8x32xf32>
    %cst_292 = arith.constant 0.000000e+00 : f32
    %781 = vector.broadcast %cst_292 : f32 to vector<8x32xf32>
    %782 = arith.maximumf %780, %781 : vector<8x32xf32>
    %cst_293 = arith.constant 5.000000e-01 : f32
    %cst_294 = arith.constant 6.250000e-02 : f32
    %783 = arith.mulf %cst_293, %cst_294 : f32
    %784 = vector.broadcast %783 : f32 to vector<8x32xf32>
    %785 = arith.mulf %784, %782 : vector<8x32xf32>
    %786 = arith.addf %770, %785 : vector<8x32xf32>
    %cst_295 = arith.constant dense<0.000000e+00> : vector<8x32xf32>
    %787 = tpu.matmul %786, %425, %cst_295 {dimension_numbers = #tpu.dot_dimension_numbers<[1], [0], [0], [1], [0, 0, 1, 1], [], []>} : vector<8x32xf32>, vector<32x32xf32>, vector<8x32xf32> -> vector<8x32xf32>
    %788 = arith.addf %787, %428 : vector<8x32xf32>
    %cst_296 = arith.constant 0.000000e+00 : f32
    %789 = vector.broadcast %cst_296 : f32 to vector<8x32xf32>
    %790 = arith.maximumf %788, %789 : vector<8x32xf32>
    %cst_297 = arith.constant 6.250000e-02 : f32
    %791 = vector.broadcast %cst_297 : f32 to vector<8x32xf32>
    %792 = arith.mulf %791, %790 : vector<8x32xf32>
    %793 = arith.addf %770, %792 : vector<8x32xf32>
    %cst_298 = arith.constant dense<0.000000e+00> : vector<8x32xf32>
    %794 = tpu.matmul %793, %425, %cst_298 {dimension_numbers = #tpu.dot_dimension_numbers<[1], [0], [0], [1], [0, 0, 1, 1], [], []>} : vector<8x32xf32>, vector<32x32xf32>, vector<8x32xf32> -> vector<8x32xf32>
    %795 = arith.addf %794, %428 : vector<8x32xf32>
    %cst_299 = arith.constant 0.000000e+00 : f32
    %796 = vector.broadcast %cst_299 : f32 to vector<8x32xf32>
    %797 = arith.maximumf %795, %796 : vector<8x32xf32>
    %cst_300 = arith.constant 6.250000e-02 : f32
    %cst_301 = arith.constant 6.000000e+00 : f32
    %798 = arith.divf %cst_300, %cst_301 : f32
    %cst_302 = arith.constant 2.000000e+00 : f32
    %799 = vector.broadcast %cst_302 : f32 to vector<8x32xf32>
    %800 = arith.mulf %799, %782 : vector<8x32xf32>
    %801 = arith.addf %774, %800 : vector<8x32xf32>
    %cst_303 = arith.constant 2.000000e+00 : f32
    %802 = vector.broadcast %cst_303 : f32 to vector<8x32xf32>
    %803 = arith.mulf %802, %790 : vector<8x32xf32>
    %804 = arith.addf %801, %803 : vector<8x32xf32>
    %805 = arith.addf %804, %797 : vector<8x32xf32>
    %806 = vector.broadcast %798 : f32 to vector<8x32xf32>
    %807 = arith.mulf %806, %805 : vector<8x32xf32>
    %808 = arith.addf %770, %807 : vector<8x32xf32>
    %cst_304 = arith.constant dense<0.000000e+00> : vector<8x32xf32>
    %809 = tpu.matmul %808, %425, %cst_304 {dimension_numbers = #tpu.dot_dimension_numbers<[1], [0], [0], [1], [0, 0, 1, 1], [], []>} : vector<8x32xf32>, vector<32x32xf32>, vector<8x32xf32> -> vector<8x32xf32>
    %810 = arith.addf %809, %428 : vector<8x32xf32>
    %cst_305 = arith.constant 0.000000e+00 : f32
    %811 = vector.broadcast %cst_305 : f32 to vector<8x32xf32>
    %812 = arith.maximumf %810, %811 : vector<8x32xf32>
    %cst_306 = arith.constant 5.000000e-01 : f32
    %cst_307 = arith.constant 6.250000e-02 : f32
    %813 = arith.mulf %cst_306, %cst_307 : f32
    %814 = vector.broadcast %813 : f32 to vector<8x32xf32>
    %815 = arith.mulf %814, %812 : vector<8x32xf32>
    %816 = arith.addf %808, %815 : vector<8x32xf32>
    %cst_308 = arith.constant dense<0.000000e+00> : vector<8x32xf32>
    %817 = tpu.matmul %816, %425, %cst_308 {dimension_numbers = #tpu.dot_dimension_numbers<[1], [0], [0], [1], [0, 0, 1, 1], [], []>} : vector<8x32xf32>, vector<32x32xf32>, vector<8x32xf32> -> vector<8x32xf32>
    %818 = arith.addf %817, %428 : vector<8x32xf32>
    %cst_309 = arith.constant 0.000000e+00 : f32
    %819 = vector.broadcast %cst_309 : f32 to vector<8x32xf32>
    %820 = arith.maximumf %818, %819 : vector<8x32xf32>
    %cst_310 = arith.constant 5.000000e-01 : f32
    %cst_311 = arith.constant 6.250000e-02 : f32
    %821 = arith.mulf %cst_310, %cst_311 : f32
    %822 = vector.broadcast %821 : f32 to vector<8x32xf32>
    %823 = arith.mulf %822, %820 : vector<8x32xf32>
    %824 = arith.addf %808, %823 : vector<8x32xf32>
    %cst_312 = arith.constant dense<0.000000e+00> : vector<8x32xf32>
    %825 = tpu.matmul %824, %425, %cst_312 {dimension_numbers = #tpu.dot_dimension_numbers<[1], [0], [0], [1], [0, 0, 1, 1], [], []>} : vector<8x32xf32>, vector<32x32xf32>, vector<8x32xf32> -> vector<8x32xf32>
    %826 = arith.addf %825, %428 : vector<8x32xf32>
    %cst_313 = arith.constant 0.000000e+00 : f32
    %827 = vector.broadcast %cst_313 : f32 to vector<8x32xf32>
    %828 = arith.maximumf %826, %827 : vector<8x32xf32>
    %cst_314 = arith.constant 6.250000e-02 : f32
    %829 = vector.broadcast %cst_314 : f32 to vector<8x32xf32>
    %830 = arith.mulf %829, %828 : vector<8x32xf32>
    %831 = arith.addf %808, %830 : vector<8x32xf32>
    %cst_315 = arith.constant dense<0.000000e+00> : vector<8x32xf32>
    %832 = tpu.matmul %831, %425, %cst_315 {dimension_numbers = #tpu.dot_dimension_numbers<[1], [0], [0], [1], [0, 0, 1, 1], [], []>} : vector<8x32xf32>, vector<32x32xf32>, vector<8x32xf32> -> vector<8x32xf32>
    %833 = arith.addf %832, %428 : vector<8x32xf32>
    %cst_316 = arith.constant 0.000000e+00 : f32
    %834 = vector.broadcast %cst_316 : f32 to vector<8x32xf32>
    %835 = arith.maximumf %833, %834 : vector<8x32xf32>
    %cst_317 = arith.constant 6.250000e-02 : f32
    %cst_318 = arith.constant 6.000000e+00 : f32
    %836 = arith.divf %cst_317, %cst_318 : f32
    %cst_319 = arith.constant 2.000000e+00 : f32
    %837 = vector.broadcast %cst_319 : f32 to vector<8x32xf32>
    %838 = arith.mulf %837, %820 : vector<8x32xf32>
    %839 = arith.addf %812, %838 : vector<8x32xf32>
    %cst_320 = arith.constant 2.000000e+00 : f32
    %840 = vector.broadcast %cst_320 : f32 to vector<8x32xf32>
    %841 = arith.mulf %840, %828 : vector<8x32xf32>
    %842 = arith.addf %839, %841 : vector<8x32xf32>
    %843 = arith.addf %842, %835 : vector<8x32xf32>
    %844 = vector.broadcast %836 : f32 to vector<8x32xf32>
    %845 = arith.mulf %844, %843 : vector<8x32xf32>
    %846 = arith.addf %808, %845 : vector<8x32xf32>
    %cst_321 = arith.constant dense<0.000000e+00> : vector<8x32xf32>
    %847 = tpu.matmul %846, %425, %cst_321 {dimension_numbers = #tpu.dot_dimension_numbers<[1], [0], [0], [1], [0, 0, 1, 1], [], []>} : vector<8x32xf32>, vector<32x32xf32>, vector<8x32xf32> -> vector<8x32xf32>
    %848 = arith.addf %847, %428 : vector<8x32xf32>
    %cst_322 = arith.constant 0.000000e+00 : f32
    %849 = vector.broadcast %cst_322 : f32 to vector<8x32xf32>
    %850 = arith.maximumf %848, %849 : vector<8x32xf32>
    %cst_323 = arith.constant 5.000000e-01 : f32
    %cst_324 = arith.constant 6.250000e-02 : f32
    %851 = arith.mulf %cst_323, %cst_324 : f32
    %852 = vector.broadcast %851 : f32 to vector<8x32xf32>
    %853 = arith.mulf %852, %850 : vector<8x32xf32>
    %854 = arith.addf %846, %853 : vector<8x32xf32>
    %cst_325 = arith.constant dense<0.000000e+00> : vector<8x32xf32>
    %855 = tpu.matmul %854, %425, %cst_325 {dimension_numbers = #tpu.dot_dimension_numbers<[1], [0], [0], [1], [0, 0, 1, 1], [], []>} : vector<8x32xf32>, vector<32x32xf32>, vector<8x32xf32> -> vector<8x32xf32>
    %856 = arith.addf %855, %428 : vector<8x32xf32>
    %cst_326 = arith.constant 0.000000e+00 : f32
    %857 = vector.broadcast %cst_326 : f32 to vector<8x32xf32>
    %858 = arith.maximumf %856, %857 : vector<8x32xf32>
    %cst_327 = arith.constant 5.000000e-01 : f32
    %cst_328 = arith.constant 6.250000e-02 : f32
    %859 = arith.mulf %cst_327, %cst_328 : f32
    %860 = vector.broadcast %859 : f32 to vector<8x32xf32>
    %861 = arith.mulf %860, %858 : vector<8x32xf32>
    %862 = arith.addf %846, %861 : vector<8x32xf32>
    %cst_329 = arith.constant dense<0.000000e+00> : vector<8x32xf32>
    %863 = tpu.matmul %862, %425, %cst_329 {dimension_numbers = #tpu.dot_dimension_numbers<[1], [0], [0], [1], [0, 0, 1, 1], [], []>} : vector<8x32xf32>, vector<32x32xf32>, vector<8x32xf32> -> vector<8x32xf32>
    %864 = arith.addf %863, %428 : vector<8x32xf32>
    %cst_330 = arith.constant 0.000000e+00 : f32
    %865 = vector.broadcast %cst_330 : f32 to vector<8x32xf32>
    %866 = arith.maximumf %864, %865 : vector<8x32xf32>
    %cst_331 = arith.constant 6.250000e-02 : f32
    %867 = vector.broadcast %cst_331 : f32 to vector<8x32xf32>
    %868 = arith.mulf %867, %866 : vector<8x32xf32>
    %869 = arith.addf %846, %868 : vector<8x32xf32>
    %cst_332 = arith.constant dense<0.000000e+00> : vector<8x32xf32>
    %870 = tpu.matmul %869, %425, %cst_332 {dimension_numbers = #tpu.dot_dimension_numbers<[1], [0], [0], [1], [0, 0, 1, 1], [], []>} : vector<8x32xf32>, vector<32x32xf32>, vector<8x32xf32> -> vector<8x32xf32>
    %871 = arith.addf %870, %428 : vector<8x32xf32>
    %cst_333 = arith.constant 0.000000e+00 : f32
    %872 = vector.broadcast %cst_333 : f32 to vector<8x32xf32>
    %873 = arith.maximumf %871, %872 : vector<8x32xf32>
    %cst_334 = arith.constant 6.250000e-02 : f32
    %cst_335 = arith.constant 6.000000e+00 : f32
    %874 = arith.divf %cst_334, %cst_335 : f32
    %cst_336 = arith.constant 2.000000e+00 : f32
    %875 = vector.broadcast %cst_336 : f32 to vector<8x32xf32>
    %876 = arith.mulf %875, %858 : vector<8x32xf32>
    %877 = arith.addf %850, %876 : vector<8x32xf32>
    %cst_337 = arith.constant 2.000000e+00 : f32
    %878 = vector.broadcast %cst_337 : f32 to vector<8x32xf32>
    %879 = arith.mulf %878, %866 : vector<8x32xf32>
    %880 = arith.addf %877, %879 : vector<8x32xf32>
    %881 = arith.addf %880, %873 : vector<8x32xf32>
    %882 = vector.broadcast %874 : f32 to vector<8x32xf32>
    %883 = arith.mulf %882, %881 : vector<8x32xf32>
    %884 = arith.addf %846, %883 : vector<8x32xf32>
    %cst_338 = arith.constant dense<0.000000e+00> : vector<8x32xf32>
    %885 = tpu.matmul %884, %425, %cst_338 {dimension_numbers = #tpu.dot_dimension_numbers<[1], [0], [0], [1], [0, 0, 1, 1], [], []>} : vector<8x32xf32>, vector<32x32xf32>, vector<8x32xf32> -> vector<8x32xf32>
    %886 = arith.addf %885, %428 : vector<8x32xf32>
    %cst_339 = arith.constant 0.000000e+00 : f32
    %887 = vector.broadcast %cst_339 : f32 to vector<8x32xf32>
    %888 = arith.maximumf %886, %887 : vector<8x32xf32>
    %cst_340 = arith.constant 5.000000e-01 : f32
    %cst_341 = arith.constant 6.250000e-02 : f32
    %889 = arith.mulf %cst_340, %cst_341 : f32
    %890 = vector.broadcast %889 : f32 to vector<8x32xf32>
    %891 = arith.mulf %890, %888 : vector<8x32xf32>
    %892 = arith.addf %884, %891 : vector<8x32xf32>
    %cst_342 = arith.constant dense<0.000000e+00> : vector<8x32xf32>
    %893 = tpu.matmul %892, %425, %cst_342 {dimension_numbers = #tpu.dot_dimension_numbers<[1], [0], [0], [1], [0, 0, 1, 1], [], []>} : vector<8x32xf32>, vector<32x32xf32>, vector<8x32xf32> -> vector<8x32xf32>
    %894 = arith.addf %893, %428 : vector<8x32xf32>
    %cst_343 = arith.constant 0.000000e+00 : f32
    %895 = vector.broadcast %cst_343 : f32 to vector<8x32xf32>
    %896 = arith.maximumf %894, %895 : vector<8x32xf32>
    %cst_344 = arith.constant 5.000000e-01 : f32
    %cst_345 = arith.constant 6.250000e-02 : f32
    %897 = arith.mulf %cst_344, %cst_345 : f32
    %898 = vector.broadcast %897 : f32 to vector<8x32xf32>
    %899 = arith.mulf %898, %896 : vector<8x32xf32>
    %900 = arith.addf %884, %899 : vector<8x32xf32>
    %cst_346 = arith.constant dense<0.000000e+00> : vector<8x32xf32>
    %901 = tpu.matmul %900, %425, %cst_346 {dimension_numbers = #tpu.dot_dimension_numbers<[1], [0], [0], [1], [0, 0, 1, 1], [], []>} : vector<8x32xf32>, vector<32x32xf32>, vector<8x32xf32> -> vector<8x32xf32>
    %902 = arith.addf %901, %428 : vector<8x32xf32>
    %cst_347 = arith.constant 0.000000e+00 : f32
    %903 = vector.broadcast %cst_347 : f32 to vector<8x32xf32>
    %904 = arith.maximumf %902, %903 : vector<8x32xf32>
    %cst_348 = arith.constant 6.250000e-02 : f32
    %905 = vector.broadcast %cst_348 : f32 to vector<8x32xf32>
    %906 = arith.mulf %905, %904 : vector<8x32xf32>
    %907 = arith.addf %884, %906 : vector<8x32xf32>
    %cst_349 = arith.constant dense<0.000000e+00> : vector<8x32xf32>
    %908 = tpu.matmul %907, %425, %cst_349 {dimension_numbers = #tpu.dot_dimension_numbers<[1], [0], [0], [1], [0, 0, 1, 1], [], []>} : vector<8x32xf32>, vector<32x32xf32>, vector<8x32xf32> -> vector<8x32xf32>
    %909 = arith.addf %908, %428 : vector<8x32xf32>
    %cst_350 = arith.constant 0.000000e+00 : f32
    %910 = vector.broadcast %cst_350 : f32 to vector<8x32xf32>
    %911 = arith.maximumf %909, %910 : vector<8x32xf32>
    %cst_351 = arith.constant 6.250000e-02 : f32
    %cst_352 = arith.constant 6.000000e+00 : f32
    %912 = arith.divf %cst_351, %cst_352 : f32
    %cst_353 = arith.constant 2.000000e+00 : f32
    %913 = vector.broadcast %cst_353 : f32 to vector<8x32xf32>
    %914 = arith.mulf %913, %896 : vector<8x32xf32>
    %915 = arith.addf %888, %914 : vector<8x32xf32>
    %cst_354 = arith.constant 2.000000e+00 : f32
    %916 = vector.broadcast %cst_354 : f32 to vector<8x32xf32>
    %917 = arith.mulf %916, %904 : vector<8x32xf32>
    %918 = arith.addf %915, %917 : vector<8x32xf32>
    %919 = arith.addf %918, %911 : vector<8x32xf32>
    %920 = vector.broadcast %912 : f32 to vector<8x32xf32>
    %921 = arith.mulf %920, %919 : vector<8x32xf32>
    %922 = arith.addf %884, %921 : vector<8x32xf32>
    %cst_355 = arith.constant dense<0.000000e+00> : vector<8x32xf32>
    %923 = tpu.matmul %922, %425, %cst_355 {dimension_numbers = #tpu.dot_dimension_numbers<[1], [0], [0], [1], [0, 0, 1, 1], [], []>} : vector<8x32xf32>, vector<32x32xf32>, vector<8x32xf32> -> vector<8x32xf32>
    %924 = arith.addf %923, %428 : vector<8x32xf32>
    %cst_356 = arith.constant 0.000000e+00 : f32
    %925 = vector.broadcast %cst_356 : f32 to vector<8x32xf32>
    %926 = arith.maximumf %924, %925 : vector<8x32xf32>
    %cst_357 = arith.constant 5.000000e-01 : f32
    %cst_358 = arith.constant 6.250000e-02 : f32
    %927 = arith.mulf %cst_357, %cst_358 : f32
    %928 = vector.broadcast %927 : f32 to vector<8x32xf32>
    %929 = arith.mulf %928, %926 : vector<8x32xf32>
    %930 = arith.addf %922, %929 : vector<8x32xf32>
    %cst_359 = arith.constant dense<0.000000e+00> : vector<8x32xf32>
    %931 = tpu.matmul %930, %425, %cst_359 {dimension_numbers = #tpu.dot_dimension_numbers<[1], [0], [0], [1], [0, 0, 1, 1], [], []>} : vector<8x32xf32>, vector<32x32xf32>, vector<8x32xf32> -> vector<8x32xf32>
    %932 = arith.addf %931, %428 : vector<8x32xf32>
    %cst_360 = arith.constant 0.000000e+00 : f32
    %933 = vector.broadcast %cst_360 : f32 to vector<8x32xf32>
    %934 = arith.maximumf %932, %933 : vector<8x32xf32>
    %cst_361 = arith.constant 5.000000e-01 : f32
    %cst_362 = arith.constant 6.250000e-02 : f32
    %935 = arith.mulf %cst_361, %cst_362 : f32
    %936 = vector.broadcast %935 : f32 to vector<8x32xf32>
    %937 = arith.mulf %936, %934 : vector<8x32xf32>
    %938 = arith.addf %922, %937 : vector<8x32xf32>
    %cst_363 = arith.constant dense<0.000000e+00> : vector<8x32xf32>
    %939 = tpu.matmul %938, %425, %cst_363 {dimension_numbers = #tpu.dot_dimension_numbers<[1], [0], [0], [1], [0, 0, 1, 1], [], []>} : vector<8x32xf32>, vector<32x32xf32>, vector<8x32xf32> -> vector<8x32xf32>
    %940 = arith.addf %939, %428 : vector<8x32xf32>
    %cst_364 = arith.constant 0.000000e+00 : f32
    %941 = vector.broadcast %cst_364 : f32 to vector<8x32xf32>
    %942 = arith.maximumf %940, %941 : vector<8x32xf32>
    %cst_365 = arith.constant 6.250000e-02 : f32
    %943 = vector.broadcast %cst_365 : f32 to vector<8x32xf32>
    %944 = arith.mulf %943, %942 : vector<8x32xf32>
    %945 = arith.addf %922, %944 : vector<8x32xf32>
    %cst_366 = arith.constant dense<0.000000e+00> : vector<8x32xf32>
    %946 = tpu.matmul %945, %425, %cst_366 {dimension_numbers = #tpu.dot_dimension_numbers<[1], [0], [0], [1], [0, 0, 1, 1], [], []>} : vector<8x32xf32>, vector<32x32xf32>, vector<8x32xf32> -> vector<8x32xf32>
    %947 = arith.addf %946, %428 : vector<8x32xf32>
    %cst_367 = arith.constant 0.000000e+00 : f32
    %948 = vector.broadcast %cst_367 : f32 to vector<8x32xf32>
    %949 = arith.maximumf %947, %948 : vector<8x32xf32>
    %cst_368 = arith.constant 6.250000e-02 : f32
    %cst_369 = arith.constant 6.000000e+00 : f32
    %950 = arith.divf %cst_368, %cst_369 : f32
    %cst_370 = arith.constant 2.000000e+00 : f32
    %951 = vector.broadcast %cst_370 : f32 to vector<8x32xf32>
    %952 = arith.mulf %951, %934 : vector<8x32xf32>
    %953 = arith.addf %926, %952 : vector<8x32xf32>
    %cst_371 = arith.constant 2.000000e+00 : f32
    %954 = vector.broadcast %cst_371 : f32 to vector<8x32xf32>
    %955 = arith.mulf %954, %942 : vector<8x32xf32>
    %956 = arith.addf %953, %955 : vector<8x32xf32>
    %957 = arith.addf %956, %949 : vector<8x32xf32>
    %958 = vector.broadcast %950 : f32 to vector<8x32xf32>
    %959 = arith.mulf %958, %957 : vector<8x32xf32>
    %960 = arith.addf %922, %959 : vector<8x32xf32>
    %cst_372 = arith.constant dense<0.000000e+00> : vector<8x32xf32>
    %961 = tpu.matmul %960, %425, %cst_372 {dimension_numbers = #tpu.dot_dimension_numbers<[1], [0], [0], [1], [0, 0, 1, 1], [], []>} : vector<8x32xf32>, vector<32x32xf32>, vector<8x32xf32> -> vector<8x32xf32>
    %962 = arith.addf %961, %428 : vector<8x32xf32>
    %cst_373 = arith.constant 0.000000e+00 : f32
    %963 = vector.broadcast %cst_373 : f32 to vector<8x32xf32>
    %964 = arith.maximumf %962, %963 : vector<8x32xf32>
    %cst_374 = arith.constant 5.000000e-01 : f32
    %cst_375 = arith.constant 6.250000e-02 : f32
    %965 = arith.mulf %cst_374, %cst_375 : f32
    %966 = vector.broadcast %965 : f32 to vector<8x32xf32>
    %967 = arith.mulf %966, %964 : vector<8x32xf32>
    %968 = arith.addf %960, %967 : vector<8x32xf32>
    %cst_376 = arith.constant dense<0.000000e+00> : vector<8x32xf32>
    %969 = tpu.matmul %968, %425, %cst_376 {dimension_numbers = #tpu.dot_dimension_numbers<[1], [0], [0], [1], [0, 0, 1, 1], [], []>} : vector<8x32xf32>, vector<32x32xf32>, vector<8x32xf32> -> vector<8x32xf32>
    %970 = arith.addf %969, %428 : vector<8x32xf32>
    %cst_377 = arith.constant 0.000000e+00 : f32
    %971 = vector.broadcast %cst_377 : f32 to vector<8x32xf32>
    %972 = arith.maximumf %970, %971 : vector<8x32xf32>
    %cst_378 = arith.constant 5.000000e-01 : f32
    %cst_379 = arith.constant 6.250000e-02 : f32
    %973 = arith.mulf %cst_378, %cst_379 : f32
    %974 = vector.broadcast %973 : f32 to vector<8x32xf32>
    %975 = arith.mulf %974, %972 : vector<8x32xf32>
    %976 = arith.addf %960, %975 : vector<8x32xf32>
    %cst_380 = arith.constant dense<0.000000e+00> : vector<8x32xf32>
    %977 = tpu.matmul %976, %425, %cst_380 {dimension_numbers = #tpu.dot_dimension_numbers<[1], [0], [0], [1], [0, 0, 1, 1], [], []>} : vector<8x32xf32>, vector<32x32xf32>, vector<8x32xf32> -> vector<8x32xf32>
    %978 = arith.addf %977, %428 : vector<8x32xf32>
    %cst_381 = arith.constant 0.000000e+00 : f32
    %979 = vector.broadcast %cst_381 : f32 to vector<8x32xf32>
    %980 = arith.maximumf %978, %979 : vector<8x32xf32>
    %cst_382 = arith.constant 6.250000e-02 : f32
    %981 = vector.broadcast %cst_382 : f32 to vector<8x32xf32>
    %982 = arith.mulf %981, %980 : vector<8x32xf32>
    %983 = arith.addf %960, %982 : vector<8x32xf32>
    %cst_383 = arith.constant dense<0.000000e+00> : vector<8x32xf32>
    %984 = tpu.matmul %983, %425, %cst_383 {dimension_numbers = #tpu.dot_dimension_numbers<[1], [0], [0], [1], [0, 0, 1, 1], [], []>} : vector<8x32xf32>, vector<32x32xf32>, vector<8x32xf32> -> vector<8x32xf32>
    %985 = arith.addf %984, %428 : vector<8x32xf32>
    %cst_384 = arith.constant 0.000000e+00 : f32
    %986 = vector.broadcast %cst_384 : f32 to vector<8x32xf32>
    %987 = arith.maximumf %985, %986 : vector<8x32xf32>
    %cst_385 = arith.constant 6.250000e-02 : f32
    %cst_386 = arith.constant 6.000000e+00 : f32
    %988 = arith.divf %cst_385, %cst_386 : f32
    %cst_387 = arith.constant 2.000000e+00 : f32
    %989 = vector.broadcast %cst_387 : f32 to vector<8x32xf32>
    %990 = arith.mulf %989, %972 : vector<8x32xf32>
    %991 = arith.addf %964, %990 : vector<8x32xf32>
    %cst_388 = arith.constant 2.000000e+00 : f32
    %992 = vector.broadcast %cst_388 : f32 to vector<8x32xf32>
    %993 = arith.mulf %992, %980 : vector<8x32xf32>
    %994 = arith.addf %991, %993 : vector<8x32xf32>
    %995 = arith.addf %994, %987 : vector<8x32xf32>
    %996 = vector.broadcast %988 : f32 to vector<8x32xf32>
    %997 = arith.mulf %996, %995 : vector<8x32xf32>
    %998 = arith.addf %960, %997 : vector<8x32xf32>
    %cst_389 = arith.constant dense<0.000000e+00> : vector<8x32xf32>
    %999 = tpu.matmul %998, %425, %cst_389 {dimension_numbers = #tpu.dot_dimension_numbers<[1], [0], [0], [1], [0, 0, 1, 1], [], []>} : vector<8x32xf32>, vector<32x32xf32>, vector<8x32xf32> -> vector<8x32xf32>
    %1000 = arith.addf %999, %428 : vector<8x32xf32>
    %cst_390 = arith.constant 0.000000e+00 : f32
    %1001 = vector.broadcast %cst_390 : f32 to vector<8x32xf32>
    %1002 = arith.maximumf %1000, %1001 : vector<8x32xf32>
    %cst_391 = arith.constant 5.000000e-01 : f32
    %cst_392 = arith.constant 6.250000e-02 : f32
    %1003 = arith.mulf %cst_391, %cst_392 : f32
    %1004 = vector.broadcast %1003 : f32 to vector<8x32xf32>
    %1005 = arith.mulf %1004, %1002 : vector<8x32xf32>
    %1006 = arith.addf %998, %1005 : vector<8x32xf32>
    %cst_393 = arith.constant dense<0.000000e+00> : vector<8x32xf32>
    %1007 = tpu.matmul %1006, %425, %cst_393 {dimension_numbers = #tpu.dot_dimension_numbers<[1], [0], [0], [1], [0, 0, 1, 1], [], []>} : vector<8x32xf32>, vector<32x32xf32>, vector<8x32xf32> -> vector<8x32xf32>
    %1008 = arith.addf %1007, %428 : vector<8x32xf32>
    %cst_394 = arith.constant 0.000000e+00 : f32
    %1009 = vector.broadcast %cst_394 : f32 to vector<8x32xf32>
    %1010 = arith.maximumf %1008, %1009 : vector<8x32xf32>
    %cst_395 = arith.constant 5.000000e-01 : f32
    %cst_396 = arith.constant 6.250000e-02 : f32
    %1011 = arith.mulf %cst_395, %cst_396 : f32
    %1012 = vector.broadcast %1011 : f32 to vector<8x32xf32>
    %1013 = arith.mulf %1012, %1010 : vector<8x32xf32>
    %1014 = arith.addf %998, %1013 : vector<8x32xf32>
    %cst_397 = arith.constant dense<0.000000e+00> : vector<8x32xf32>
    %1015 = tpu.matmul %1014, %425, %cst_397 {dimension_numbers = #tpu.dot_dimension_numbers<[1], [0], [0], [1], [0, 0, 1, 1], [], []>} : vector<8x32xf32>, vector<32x32xf32>, vector<8x32xf32> -> vector<8x32xf32>
    %1016 = arith.addf %1015, %428 : vector<8x32xf32>
    %cst_398 = arith.constant 0.000000e+00 : f32
    %1017 = vector.broadcast %cst_398 : f32 to vector<8x32xf32>
    %1018 = arith.maximumf %1016, %1017 : vector<8x32xf32>
    %cst_399 = arith.constant 6.250000e-02 : f32
    %1019 = vector.broadcast %cst_399 : f32 to vector<8x32xf32>
    %1020 = arith.mulf %1019, %1018 : vector<8x32xf32>
    %1021 = arith.addf %998, %1020 : vector<8x32xf32>
    %cst_400 = arith.constant dense<0.000000e+00> : vector<8x32xf32>
    %1022 = tpu.matmul %1021, %425, %cst_400 {dimension_numbers = #tpu.dot_dimension_numbers<[1], [0], [0], [1], [0, 0, 1, 1], [], []>} : vector<8x32xf32>, vector<32x32xf32>, vector<8x32xf32> -> vector<8x32xf32>
    %1023 = arith.addf %1022, %428 : vector<8x32xf32>
    %cst_401 = arith.constant 0.000000e+00 : f32
    %1024 = vector.broadcast %cst_401 : f32 to vector<8x32xf32>
    %1025 = arith.maximumf %1023, %1024 : vector<8x32xf32>
    %cst_402 = arith.constant 6.250000e-02 : f32
    %cst_403 = arith.constant 6.000000e+00 : f32
    %1026 = arith.divf %cst_402, %cst_403 : f32
    %cst_404 = arith.constant 2.000000e+00 : f32
    %1027 = vector.broadcast %cst_404 : f32 to vector<8x32xf32>
    %1028 = arith.mulf %1027, %1010 : vector<8x32xf32>
    %1029 = arith.addf %1002, %1028 : vector<8x32xf32>
    %cst_405 = arith.constant 2.000000e+00 : f32
    %1030 = vector.broadcast %cst_405 : f32 to vector<8x32xf32>
    %1031 = arith.mulf %1030, %1018 : vector<8x32xf32>
    %1032 = arith.addf %1029, %1031 : vector<8x32xf32>
    %1033 = arith.addf %1032, %1025 : vector<8x32xf32>
    %1034 = vector.broadcast %1026 : f32 to vector<8x32xf32>
    %1035 = arith.mulf %1034, %1033 : vector<8x32xf32>
    %1036 = arith.addf %998, %1035 : vector<8x32xf32>
    %c72 = arith.constant 72 : index
    %c0_406 = arith.constant 0 : index
    %1037 = vector.load %arg1[%c72, %c0_406] : memref<144x256xf32, #tpu.memory_space<vmem>>, vector<32x128xf32>
    %c140 = arith.constant 140 : index
    %c0_407 = arith.constant 0 : index
    %1038 = vector.load %arg1[%c140, %c0_407] : memref<144x256xf32, #tpu.memory_space<vmem>>, vector<2x128xf32>
    %c139 = arith.constant 139 : index
    %c0_408 = arith.constant 0 : index
    %1039 = vector.load %arg1[%c139, %c0_408] : memref<144x256xf32, #tpu.memory_space<vmem>>, vector<1x128xf32>
    %c64 = arith.constant 64 : index
    %c0_409 = arith.constant 0 : index
    %1040 = vector.load %arg0[%c64, %c0_409] : memref<72x4xf32, #tpu.memory_space<vmem>>, vector<8x2xf32>
    %1041 = vector.extract_strided_slice %1040 {offsets = [0, 0], sizes = [8, 1], strides = [1, 1]} : vector<8x2xf32> to vector<8x1xf32>
    %1042 = vector.extract_strided_slice %1038 {offsets = [0, 0], sizes = [1, 128], strides = [1, 1]} : vector<2x128xf32> to vector<1x128xf32>
    %1043 = vector.broadcast %1041 : vector<8x1xf32> to vector<8x128xf32>
    %1044 = vector.broadcast %1042 : vector<1x128xf32> to vector<8x128xf32>
    %1045 = arith.mulf %1043, %1044 : vector<8x128xf32>
    %1046 = vector.extract_strided_slice %1040 {offsets = [0, 1], sizes = [8, 1], strides = [1, 1]} : vector<8x2xf32> to vector<8x1xf32>
    %1047 = vector.extract_strided_slice %1038 {offsets = [1, 0], sizes = [1, 128], strides = [1, 1]} : vector<2x128xf32> to vector<1x128xf32>
    %1048 = vector.broadcast %1046 : vector<8x1xf32> to vector<8x128xf32>
    %1049 = vector.broadcast %1047 : vector<1x128xf32> to vector<8x128xf32>
    %1050 = arith.mulf %1048, %1049 : vector<8x128xf32>
    %1051 = arith.addf %1045, %1050 : vector<8x128xf32>
    %cst_410 = arith.constant dense<0.000000e+00> : vector<8x128xf32>
    %1052 = tpu.matmul %1036, %1037, %cst_410 {dimension_numbers = #tpu.dot_dimension_numbers<[1], [0], [0], [1], [0, 0, 1, 1], [], []>} : vector<8x32xf32>, vector<32x128xf32>, vector<8x128xf32> -> vector<8x128xf32>
    %1053 = arith.addf %1052, %1051 : vector<8x128xf32>
    %1054 = vector.broadcast %1039 : vector<1x128xf32> to vector<8x128xf32>
    %1055 = arith.addf %1053, %1054 : vector<8x128xf32>
    %c0_411 = arith.constant 0 : index
    %c0_412 = arith.constant 0 : index
    %1056 = vector.load %arg2[%c0_411, %c0_412] : memref<8x128xf32, #tpu.memory_space<vmem>>, vector<8x128xf32>
    tpu.vector_store %arg2[%c0_411, %c0_412], %1055 {strides = array<i32>} : memref<8x128xf32, #tpu.memory_space<vmem>>, vector<8x128xf32>,
    return
  }
}

</mosaic_0001>

<llo_original>
// kernel: tpu_custom_call.1
$region0: #{tpu_custom_call.1}
  #allocation0 [shape = 'u32[]', space=smem, size = 0x4, offset = 0x4, fixed_abs, tag = 'smem constant byte address 0x4 - core index']
  #allocation1 [shape = 'u32[72,128]{1,0:T(1,128)}', space=vmem, size = 0x9000, scoped, tag = 'internal scratch']
  #allocation2 [shape = 'f32[64,128]{1,0:T(8,128)}', space=vmem, size = 0x8000, scoped, tag = 'scratch operand']
  %s0 = inlined_call_operand.vmem [shape: f32[72,4], index: 0, kind: input, shape index: {}]
  %s1 = inlined_call_operand.hbm [shape: f32[144,256], index: 1, kind: input, shape index: {}]
  %s2 = inlined_call_operand.hbm [shape: f32[8,128], index: 2, kind: output, shape index: {}]
  %s3 = sld [smem:[#allocation0]]
  $region22: #{tpu_custom_call.1} parent=0
    _
  %s5 = ssub.s32 1, %s3
  %s6 = scalar_select 0, %s5, %s3
  $region1: #{tpu_custom_call.1} parent=0
    #allocation3 [shape = 'u8[147456]{0}', space=vmem, size = 0x24000, scoped, tag = 'input window, operand 1, single buffered']
    #allocation4 [shape = 's32[1]{0}', space=sflag, size = 0x4, scoped, tag = 'scoped memory for tpu_custom_call.1']
    #allocation5 [shape = 's32[1]{0}', space=sflag, size = 0x4, scoped, tag = 'scoped memory for tpu_custom_call.1']
    #allocation6 [shape = 'u8[4096]{0}', space=vmem, size = 0x1000, scoped, tag = 'output window, operand 0, single buffered']
    %7 = vsyncpa [#allocation4], 0
    %8 = vsyncpa [#allocation5], 0
    // Predicated region
    $region2: #{tpu_custom_call.1} parent=1 // pred_check
      _
    $region3: #{tpu_custom_call.1} parent=1 // pred_check_branch
      %10 = sbr.rel (0) target = $region5
    $region4: #{tpu_custom_call.1} parent=1 // pred_region
      _
    $region5: #{tpu_custom_call.1} parent=1 // pred_fallthru
      _
    // Predicated region
    $region6: #{tpu_custom_call.1} parent=1 // pred_check
      _
    $region7: #{tpu_custom_call.1} parent=1 // pred_check_branch
      %12 = sbr.rel (0) target = $region9
    $region8: #{tpu_custom_call.1} parent=1 // pred_region
      %14 = vsyncadd [#allocation4], 0
      %s15 = sshll.u32 %s1, 4
      %s16 = int_to_ptr.hbm [resolvable:$true] %s15
      %s17 = sshll.u32 [#allocation3], 4
      %s18 = int_to_ptr.vmem [resolvable:$true] %s17
      %23 = dma.hbm_to_vmem [thread:$0]  %s16, 4608, %s18, [#allocation4], 256, 256, 16
    $region9: #{tpu_custom_call.1} parent=1 // pred_fallthru
      _
    // Predicated region
    $region10: #{tpu_custom_call.1} parent=1 // pred_check
      _
    $region11: #{tpu_custom_call.1} parent=1 // pred_check_branch
      %25 = sbr.rel (0) target = $region13
    $region12: #{tpu_custom_call.1} parent=1 // pred_region
      %27 = dma.done [#allocation4], 4608
    $region13: #{tpu_custom_call.1} parent=1 // pred_fallthru
      _
    %v28 = vld [vmem:[#allocation3 + $0x40] sm:$0xf]
    %v29 = vld [vmem:[#allocation3 + $0x110] ss:$0 sm:$0xff]
    %v30 = vld [vmem:[%s0] sm:$0xff]
    %v31 = vld [vmem:[%s0 + $0x8] sm:$0xff]
    %v32 = vld [vmem:[%s0 + $0x10] sm:$0xff]
    %v33 = vld [vmem:[%s0 + $0x18] sm:$0xff]
    %v34 = vld [vmem:[%s0 + $0x20] sm:$0xff]
    %v35 = vld [vmem:[%s0 + $0x28] sm:$0xff]
    %v36 = vld [vmem:[%s0 + $0x30] sm:$0xff]
    %v37 = vld [vmem:[%s0 + $0x38] sm:$0xff]
    %vm38 = vcmask 31744
    %v40 = vsel %vm38, %v30, 0
    %v43 = vsel %vm38, %v31, 0
    %v46 = vsel %vm38, %v32, 0
    %v49 = vsel %vm38, %v33, 0
    %v52 = vsel %vm38, %v34, 0
    %v55 = vsel %vm38, %v35, 0
    %v58 = vsel %vm38, %v36, 0
    %v61 = vsel %vm38, %v37, 0
    %vm63 = vcmask 1043456
    %v65 = vsel %vm63, %v28, 0
    %67 = vmatpush.msra.mxu0 0.0
    %68 = vmatpush.msra.mxu0 0.0
    %69 = vmatpush.msra.mxu0 0.0
    %70 = vmatpush.msra.mxu0 0.0
    %71 = vmatpush.msra.mxu0 0.0
    %72 = vmatpush.msra.mxu0 0.0
    %73 = vmatpush.msra.mxu0 0.0
    %74 = vmatpush.msra.mxu0 0.0
    %75 = vmatpush.msra.mxu0 0.0
    %76 = vmatpush.msra.mxu0 0.0
    %77 = vmatpush.msra.mxu0 0.0
    %78 = vmatpush.msra.mxu0 0.0
    %79 = vmatpush.msra.mxu0 0.0
    %80 = vmatpush.msra.mxu0 0.0
    %81 = vmatpush.msra.mxu0 0.0
    %82 = vmatpush.msra.mxu0 %v65
    %83 = vmatmul.f32.gmra.mxu0 %v40
    %v84 = vpop.f32.mrf.mxu0
    %v85 = vadd.f32 %v29, %v84
    %86 = vmatmul.f32.gmra.mxu0 %v43
    %v87 = vpop.f32.mrf.mxu0
    %v88 = vadd.f32 %v29, %v87
    %89 = vmatmul.f32.gmra.mxu0 %v46
    %v90 = vpop.f32.mrf.mxu0
    %v91 = vadd.f32 %v29, %v90
    %92 = vmatmul.f32.gmra.mxu0 %v49
    %v93 = vpop.f32.mrf.mxu0
    %v94 = vadd.f32 %v29, %v93
    %95 = vmatmul.f32.gmra.mxu0 %v52
    %v96 = vpop.f32.mrf.mxu0
    %v97 = vadd.f32 %v29, %v96
    %98 = vmatmul.f32.gmra.mxu0 %v55
    %v99 = vpop.f32.mrf.mxu0
    %v100 = vadd.f32 %v29, %v99
    %101 = vmatmul.f32.gmra.mxu0 %v58
    %v102 = vpop.f32.mrf.mxu0
    %v103 = vadd.f32 %v29, %v102
    %104 = vmatmul.f32.gmra.mxu0 %v61
    %v105 = vpop.f32.mrf.mxu0
    %v106 = vadd.f32 %v29, %v105
    %107 = vdwg.mxu0
    %108 = vst [vmem:[#allocation2] sm:$0xff] %v85
    %109 = vst [vmem:[#allocation2 + $0x8] sm:$0xff] %v88
    %110 = vst [vmem:[#allocation2 + $0x10] sm:$0xff] %v91
    %111 = vst [vmem:[#allocation2 + $0x18] sm:$0xff] %v94
    %112 = vst [vmem:[#allocation2 + $0x20] sm:$0xff] %v97
    %113 = vst [vmem:[#allocation2 + $0x28] sm:$0xff] %v100
    %114 = vst [vmem:[#allocation2 + $0x30] sm:$0xff] %v103
    %115 = vst [vmem:[#allocation2 + $0x38] sm:$0xff] %v106
    %v116 = vld [vmem:[#allocation3] sm:$0xff]
    %v117 = vld [vmem:[#allocation3 + $0x8] sm:$0xff]
    %v118 = vld [vmem:[#allocation3 + $0x10] sm:$0xff]
    %v119 = vld [vmem:[#allocation3 + $0x18] sm:$0xff]
    %v120 = vld [vmem:[#allocation3 + $0x20] sm:$0xff]
    %v121 = vld [vmem:[#allocation3 + $0x28] sm:$0xff]
    %v122 = vld [vmem:[#allocation3 + $0x30] sm:$0xff]
    %v123 = vld [vmem:[#allocation3 + $0x38] sm:$0xff]
    %v124 = vld [vmem:[#allocation3 + $0x50] sm:$0xff]
    %v125 = vld [vmem:[#allocation3 + $0x60] sm:$0xff]
    %v126 = vld [vmem:[#allocation3 + $0x70] sm:$0xff]
    %v127 = vld [vmem:[#allocation3 + $0x80] sm:$0xff]
    %v128 = vld [vmem:[#allocation3 + $0x111] ss:$0 sm:$0xff]
    %v129 = vld [vmem:[#allocation2] sm:$0xff]
    %v130 = vtanh.pop %v129
    %v131 = vmul.f32 %v130, 0.5
    %v132 = vadd.f32 %v131, 0.5
    %v133 = vmul.f32 %v132, 0.0
    %135 = vrot.lane.b32.xlu0 %v130, 64
    %v136 = vpop.permute.xlu0 %135
    %v138 = vmul.f32 %v132, %v136
    %140 = vrot.lane.b32.xlu0 %v138, 32
    %v141 = vpop.permute.xlu0 %140
    %v143 = vadd.f32 %v133, %v141
    %v144 = vtanh.pop %v143
    %146 = vrot.lane.b32.xlu0 %v144, 64
    %v147 = vpop.permute.xlu0 %146
    %v149 = vmul.f32 %v132, %v147
    %151 = vrot.lane.b32.xlu0 %v149, 32
    %v152 = vpop.permute.xlu0 %151
    %vm153 = vcmask 261120
    %v154 = vsel %vm153, %v152, 0
    %156 = vmatpush.msra.mxu0 0.0
    %157 = vmatpush.msra.mxu0 0.0
    %158 = vmatpush.msra.mxu0 0.0
    %159 = vmatpush.msra.mxu0 0.0
    %160 = vmatpush.msra.mxu0 0.0
    %161 = vmatpush.msra.mxu0 0.0
    %162 = vmatpush.msra.mxu0 0.0
    %163 = vmatpush.msra.mxu0 0.0
    %164 = vmatpush.msra.mxu0 0.0
    %165 = vmatpush.msra.mxu0 0.0
    %166 = vmatpush.msra.mxu0 0.0
    %167 = vmatpush.msra.mxu0 0.0
    %168 = vmatpush.msra.mxu0 %v122
    %169 = vmatpush.msra.mxu0 %v120
    %170 = vmatpush.msra.mxu0 %v118
    %171 = vmatpush.msra.mxu0 %v116
    %172 = vmatmul.f32.gmra.mxu0 %v154
    %v173 = vpop.f32.mrf.mxu0
    %v174 = vadd.f32 0.0, %v173
    %175 = vdwg.mxu0
    %176 = vmatpush.msra.mxu0 0.0
    %177 = vmatpush.msra.mxu0 0.0
    %178 = vmatpush.msra.mxu0 0.0
    %179 = vmatpush.msra.mxu0 0.0
    %180 = vmatpush.msra.mxu0 0.0
    %181 = vmatpush.msra.mxu0 0.0
    %182 = vmatpush.msra.mxu0 0.0
    %183 = vmatpush.msra.mxu0 0.0
    %184 = vmatpush.msra.mxu0 0.0
    %185 = vmatpush.msra.mxu0 0.0
    %186 = vmatpush.msra.mxu0 0.0
    %187 = vmatpush.msra.mxu0 0.0
    %188 = vmatpush.msra.mxu0 %v123
    %189 = vmatpush.msra.mxu0 %v121
    %190 = vmatpush.msra.mxu0 %v119
    %191 = vmatpush.msra.mxu0 %v117
    %192 = vmatmul.f32.gmra.mxu0 %v154
    %v193 = vpop.f32.mrf.mxu0
    %v194 = vadd.f32 0.0, %v193
    %195 = vdwg.mxu0
    %v196 = vadd.f32 %v174, %v128
    %v197 = vtanh.pop %v196
    %v198 = vmul.f32 %v197, 0.5
    %v199 = vadd.f32 %v198, 0.5
    %v200 = vmul.f32 %v199, 0.0
    %202 = vrot.lane.b32.xlu0 %v197, 64
    %v203 = vpop.permute.xlu0 %202
    %v205 = vmul.f32 %v199, %v203
    %207 = vrot.lane.b32.xlu0 %v205, 32
    %v208 = vpop.permute.xlu0 %207
    %v210 = vadd.f32 %v200, %v208
    %v211 = vtanh.pop %v210
    %213 = vrot.lane.b32.xlu0 %v211, 64
    %v214 = vpop.permute.xlu0 %213
    %v216 = vmul.f32 %v199, %v214
    %218 = vrot.lane.b32.xlu0 %v216, 32
    %v219 = vpop.permute.xlu0 %218
    %v220 = vsel %vm153, %v219, 0
    %222 = vmatpush.msra.mxu0 0.0
    %223 = vmatpush.msra.mxu0 0.0
    %224 = vmatpush.msra.mxu0 0.0
    %225 = vmatpush.msra.mxu0 0.0
    %226 = vmatpush.msra.mxu0 0.0
    %227 = vmatpush.msra.mxu0 0.0
    %228 = vmatpush.msra.mxu0 0.0
    %229 = vmatpush.msra.mxu0 0.0
    %230 = vmatpush.msra.mxu0 0.0
    %231 = vmatpush.msra.mxu0 0.0
    %232 = vmatpush.msra.mxu0 0.0
    %233 = vmatpush.msra.mxu0 0.0
    %234 = vmatpush.msra.mxu0 %v127
    %235 = vmatpush.msra.mxu0 %v126
    %236 = vmatpush.msra.mxu0 %v125
    %237 = vmatpush.msra.mxu0 %v124
    %238 = vmatmul.f32.gmra.mxu0 %v220
    %v239 = vpop.f32.mrf.mxu0
    %v240 = vadd.f32 0.0, %v239
    %241 = vdwg.mxu0
    %v242 = vld [vmem:[#allocation2 + $0x8] sm:$0xff]
    %v243 = vadd.f32 %v242, %v194
    %v244 = vtanh.pop %v243
    %v245 = vmul.f32 %v244, 0.5
    %v246 = vadd.f32 %v245, 0.5
    %v247 = vmul.f32 %v246, %v143
    %249 = vrot.lane.b32.xlu0 %v244, 64
    %v250 = vpop.permute.xlu0 %249
    %v252 = vmul.f32 %v246, %v250
    %254 = vrot.lane.b32.xlu0 %v252, 32
    %v255 = vpop.permute.xlu0 %254
    %v257 = vadd.f32 %v247, %v255
    %v258 = vtanh.pop %v257
    %260 = vrot.lane.b32.xlu0 %v258, 64
    %v261 = vpop.permute.xlu0 %260
    %v263 = vmul.f32 %v246, %v261
    %265 = vrot.lane.b32.xlu0 %v263, 32
    %v266 = vpop.permute.xlu0 %265
    %v267 = vsel %vm153, %v266, 0
    %269 = vmatpush.msra.mxu0 0.0
    %270 = vmatpush.msra.mxu0 0.0
    %271 = vmatpush.msra.mxu0 0.0
    %272 = vmatpush.msra.mxu0 0.0
    %273 = vmatpush.msra.mxu0 0.0
    %274 = vmatpush.msra.mxu0 0.0
    %275 = vmatpush.msra.mxu0 0.0
    %276 = vmatpush.msra.mxu0 0.0
    %277 = vmatpush.msra.mxu0 0.0
    %278 = vmatpush.msra.mxu0 0.0
    %279 = vmatpush.msra.mxu0 0.0
    %280 = vmatpush.msra.mxu0 0.0
    %281 = vmatpush.msra.mxu0 %v122
    %282 = vmatpush.msra.mxu0 %v120
    %283 = vmatpush.msra.mxu0 %v118
    %284 = vmatpush.msra.mxu0 %v116
    %285 = vmatmul.f32.gmra.mxu0 %v267
    %v286 = vpop.f32.mrf.mxu0
    %v287 = vadd.f32 0.0, %v286
    %288 = vdwg.mxu0
    %289 = vmatpush.msra.mxu0 0.0
    %290 = vmatpush.msra.mxu0 0.0
    %291 = vmatpush.msra.mxu0 0.0
    %292 = vmatpush.msra.mxu0 0.0
    %293 = vmatpush.msra.mxu0 0.0
    %294 = vmatpush.msra.mxu0 0.0
    %295 = vmatpush.msra.mxu0 0.0
    %296 = vmatpush.msra.mxu0 0.0
    %297 = vmatpush.msra.mxu0 0.0
    %298 = vmatpush.msra.mxu0 0.0
    %299 = vmatpush.msra.mxu0 0.0
    %300 = vmatpush.msra.mxu0 0.0
    %301 = vmatpush.msra.mxu0 %v123
    %302 = vmatpush.msra.mxu0 %v121
    %303 = vmatpush.msra.mxu0 %v119
    %304 = vmatpush.msra.mxu0 %v117
    %305 = vmatmul.f32.gmra.mxu0 %v267
    %v306 = vpop.f32.mrf.mxu0
    %v307 = vadd.f32 0.0, %v306
    %308 = vdwg.mxu0
    %v309 = vadd.f32 %v287, %v240
    %v310 = vadd.f32 %v309, %v128
    %v311 = vtanh.pop %v310
    %v312 = vmul.f32 %v311, 0.5
    %v313 = vadd.f32 %v312, 0.5
    %v314 = vmul.f32 %v313, %v210
    %316 = vrot.lane.b32.xlu0 %v311, 64
    %v317 = vpop.permute.xlu0 %316
    %v319 = vmul.f32 %v313, %v317
    %321 = vrot.lane.b32.xlu0 %v319, 32
    %v322 = vpop.permute.xlu0 %321
    %v324 = vadd.f32 %v314, %v322
    %v325 = vtanh.pop %v324
    %327 = vrot.lane.b32.xlu0 %v325, 64
    %v328 = vpop.permute.xlu0 %327
    %v330 = vmul.f32 %v313, %v328
    %332 = vrot.lane.b32.xlu0 %v330, 32
    %v333 = vpop.permute.xlu0 %332
    %v334 = vsel %vm153, %v333, 0
    %336 = vmatpush.msra.mxu0 0.0
    %337 = vmatpush.msra.mxu0 0.0
    %338 = vmatpush.msra.mxu0 0.0
    %339 = vmatpush.msra.mxu0 0.0
    %340 = vmatpush.msra.mxu0 0.0
    %341 = vmatpush.msra.mxu0 0.0
    %342 = vmatpush.msra.mxu0 0.0
    %343 = vmatpush.msra.mxu0 0.0
    %344 = vmatpush.msra.mxu0 0.0
    %345 = vmatpush.msra.mxu0 0.0
    %346 = vmatpush.msra.mxu0 0.0
    %347 = vmatpush.msra.mxu0 0.0
    %348 = vmatpush.msra.mxu0 %v127
    %349 = vmatpush.msra.mxu0 %v126
    %350 = vmatpush.msra.mxu0 %v125
    %351 = vmatpush.msra.mxu0 %v124
    %352 = vmatmul.f32.gmra.mxu0 %v334
    %v353 = vpop.f32.mrf.mxu0
    %v354 = vadd.f32 0.0, %v353
    %355 = vdwg.mxu0
    %v356 = vld [vmem:[#allocation2 + $0x10] sm:$0xff]
    %v357 = vadd.f32 %v356, %v307
    %v358 = vtanh.pop %v357
    %v359 = vmul.f32 %v358, 0.5
    %v360 = vadd.f32 %v359, 0.5
    %v361 = vmul.f32 %v360, %v257
    %363 = vrot.lane.b32.xlu0 %v358, 64
    %v364 = vpop.permute.xlu0 %363
    %v366 = vmul.f32 %v360, %v364
    %368 = vrot.lane.b32.xlu0 %v366, 32
    %v369 = vpop.permute.xlu0 %368
    %v371 = vadd.f32 %v361, %v369
    %v372 = vtanh.pop %v371
    %374 = vrot.lane.b32.xlu0 %v372, 64
    %v375 = vpop.permute.xlu0 %374
    %v377 = vmul.f32 %v360, %v375
    %379 = vrot.lane.b32.xlu0 %v377, 32
    %v380 = vpop.permute.xlu0 %379
    %v381 = vsel %vm153, %v380, 0
    %383 = vmatpush.msra.mxu0 0.0
    %384 = vmatpush.msra.mxu0 0.0
    %385 = vmatpush.msra.mxu0 0.0
    %386 = vmatpush.msra.mxu0 0.0
    %387 = vmatpush.msra.mxu0 0.0
    %388 = vmatpush.msra.mxu0 0.0
    %389 = vmatpush.msra.mxu0 0.0
    %390 = vmatpush.msra.mxu0 0.0
    %391 = vmatpush.msra.mxu0 0.0
    %392 = vmatpush.msra.mxu0 0.0
    %393 = vmatpush.msra.mxu0 0.0
    %394 = vmatpush.msra.mxu0 0.0
    %395 = vmatpush.msra.mxu0 %v122
    %396 = vmatpush.msra.mxu0 %v120
    %397 = vmatpush.msra.mxu0 %v118
    %398 = vmatpush.msra.mxu0 %v116
    %399 = vmatmul.f32.gmra.mxu0 %v381
    %v400 = vpop.f32.mrf.mxu0
    %v401 = vadd.f32 0.0, %v400
    %402 = vdwg.mxu0
    %403 = vmatpush.msra.mxu0 0.0
    %404 = vmatpush.msra.mxu0 0.0
    %405 = vmatpush.msra.mxu0 0.0
    %406 = vmatpush.msra.mxu0 0.0
    %407 = vmatpush.msra.mxu0 0.0
    %408 = vmatpush.msra.mxu0 0.0
    %409 = vmatpush.msra.mxu0 0.0
    %410 = vmatpush.msra.mxu0 0.0
    %411 = vmatpush.msra.mxu0 0.0
    %412 = vmatpush.msra.mxu0 0.0
    %413 = vmatpush.msra.mxu0 0.0
    %414 = vmatpush.msra.mxu0 0.0
    %415 = vmatpush.msra.mxu0 %v123
    %416 = vmatpush.msra.mxu0 %v121
    %417 = vmatpush.msra.mxu0 %v119
    %418 = vmatpush.msra.mxu0 %v117
    %419 = vmatmul.f32.gmra.mxu0 %v381
    %v420 = vpop.f32.mrf.mxu0
    %v421 = vadd.f32 0.0, %v420
    %422 = vdwg.mxu0
    %v423 = vadd.f32 %v401, %v354
    %v424 = vadd.f32 %v423, %v128
    %v425 = vtanh.pop %v424
    %v426 = vmul.f32 %v425, 0.5
    %v427 = vadd.f32 %v426, 0.5
    %v428 = vmul.f32 %v427, %v324
    %430 = vrot.lane.b32.xlu0 %v425, 64
    %v431 = vpop.permute.xlu0 %430
    %v433 = vmul.f32 %v427, %v431
    %435 = vrot.lane.b32.xlu0 %v433, 32
    %v436 = vpop.permute.xlu0 %435
    %v438 = vadd.f32 %v428, %v436
    %v439 = vtanh.pop %v438
    %441 = vrot.lane.b32.xlu0 %v439, 64
    %v442 = vpop.permute.xlu0 %441
    %v444 = vmul.f32 %v427, %v442
    %446 = vrot.lane.b32.xlu0 %v444, 32
    %v447 = vpop.permute.xlu0 %446
    %v448 = vsel %vm153, %v447, 0
    %450 = vmatpush.msra.mxu0 0.0
    %451 = vmatpush.msra.mxu0 0.0
    %452 = vmatpush.msra.mxu0 0.0
    %453 = vmatpush.msra.mxu0 0.0
    %454 = vmatpush.msra.mxu0 0.0
    %455 = vmatpush.msra.mxu0 0.0
    %456 = vmatpush.msra.mxu0 0.0
    %457 = vmatpush.msra.mxu0 0.0
    %458 = vmatpush.msra.mxu0 0.0
    %459 = vmatpush.msra.mxu0 0.0
    %460 = vmatpush.msra.mxu0 0.0
    %461 = vmatpush.msra.mxu0 0.0
    %462 = vmatpush.msra.mxu0 %v127
    %463 = vmatpush.msra.mxu0 %v126
    %464 = vmatpush.msra.mxu0 %v125
    %465 = vmatpush.msra.mxu0 %v124
    %466 = vmatmul.f32.gmra.mxu0 %v448
    %v467 = vpop.f32.mrf.mxu0
    %v468 = vadd.f32 0.0, %v467
    %469 = vdwg.mxu0
    %v470 = vld [vmem:[#allocation2 + $0x18] sm:$0xff]
    %v471 = vadd.f32 %v470, %v421
    %v472 = vtanh.pop %v471
    %v473 = vmul.f32 %v472, 0.5
    %v474 = vadd.f32 %v473, 0.5
    %v475 = vmul.f32 %v474, %v371
    %477 = vrot.lane.b32.xlu0 %v472, 64
    %v478 = vpop.permute.xlu0 %477
    %v480 = vmul.f32 %v474, %v478
    %482 = vrot.lane.b32.xlu0 %v480, 32
    %v483 = vpop.permute.xlu0 %482
    %v485 = vadd.f32 %v475, %v483
    %v486 = vtanh.pop %v485
    %488 = vrot.lane.b32.xlu0 %v486, 64
    %v489 = vpop.permute.xlu0 %488
    %v491 = vmul.f32 %v474, %v489
    %493 = vrot.lane.b32.xlu0 %v491, 32
    %v494 = vpop.permute.xlu0 %493
    %v495 = vsel %vm153, %v494, 0
    %497 = vmatpush.msra.mxu0 0.0
    %498 = vmatpush.msra.mxu0 0.0
    %499 = vmatpush.msra.mxu0 0.0
    %500 = vmatpush.msra.mxu0 0.0
    %501 = vmatpush.msra.mxu0 0.0
    %502 = vmatpush.msra.mxu0 0.0
    %503 = vmatpush.msra.mxu0 0.0
    %504 = vmatpush.msra.mxu0 0.0
    %505 = vmatpush.msra.mxu0 0.0
    %506 = vmatpush.msra.mxu0 0.0
    %507 = vmatpush.msra.mxu0 0.0
    %508 = vmatpush.msra.mxu0 0.0
    %509 = vmatpush.msra.mxu0 %v122
    %510 = vmatpush.msra.mxu0 %v120
    %511 = vmatpush.msra.mxu0 %v118
    %512 = vmatpush.msra.mxu0 %v116
    %513 = vmatmul.f32.gmra.mxu0 %v495
    %v514 = vpop.f32.mrf.mxu0
    %v515 = vadd.f32 0.0, %v514
    %516 = vdwg.mxu0
    %517 = vmatpush.msra.mxu0 0.0
    %518 = vmatpush.msra.mxu0 0.0
    %519 = vmatpush.msra.mxu0 0.0
    %520 = vmatpush.msra.mxu0 0.0
    %521 = vmatpush.msra.mxu0 0.0
    %522 = vmatpush.msra.mxu0 0.0
    %523 = vmatpush.msra.mxu0 0.0
    %524 = vmatpush.msra.mxu0 0.0
    %525 = vmatpush.msra.mxu0 0.0
    %526 = vmatpush.msra.mxu0 0.0
    %527 = vmatpush.msra.mxu0 0.0
    %528 = vmatpush.msra.mxu0 0.0
    %529 = vmatpush.msra.mxu0 %v123
    %530 = vmatpush.msra.mxu0 %v121
    %531 = vmatpush.msra.mxu0 %v119
    %532 = vmatpush.msra.mxu0 %v117
    %533 = vmatmul.f32.gmra.mxu0 %v495
    %v534 = vpop.f32.mrf.mxu0
    %v535 = vadd.f32 0.0, %v534
    %536 = vdwg.mxu0
    %v537 = vadd.f32 %v515, %v468
    %v538 = vadd.f32 %v537, %v128
    %v539 = vtanh.pop %v538
    %v540 = vmul.f32 %v539, 0.5
    %v541 = vadd.f32 %v540, 0.5
    %v542 = vmul.f32 %v541, %v438
    %544 = vrot.lane.b32.xlu0 %v539, 64
    %v545 = vpop.permute.xlu0 %544
    %v547 = vmul.f32 %v541, %v545
    %549 = vrot.lane.b32.xlu0 %v547, 32
    %v550 = vpop.permute.xlu0 %549
    %v552 = vadd.f32 %v542, %v550
    %v553 = vtanh.pop %v552
    %555 = vrot.lane.b32.xlu0 %v553, 64
    %v556 = vpop.permute.xlu0 %555
    %v558 = vmul.f32 %v541, %v556
    %560 = vrot.lane.b32.xlu0 %v558, 32
    %v561 = vpop.permute.xlu0 %560
    %v562 = vsel %vm153, %v561, 0
    %564 = vmatpush.msra.mxu0 0.0
    %565 = vmatpush.msra.mxu0 0.0
    %566 = vmatpush.msra.mxu0 0.0
    %567 = vmatpush.msra.mxu0 0.0
    %568 = vmatpush.msra.mxu0 0.0
    %569 = vmatpush.msra.mxu0 0.0
    %570 = vmatpush.msra.mxu0 0.0
    %571 = vmatpush.msra.mxu0 0.0
    %572 = vmatpush.msra.mxu0 0.0
    %573 = vmatpush.msra.mxu0 0.0
    %574 = vmatpush.msra.mxu0 0.0
    %575 = vmatpush.msra.mxu0 0.0
    %576 = vmatpush.msra.mxu0 %v127
    %577 = vmatpush.msra.mxu0 %v126
    %578 = vmatpush.msra.mxu0 %v125
    %579 = vmatpush.msra.mxu0 %v124
    %580 = vmatmul.f32.gmra.mxu0 %v562
    %v581 = vpop.f32.mrf.mxu0
    %v582 = vadd.f32 0.0, %v581
    %583 = vdwg.mxu0
    %v584 = vld [vmem:[#allocation2 + $0x20] sm:$0xff]
    %v585 = vadd.f32 %v584, %v535
    %v586 = vtanh.pop %v585
    %v587 = vmul.f32 %v586, 0.5
    %v588 = vadd.f32 %v587, 0.5
    %v589 = vmul.f32 %v588, %v485
    %591 = vrot.lane.b32.xlu0 %v586, 64
    %v592 = vpop.permute.xlu0 %591
    %v594 = vmul.f32 %v588, %v592
    %596 = vrot.lane.b32.xlu0 %v594, 32
    %v597 = vpop.permute.xlu0 %596
    %v599 = vadd.f32 %v589, %v597
    %v600 = vtanh.pop %v599
    %602 = vrot.lane.b32.xlu0 %v600, 64
    %v603 = vpop.permute.xlu0 %602
    %v605 = vmul.f32 %v588, %v603
    %607 = vrot.lane.b32.xlu0 %v605, 32
    %v608 = vpop.permute.xlu0 %607
    %v609 = vsel %vm153, %v608, 0
    %611 = vmatpush.msra.mxu0 0.0
    %612 = vmatpush.msra.mxu0 0.0
    %613 = vmatpush.msra.mxu0 0.0
    %614 = vmatpush.msra.mxu0 0.0
    %615 = vmatpush.msra.mxu0 0.0
    %616 = vmatpush.msra.mxu0 0.0
    %617 = vmatpush.msra.mxu0 0.0
    %618 = vmatpush.msra.mxu0 0.0
    %619 = vmatpush.msra.mxu0 0.0
    %620 = vmatpush.msra.mxu0 0.0
    %621 = vmatpush.msra.mxu0 0.0
    %622 = vmatpush.msra.mxu0 0.0
    %623 = vmatpush.msra.mxu0 %v122
    %624 = vmatpush.msra.mxu0 %v120
    %625 = vmatpush.msra.mxu0 %v118
    %626 = vmatpush.msra.mxu0 %v116
    %627 = vmatmul.f32.gmra.mxu0 %v609
    %v628 = vpop.f32.mrf.mxu0
    %v629 = vadd.f32 0.0, %v628
    %630 = vdwg.mxu0
    %631 = vmatpush.msra.mxu0 0.0
    %632 = vmatpush.msra.mxu0 0.0
    %633 = vmatpush.msra.mxu0 0.0
    %634 = vmatpush.msra.mxu0 0.0
    %635 = vmatpush.msra.mxu0 0.0
    %636 = vmatpush.msra.mxu0 0.0
    %637 = vmatpush.msra.mxu0 0.0
    %638 = vmatpush.msra.mxu0 0.0
    %639 = vmatpush.msra.mxu0 0.0
    %640 = vmatpush.msra.mxu0 0.0
    %641 = vmatpush.msra.mxu0 0.0
    %642 = vmatpush.msra.mxu0 0.0
    %643 = vmatpush.msra.mxu0 %v123
    %644 = vmatpush.msra.mxu0 %v121
    %645 = vmatpush.msra.mxu0 %v119
    %646 = vmatpush.msra.mxu0 %v117
    %647 = vmatmul.f32.gmra.mxu0 %v609
    %v648 = vpop.f32.mrf.mxu0
    %v649 = vadd.f32 0.0, %v648
    %650 = vdwg.mxu0
    %v651 = vadd.f32 %v629, %v582
    %v652 = vadd.f32 %v651, %v128
    %v653 = vtanh.pop %v652
    %v654 = vmul.f32 %v653, 0.5
    %v655 = vadd.f32 %v654, 0.5
    %v656 = vmul.f32 %v655, %v552
    %658 = vrot.lane.b32.xlu0 %v653, 64
    %v659 = vpop.permute.xlu0 %658
    %v661 = vmul.f32 %v655, %v659
    %663 = vrot.lane.b32.xlu0 %v661, 32
    %v664 = vpop.permute.xlu0 %663
    %v666 = vadd.f32 %v656, %v664
    %v667 = vtanh.pop %v666
    %669 = vrot.lane.b32.xlu0 %v667, 64
    %v670 = vpop.permute.xlu0 %669
    %v672 = vmul.f32 %v655, %v670
    %674 = vrot.lane.b32.xlu0 %v672, 32
    %v675 = vpop.permute.xlu0 %674
    %v676 = vsel %vm153, %v675, 0
    %678 = vmatpush.msra.mxu0 0.0
    %679 = vmatpush.msra.mxu0 0.0
    %680 = vmatpush.msra.mxu0 0.0
    %681 = vmatpush.msra.mxu0 0.0
    %682 = vmatpush.msra.mxu0 0.0
    %683 = vmatpush.msra.mxu0 0.0
    %684 = vmatpush.msra.mxu0 0.0
    %685 = vmatpush.msra.mxu0 0.0
    %686 = vmatpush.msra.mxu0 0.0
    %687 = vmatpush.msra.mxu0 0.0
    %688 = vmatpush.msra.mxu0 0.0
    %689 = vmatpush.msra.mxu0 0.0
    %690 = vmatpush.msra.mxu0 %v127
    %691 = vmatpush.msra.mxu0 %v126
    %692 = vmatpush.msra.mxu0 %v125
    %693 = vmatpush.msra.mxu0 %v124
    %694 = vmatmul.f32.gmra.mxu0 %v676
    %v695 = vpop.f32.mrf.mxu0
    %v696 = vadd.f32 0.0, %v695
    %697 = vdwg.mxu0
    %v698 = vld [vmem:[#allocation2 + $0x28] sm:$0xff]
    %v699 = vadd.f32 %v698, %v649
    %v700 = vtanh.pop %v699
    %v701 = vmul.f32 %v700, 0.5
    %v702 = vadd.f32 %v701, 0.5
    %v703 = vmul.f32 %v702, %v599
    %705 = vrot.lane.b32.xlu0 %v700, 64
    %v706 = vpop.permute.xlu0 %705
    %v708 = vmul.f32 %v702, %v706
    %710 = vrot.lane.b32.xlu0 %v708, 32
    %v711 = vpop.permute.xlu0 %710
    %v713 = vadd.f32 %v703, %v711
    %v714 = vtanh.pop %v713
    %716 = vrot.lane.b32.xlu0 %v714, 64
    %v717 = vpop.permute.xlu0 %716
    %v719 = vmul.f32 %v702, %v717
    %721 = vrot.lane.b32.xlu0 %v719, 32
    %v722 = vpop.permute.xlu0 %721
    %v723 = vsel %vm153, %v722, 0
    %725 = vmatpush.msra.mxu0 0.0
    %726 = vmatpush.msra.mxu0 0.0
    %727 = vmatpush.msra.mxu0 0.0
    %728 = vmatpush.msra.mxu0 0.0
    %729 = vmatpush.msra.mxu0 0.0
    %730 = vmatpush.msra.mxu0 0.0
    %731 = vmatpush.msra.mxu0 0.0
    %732 = vmatpush.msra.mxu0 0.0
    %733 = vmatpush.msra.mxu0 0.0
    %734 = vmatpush.msra.mxu0 0.0
    %735 = vmatpush.msra.mxu0 0.0
    %736 = vmatpush.msra.mxu0 0.0
    %737 = vmatpush.msra.mxu0 %v122
    %738 = vmatpush.msra.mxu0 %v120
    %739 = vmatpush.msra.mxu0 %v118
    %740 = vmatpush.msra.mxu0 %v116
    %741 = vmatmul.f32.gmra.mxu0 %v723
    %v742 = vpop.f32.mrf.mxu0
    %v743 = vadd.f32 0.0, %v742
    %744 = vdwg.mxu0
    %745 = vmatpush.msra.mxu0 0.0
    %746 = vmatpush.msra.mxu0 0.0
    %747 = vmatpush.msra.mxu0 0.0
    %748 = vmatpush.msra.mxu0 0.0
    %749 = vmatpush.msra.mxu0 0.0
    %750 = vmatpush.msra.mxu0 0.0
    %751 = vmatpush.msra.mxu0 0.0
    %752 = vmatpush.msra.mxu0 0.0
    %753 = vmatpush.msra.mxu0 0.0
    %754 = vmatpush.msra.mxu0 0.0
    %755 = vmatpush.msra.mxu0 0.0
    %756 = vmatpush.msra.mxu0 0.0
    %757 = vmatpush.msra.mxu0 %v123
    %758 = vmatpush.msra.mxu0 %v121
    %759 = vmatpush.msra.mxu0 %v119
    %760 = vmatpush.msra.mxu0 %v117
    %761 = vmatmul.f32.gmra.mxu0 %v723
    %v762 = vpop.f32.mrf.mxu0
    %v763 = vadd.f32 0.0, %v762
    %764 = vdwg.mxu0
    %v765 = vadd.f32 %v743, %v696
    %v766 = vadd.f32 %v765, %v128
    %v767 = vtanh.pop %v766
    %v768 = vmul.f32 %v767, 0.5
    %v769 = vadd.f32 %v768, 0.5
    %v770 = vmul.f32 %v769, %v666
    %772 = vrot.lane.b32.xlu0 %v767, 64
    %v773 = vpop.permute.xlu0 %772
    %v775 = vmul.f32 %v769, %v773
    %777 = vrot.lane.b32.xlu0 %v775, 32
    %v778 = vpop.permute.xlu0 %777
    %v780 = vadd.f32 %v770, %v778
    %v781 = vtanh.pop %v780
    %783 = vrot.lane.b32.xlu0 %v781, 64
    %v784 = vpop.permute.xlu0 %783
    %v786 = vmul.f32 %v769, %v784
    %788 = vrot.lane.b32.xlu0 %v786, 32
    %v789 = vpop.permute.xlu0 %788
    %v790 = vsel %vm153, %v789, 0
    %792 = vmatpush.msra.mxu0 0.0
    %793 = vmatpush.msra.mxu0 0.0
    %794 = vmatpush.msra.mxu0 0.0
    %795 = vmatpush.msra.mxu0 0.0
    %796 = vmatpush.msra.mxu0 0.0
    %797 = vmatpush.msra.mxu0 0.0
    %798 = vmatpush.msra.mxu0 0.0
    %799 = vmatpush.msra.mxu0 0.0
    %800 = vmatpush.msra.mxu0 0.0
    %801 = vmatpush.msra.mxu0 0.0
    %802 = vmatpush.msra.mxu0 0.0
    %803 = vmatpush.msra.mxu0 0.0
    %804 = vmatpush.msra.mxu0 %v127
    %805 = vmatpush.msra.mxu0 %v126
    %806 = vmatpush.msra.mxu0 %v125
    %807 = vmatpush.msra.mxu0 %v124
    %808 = vmatmul.f32.gmra.mxu0 %v790
    %v809 = vpop.f32.mrf.mxu0
    %v810 = vadd.f32 0.0, %v809
    %811 = vdwg.mxu0
    %v812 = vld [vmem:[#allocation2 + $0x30] sm:$0xff]
    %v813 = vadd.f32 %v812, %v763
    %v814 = vtanh.pop %v813
    %v815 = vmul.f32 %v814, 0.5
    %v816 = vadd.f32 %v815, 0.5
    %v817 = vmul.f32 %v816, %v713
    %819 = vrot.lane.b32.xlu0 %v814, 64
    %v820 = vpop.permute.xlu0 %819
    %v822 = vmul.f32 %v816, %v820
    %824 = vrot.lane.b32.xlu0 %v822, 32
    %v825 = vpop.permute.xlu0 %824
    %v827 = vadd.f32 %v817, %v825
    %v828 = vtanh.pop %v827
    %830 = vrot.lane.b32.xlu0 %v828, 64
    %v831 = vpop.permute.xlu0 %830
    %v833 = vmul.f32 %v816, %v831
    %835 = vrot.lane.b32.xlu0 %v833, 32
    %v836 = vpop.permute.xlu0 %835
    %v837 = vsel %vm153, %v836, 0
    %839 = vmatpush.msra.mxu0 0.0
    %840 = vmatpush.msra.mxu0 0.0
    %841 = vmatpush.msra.mxu0 0.0
    %842 = vmatpush.msra.mxu0 0.0
    %843 = vmatpush.msra.mxu0 0.0
    %844 = vmatpush.msra.mxu0 0.0
    %845 = vmatpush.msra.mxu0 0.0
    %846 = vmatpush.msra.mxu0 0.0
    %847 = vmatpush.msra.mxu0 0.0
    %848 = vmatpush.msra.mxu0 0.0
    %849 = vmatpush.msra.mxu0 0.0
    %850 = vmatpush.msra.mxu0 0.0
    %851 = vmatpush.msra.mxu0 %v122
    %852 = vmatpush.msra.mxu0 %v120
    %853 = vmatpush.msra.mxu0 %v118
    %854 = vmatpush.msra.mxu0 %v116
    %855 = vmatmul.f32.gmra.mxu0 %v837
    %v856 = vpop.f32.mrf.mxu0
    %v857 = vadd.f32 0.0, %v856
    %858 = vdwg.mxu0
    %859 = vmatpush.msra.mxu0 0.0
    %860 = vmatpush.msra.mxu0 0.0
    %861 = vmatpush.msra.mxu0 0.0
    %862 = vmatpush.msra.mxu0 0.0
    %863 = vmatpush.msra.mxu0 0.0
    %864 = vmatpush.msra.mxu0 0.0
    %865 = vmatpush.msra.mxu0 0.0
    %866 = vmatpush.msra.mxu0 0.0
    %867 = vmatpush.msra.mxu0 0.0
    %868 = vmatpush.msra.mxu0 0.0
    %869 = vmatpush.msra.mxu0 0.0
    %870 = vmatpush.msra.mxu0 0.0
    %871 = vmatpush.msra.mxu0 %v123
    %872 = vmatpush.msra.mxu0 %v121
    %873 = vmatpush.msra.mxu0 %v119
    %874 = vmatpush.msra.mxu0 %v117
    %875 = vmatmul.f32.gmra.mxu0 %v837
    %v876 = vpop.f32.mrf.mxu0
    %v877 = vadd.f32 0.0, %v876
    %878 = vdwg.mxu0
    %v879 = vadd.f32 %v857, %v810
    %v880 = vadd.f32 %v879, %v128
    %v881 = vtanh.pop %v880
    %v882 = vmul.f32 %v881, 0.5
    %v883 = vadd.f32 %v882, 0.5
    %v884 = vmul.f32 %v883, %v780
    %886 = vrot.lane.b32.xlu0 %v881, 64
    %v887 = vpop.permute.xlu0 %886
    %v889 = vmul.f32 %v883, %v887
    %891 = vrot.lane.b32.xlu0 %v889, 32
    %v892 = vpop.permute.xlu0 %891
    %v894 = vadd.f32 %v884, %v892
    %v895 = vtanh.pop %v894
    %897 = vrot.lane.b32.xlu0 %v895, 64
    %v898 = vpop.permute.xlu0 %897
    %v900 = vmul.f32 %v883, %v898
    %902 = vrot.lane.b32.xlu0 %v900, 32
    %v903 = vpop.permute.xlu0 %902
    %v904 = vsel %vm153, %v903, 0
    %906 = vmatpush.msra.mxu0 0.0
    %907 = vmatpush.msra.mxu0 0.0
    %908 = vmatpush.msra.mxu0 0.0
    %909 = vmatpush.msra.mxu0 0.0
    %910 = vmatpush.msra.mxu0 0.0
    %911 = vmatpush.msra.mxu0 0.0
    %912 = vmatpush.msra.mxu0 0.0
    %913 = vmatpush.msra.mxu0 0.0
    %914 = vmatpush.msra.mxu0 0.0
    %915 = vmatpush.msra.mxu0 0.0
    %916 = vmatpush.msra.mxu0 0.0
    %917 = vmatpush.msra.mxu0 0.0
    %918 = vmatpush.msra.mxu0 %v127
    %919 = vmatpush.msra.mxu0 %v126
    %920 = vmatpush.msra.mxu0 %v125
    %921 = vmatpush.msra.mxu0 %v124
    %922 = vmatmul.f32.gmra.mxu0 %v904
    %v923 = vpop.f32.mrf.mxu0
    %v924 = vadd.f32 0.0, %v923
    %925 = vdwg.mxu0
    %v926 = vld [vmem:[#allocation2 + $0x38] sm:$0xff]
    %v927 = vadd.f32 %v926, %v877
    %v928 = vtanh.pop %v927
    %v929 = vmul.f32 %v928, 0.5
    %v930 = vadd.f32 %v929, 0.5
    %v931 = vmul.f32 %v930, %v827
    %933 = vrot.lane.b32.xlu0 %v928, 64
    %v934 = vpop.permute.xlu0 %933
    %v936 = vmul.f32 %v930, %v934
    %938 = vrot.lane.b32.xlu0 %v936, 32
    %v939 = vpop.permute.xlu0 %938
    %v941 = vadd.f32 %v931, %v939
    %v942 = vtanh.pop %v941
    %944 = vrot.lane.b32.xlu0 %v942, 64
    %v945 = vpop.permute.xlu0 %944
    %v947 = vmul.f32 %v930, %v945
    %949 = vrot.lane.b32.xlu0 %v947, 32
    %v950 = vpop.permute.xlu0 %949
    %v951 = vsel %vm153, %v950, 0
    %953 = vmatpush.msra.mxu0 0.0
    %954 = vmatpush.msra.mxu0 0.0
    %955 = vmatpush.msra.mxu0 0.0
    %956 = vmatpush.msra.mxu0 0.0
    %957 = vmatpush.msra.mxu0 0.0
    %958 = vmatpush.msra.mxu0 0.0
    %959 = vmatpush.msra.mxu0 0.0
    %960 = vmatpush.msra.mxu0 0.0
    %961 = vmatpush.msra.mxu0 0.0
    %962 = vmatpush.msra.mxu0 0.0
    %963 = vmatpush.msra.mxu0 0.0
    %964 = vmatpush.msra.mxu0 0.0
    %965 = vmatpush.msra.mxu0 %v122
    %966 = vmatpush.msra.mxu0 %v120
    %967 = vmatpush.msra.mxu0 %v118
    %968 = vmatpush.msra.mxu0 %v116
    %969 = vmatmul.f32.gmra.mxu0 %v951
    %v970 = vpop.f32.mrf.mxu0
    %v971 = vadd.f32 0.0, %v970
    %972 = vdwg.mxu0
    %v973 = vadd.f32 %v971, %v924
    %v974 = vadd.f32 %v973, %v128
    %v975 = vtanh.pop %v974
    %v976 = vmul.f32 %v975, 0.5
    %v977 = vadd.f32 %v976, 0.5
    %v978 = vmul.f32 %v977, %v894
    %980 = vrot.lane.b32.xlu0 %v975, 64
    %v981 = vpop.permute.xlu0 %980
    %v983 = vmul.f32 %v977, %v981
    %985 = vrot.lane.b32.xlu0 %v983, 32
    %v986 = vpop.permute.xlu0 %985
    %v988 = vadd.f32 %v978, %v986
    %v989 = vtanh.pop %v988
    %991 = vrot.lane.b32.xlu0 %v989, 64
    %v992 = vpop.permute.xlu0 %991
    %v994 = vmul.f32 %v977, %v992
    %v995 = vld [vmem:[#allocation3 + $0xd0] sm:$0xff]
    %v996 = vld [vmem:[#allocation3 + $0xe0] sm:$0xff]
    %v997 = vld [vmem:[#allocation3 + $0xf0] sm:$0xff]
    %v998 = vld [vmem:[#allocation3 + $0x100] sm:$0xff]
    %v999 = vld [vmem:[#allocation3 + $0x112] ss:$0 sm:$0xff]
    %1001 = vrot.lane.b32.xlu0 %v994, 32
    %v1002 = vpop.permute.xlu0 %1001
    %v1003 = vsel %vm153, %v1002, 0
    %1005 = vmatpush.msra.mxu0 0.0
    %1006 = vmatpush.msra.mxu0 0.0
    %1007 = vmatpush.msra.mxu0 0.0
    %1008 = vmatpush.msra.mxu0 0.0
    %1009 = vmatpush.msra.mxu0 0.0
    %1010 = vmatpush.msra.mxu0 0.0
    %1011 = vmatpush.msra.mxu0 0.0
    %1012 = vmatpush.msra.mxu0 0.0
    %1013 = vmatpush.msra.mxu0 0.0
    %1014 = vmatpush.msra.mxu0 0.0
    %1015 = vmatpush.msra.mxu0 0.0
    %1016 = vmatpush.msra.mxu0 0.0
    %1017 = vmatpush.msra.mxu0 %v998
    %1018 = vmatpush.msra.mxu0 %v997
    %1019 = vmatpush.msra.mxu0 %v996
    %1020 = vmatpush.msra.mxu0 %v995
    %1021 = vmatmul.f32.gmra.mxu0 %v1003
    %v1022 = vpop.f32.mrf.mxu0
    %v1023 = vadd.f32 %v999, %v1022
    %1024 = vdwg.mxu0
    %v1025 = vmax.f32 %v1023, 0.0
    %v1026 = vmul.f32 %v1025, 0.03125
    %1028 = vrot.lane.b32.xlu0 %v1026, 96
    %v1029 = vpop.permute.xlu0 %1028
    %v1031 = vadd.f32 %v994, %v1029
    %1033 = vrot.lane.b32.xlu0 %v1031, 32
    %v1034 = vpop.permute.xlu0 %1033
    %v1035 = vsel %vm153, %v1034, 0
    %1037 = vmatpush.msra.mxu0 0.0
    %1038 = vmatpush.msra.mxu0 0.0
    %1039 = vmatpush.msra.mxu0 0.0
    %1040 = vmatpush.msra.mxu0 0.0
    %1041 = vmatpush.msra.mxu0 0.0
    %1042 = vmatpush.msra.mxu0 0.0
    %1043 = vmatpush.msra.mxu0 0.0
    %1044 = vmatpush.msra.mxu0 0.0
    %1045 = vmatpush.msra.mxu0 0.0
    %1046 = vmatpush.msra.mxu0 0.0
    %1047 = vmatpush.msra.mxu0 0.0
    %1048 = vmatpush.msra.mxu0 0.0
    %1049 = vmatpush.msra.mxu0 %v998
    %1050 = vmatpush.msra.mxu0 %v997
    %1051 = vmatpush.msra.mxu0 %v996
    %1052 = vmatpush.msra.mxu0 %v995
    %1053 = vmatmul.f32.gmra.mxu0 %v1035
    %v1054 = vpop.f32.mrf.mxu0
    %v1055 = vadd.f32 %v999, %v1054
    %1056 = vdwg.mxu0
    %v1057 = vmax.f32 %v1055, 0.0
    %v1058 = vmul.f32 %v1057, 0.03125
    %1060 = vrot.lane.b32.xlu0 %v1058, 96
    %v1061 = vpop.permute.xlu0 %1060
    %v1063 = vadd.f32 %v994, %v1061
    %1065 = vrot.lane.b32.xlu0 %v1063, 32
    %v1066 = vpop.permute.xlu0 %1065
    %v1067 = vsel %vm153, %v1066, 0
    %1069 = vmatpush.msra.mxu0 0.0
    %1070 = vmatpush.msra.mxu0 0.0
    %1071 = vmatpush.msra.mxu0 0.0
    %1072 = vmatpush.msra.mxu0 0.0
    %1073 = vmatpush.msra.mxu0 0.0
    %1074 = vmatpush.msra.mxu0 0.0
    %1075 = vmatpush.msra.mxu0 0.0
    %1076 = vmatpush.msra.mxu0 0.0
    %1077 = vmatpush.msra.mxu0 0.0
    %1078 = vmatpush.msra.mxu0 0.0
    %1079 = vmatpush.msra.mxu0 0.0
    %1080 = vmatpush.msra.mxu0 0.0
    %1081 = vmatpush.msra.mxu0 %v998
    %1082 = vmatpush.msra.mxu0 %v997
    %1083 = vmatpush.msra.mxu0 %v996
    %1084 = vmatpush.msra.mxu0 %v995
    %1085 = vmatmul.f32.gmra.mxu0 %v1067
    %v1086 = vpop.f32.mrf.mxu0
    %v1087 = vadd.f32 %v999, %v1086
    %1088 = vdwg.mxu0
    %v1089 = vmax.f32 %v1087, 0.0
    %v1090 = vmul.f32 %v1089, 0.0625
    %1092 = vrot.lane.b32.xlu0 %v1090, 96
    %v1093 = vpop.permute.xlu0 %1092
    %v1095 = vadd.f32 %v994, %v1093
    %1097 = vrot.lane.b32.xlu0 %v1095, 32
    %v1098 = vpop.permute.xlu0 %1097
    %v1099 = vsel %vm153, %v1098, 0
    %1101 = vmatpush.msra.mxu0 0.0
    %1102 = vmatpush.msra.mxu0 0.0
    %1103 = vmatpush.msra.mxu0 0.0
    %1104 = vmatpush.msra.mxu0 0.0
    %1105 = vmatpush.msra.mxu0 0.0
    %1106 = vmatpush.msra.mxu0 0.0
    %1107 = vmatpush.msra.mxu0 0.0
    %1108 = vmatpush.msra.mxu0 0.0
    %1109 = vmatpush.msra.mxu0 0.0
    %1110 = vmatpush.msra.mxu0 0.0
    %1111 = vmatpush.msra.mxu0 0.0
    %1112 = vmatpush.msra.mxu0 0.0
    %1113 = vmatpush.msra.mxu0 %v998
    %1114 = vmatpush.msra.mxu0 %v997
    %1115 = vmatpush.msra.mxu0 %v996
    %1116 = vmatpush.msra.mxu0 %v995
    %1117 = vmatmul.f32.gmra.mxu0 %v1099
    %v1118 = vpop.f32.mrf.mxu0
    %v1119 = vadd.f32 %v999, %v1118
    %1120 = vdwg.mxu0
    %v1121 = vmax.f32 %v1119, 0.0
    %v1122 = vmul.f32 %v1057, 2.0
    %v1123 = vadd.f32 %v1025, %v1122
    %v1124 = vmul.f32 %v1089, 2.0
    %v1125 = vadd.f32 %v1123, %v1124
    %v1126 = vadd.f32 %v1125, %v1121
    %v1127 = vmul.f32 %v1126, 0.010416667
    %1129 = vrot.lane.b32.xlu0 %v1127, 96
    %v1130 = vpop.permute.xlu0 %1129
    %v1132 = vadd.f32 %v994, %v1130
    %1134 = vrot.lane.b32.xlu0 %v1132, 32
    %v1135 = vpop.permute.xlu0 %1134
    %v1136 = vsel %vm153, %v1135, 0
    %1138 = vmatpush.msra.mxu0 0.0
    %1139 = vmatpush.msra.mxu0 0.0
    %1140 = vmatpush.msra.mxu0 0.0
    %1141 = vmatpush.msra.mxu0 0.0
    %1142 = vmatpush.msra.mxu0 0.0
    %1143 = vmatpush.msra.mxu0 0.0
    %1144 = vmatpush.msra.mxu0 0.0
    %1145 = vmatpush.msra.mxu0 0.0
    %1146 = vmatpush.msra.mxu0 0.0
    %1147 = vmatpush.msra.mxu0 0.0
    %1148 = vmatpush.msra.mxu0 0.0
    %1149 = vmatpush.msra.mxu0 0.0
    %1150 = vmatpush.msra.mxu0 %v998
    %1151 = vmatpush.msra.mxu0 %v997
    %1152 = vmatpush.msra.mxu0 %v996
    %1153 = vmatpush.msra.mxu0 %v995
    %1154 = vmatmul.f32.gmra.mxu0 %v1136
    %v1155 = vpop.f32.mrf.mxu0
    %v1156 = vadd.f32 %v999, %v1155
    %1157 = vdwg.mxu0
    %v1158 = vmax.f32 %v1156, 0.0
    %v1159 = vmul.f32 %v1158, 0.03125
    %1161 = vrot.lane.b32.xlu0 %v1159, 96
    %v1162 = vpop.permute.xlu0 %1161
    %v1164 = vadd.f32 %v1132, %v1162
    %1166 = vrot.lane.b32.xlu0 %v1164, 32
    %v1167 = vpop.permute.xlu0 %1166
    %v1168 = vsel %vm153, %v1167, 0
    %1170 = vmatpush.msra.mxu0 0.0
    %1171 = vmatpush.msra.mxu0 0.0
    %1172 = vmatpush.msra.mxu0 0.0
    %1173 = vmatpush.msra.mxu0 0.0
    %1174 = vmatpush.msra.mxu0 0.0
    %1175 = vmatpush.msra.mxu0 0.0
    %1176 = vmatpush.msra.mxu0 0.0
    %1177 = vmatpush.msra.mxu0 0.0
    %1178 = vmatpush.msra.mxu0 0.0
    %1179 = vmatpush.msra.mxu0 0.0
    %1180 = vmatpush.msra.mxu0 0.0
    %1181 = vmatpush.msra.mxu0 0.0
    %1182 = vmatpush.msra.mxu0 %v998
    %1183 = vmatpush.msra.mxu0 %v997
    %1184 = vmatpush.msra.mxu0 %v996
    %1185 = vmatpush.msra.mxu0 %v995
    %1186 = vmatmul.f32.gmra.mxu0 %v1168
    %v1187 = vpop.f32.mrf.mxu0
    %v1188 = vadd.f32 %v999, %v1187
    %1189 = vdwg.mxu0
    %v1190 = vmax.f32 %v1188, 0.0
    %v1191 = vmul.f32 %v1190, 0.03125
    %1193 = vrot.lane.b32.xlu0 %v1191, 96
    %v1194 = vpop.permute.xlu0 %1193
    %v1196 = vadd.f32 %v1132, %v1194
    %1198 = vrot.lane.b32.xlu0 %v1196, 32
    %v1199 = vpop.permute.xlu0 %1198
    %v1200 = vsel %vm153, %v1199, 0
    %1202 = vmatpush.msra.mxu0 0.0
    %1203 = vmatpush.msra.mxu0 0.0
    %1204 = vmatpush.msra.mxu0 0.0
    %1205 = vmatpush.msra.mxu0 0.0
    %1206 = vmatpush.msra.mxu0 0.0
    %1207 = vmatpush.msra.mxu0 0.0
    %1208 = vmatpush.msra.mxu0 0.0
    %1209 = vmatpush.msra.mxu0 0.0
    %1210 = vmatpush.msra.mxu0 0.0
    %1211 = vmatpush.msra.mxu0 0.0
    %1212 = vmatpush.msra.mxu0 0.0
    %1213 = vmatpush.msra.mxu0 0.0
    %1214 = vmatpush.msra.mxu0 %v998
    %1215 = vmatpush.msra.mxu0 %v997
    %1216 = vmatpush.msra.mxu0 %v996
    %1217 = vmatpush.msra.mxu0 %v995
    %1218 = vmatmul.f32.gmra.mxu0 %v1200
    %v1219 = vpop.f32.mrf.mxu0
    %v1220 = vadd.f32 %v999, %v1219
    %1221 = vdwg.mxu0
    %v1222 = vmax.f32 %v1220, 0.0
    %v1223 = vmul.f32 %v1222, 0.0625
    %1225 = vrot.lane.b32.xlu0 %v1223, 96
    %v1226 = vpop.permute.xlu0 %1225
    %v1228 = vadd.f32 %v1132, %v1226
    %1230 = vrot.lane.b32.xlu0 %v1228, 32
    %v1231 = vpop.permute.xlu0 %1230
    %v1232 = vsel %vm153, %v1231, 0
    %1234 = vmatpush.msra.mxu0 0.0
    %1235 = vmatpush.msra.mxu0 0.0
    %1236 = vmatpush.msra.mxu0 0.0
    %1237 = vmatpush.msra.mxu0 0.0
    %1238 = vmatpush.msra.mxu0 0.0
    %1239 = vmatpush.msra.mxu0 0.0
    %1240 = vmatpush.msra.mxu0 0.0
    %1241 = vmatpush.msra.mxu0 0.0
    %1242 = vmatpush.msra.mxu0 0.0
    %1243 = vmatpush.msra.mxu0 0.0
    %1244 = vmatpush.msra.mxu0 0.0
    %1245 = vmatpush.msra.mxu0 0.0
    %1246 = vmatpush.msra.mxu0 %v998
    %1247 = vmatpush.msra.mxu0 %v997
    %1248 = vmatpush.msra.mxu0 %v996
    %1249 = vmatpush.msra.mxu0 %v995
    %1250 = vmatmul.f32.gmra.mxu0 %v1232
    %v1251 = vpop.f32.mrf.mxu0
    %v1252 = vadd.f32 %v999, %v1251
    %1253 = vdwg.mxu0
    %v1254 = vmax.f32 %v1252, 0.0
    %v1255 = vmul.f32 %v1190, 2.0
    %v1256 = vadd.f32 %v1158, %v1255
    %v1257 = vmul.f32 %v1222, 2.0
    %v1258 = vadd.f32 %v1256, %v1257
    %v1259 = vadd.f32 %v1258, %v1254
    %v1260 = vmul.f32 %v1259, 0.010416667
    %1262 = vrot.lane.b32.xlu0 %v1260, 96
    %v1263 = vpop.permute.xlu0 %1262
    %v1265 = vadd.f32 %v1132, %v1263
    %1267 = vrot.lane.b32.xlu0 %v1265, 32
    %v1268 = vpop.permute.xlu0 %1267
    %v1269 = vsel %vm153, %v1268, 0
    %1271 = vmatpush.msra.mxu0 0.0
    %1272 = vmatpush.msra.mxu0 0.0
    %1273 = vmatpush.msra.mxu0 0.0
    %1274 = vmatpush.msra.mxu0 0.0
    %1275 = vmatpush.msra.mxu0 0.0
    %1276 = vmatpush.msra.mxu0 0.0
    %1277 = vmatpush.msra.mxu0 0.0
    %1278 = vmatpush.msra.mxu0 0.0
    %1279 = vmatpush.msra.mxu0 0.0
    %1280 = vmatpush.msra.mxu0 0.0
    %1281 = vmatpush.msra.mxu0 0.0
    %1282 = vmatpush.msra.mxu0 0.0
    %1283 = vmatpush.msra.mxu0 %v998
    %1284 = vmatpush.msra.mxu0 %v997
    %1285 = vmatpush.msra.mxu0 %v996
    %1286 = vmatpush.msra.mxu0 %v995
    %1287 = vmatmul.f32.gmra.mxu0 %v1269
    %v1288 = vpop.f32.mrf.mxu0
    %v1289 = vadd.f32 %v999, %v1288
    %1290 = vdwg.mxu0
    %v1291 = vmax.f32 %v1289, 0.0
    %v1292 = vmul.f32 %v1291, 0.03125
    %1294 = vrot.lane.b32.xlu0 %v1292, 96
    %v1295 = vpop.permute.xlu0 %1294
    %v1297 = vadd.f32 %v1265, %v1295
    %1299 = vrot.lane.b32.xlu0 %v1297, 32
    %v1300 = vpop.permute.xlu0 %1299
    %v1301 = vsel %vm153, %v1300, 0
    %1303 = vmatpush.msra.mxu0 0.0
    %1304 = vmatpush.msra.mxu0 0.0
    %1305 = vmatpush.msra.mxu0 0.0
    %1306 = vmatpush.msra.mxu0 0.0
    %1307 = vmatpush.msra.mxu0 0.0
    %1308 = vmatpush.msra.mxu0 0.0
    %1309 = vmatpush.msra.mxu0 0.0
    %1310 = vmatpush.msra.mxu0 0.0
    %1311 = vmatpush.msra.mxu0 0.0
    %1312 = vmatpush.msra.mxu0 0.0
    %1313 = vmatpush.msra.mxu0 0.0
    %1314 = vmatpush.msra.mxu0 0.0
    %1315 = vmatpush.msra.mxu0 %v998
    %1316 = vmatpush.msra.mxu0 %v997
    %1317 = vmatpush.msra.mxu0 %v996
    %1318 = vmatpush.msra.mxu0 %v995
    %1319 = vmatmul.f32.gmra.mxu0 %v1301
    %v1320 = vpop.f32.mrf.mxu0
    %v1321 = vadd.f32 %v999, %v1320
    %1322 = vdwg.mxu0
    %v1323 = vmax.f32 %v1321, 0.0
    %v1324 = vmul.f32 %v1323, 0.03125
    %1326 = vrot.lane.b32.xlu0 %v1324, 96
    %v1327 = vpop.permute.xlu0 %1326
    %v1329 = vadd.f32 %v1265, %v1327
    %1331 = vrot.lane.b32.xlu0 %v1329, 32
    %v1332 = vpop.permute.xlu0 %1331
    %v1333 = vsel %vm153, %v1332, 0
    %1335 = vmatpush.msra.mxu0 0.0
    %1336 = vmatpush.msra.mxu0 0.0
    %1337 = vmatpush.msra.mxu0 0.0
    %1338 = vmatpush.msra.mxu0 0.0
    %1339 = vmatpush.msra.mxu0 0.0
    %1340 = vmatpush.msra.mxu0 0.0
    %1341 = vmatpush.msra.mxu0 0.0
    %1342 = vmatpush.msra.mxu0 0.0
    %1343 = vmatpush.msra.mxu0 0.0
    %1344 = vmatpush.msra.mxu0 0.0
    %1345 = vmatpush.msra.mxu0 0.0
    %1346 = vmatpush.msra.mxu0 0.0
    %1347 = vmatpush.msra.mxu0 %v998
    %1348 = vmatpush.msra.mxu0 %v997
    %1349 = vmatpush.msra.mxu0 %v996
    %1350 = vmatpush.msra.mxu0 %v995
    %1351 = vmatmul.f32.gmra.mxu0 %v1333
    %v1352 = vpop.f32.mrf.mxu0
    %v1353 = vadd.f32 %v999, %v1352
    %1354 = vdwg.mxu0
    %v1355 = vmax.f32 %v1353, 0.0
    %v1356 = vmul.f32 %v1355, 0.0625
    %1358 = vrot.lane.b32.xlu0 %v1356, 96
    %v1359 = vpop.permute.xlu0 %1358
    %v1361 = vadd.f32 %v1265, %v1359
    %1363 = vrot.lane.b32.xlu0 %v1361, 32
    %v1364 = vpop.permute.xlu0 %1363
    %v1365 = vsel %vm153, %v1364, 0
    %1367 = vmatpush.msra.mxu0 0.0
    %1368 = vmatpush.msra.mxu0 0.0
    %1369 = vmatpush.msra.mxu0 0.0
    %1370 = vmatpush.msra.mxu0 0.0
    %1371 = vmatpush.msra.mxu0 0.0
    %1372 = vmatpush.msra.mxu0 0.0
    %1373 = vmatpush.msra.mxu0 0.0
    %1374 = vmatpush.msra.mxu0 0.0
    %1375 = vmatpush.msra.mxu0 0.0
    %1376 = vmatpush.msra.mxu0 0.0
    %1377 = vmatpush.msra.mxu0 0.0
    %1378 = vmatpush.msra.mxu0 0.0
    %1379 = vmatpush.msra.mxu0 %v998
    %1380 = vmatpush.msra.mxu0 %v997
    %1381 = vmatpush.msra.mxu0 %v996
    %1382 = vmatpush.msra.mxu0 %v995
    %1383 = vmatmul.f32.gmra.mxu0 %v1365
    %v1384 = vpop.f32.mrf.mxu0
    %v1385 = vadd.f32 %v999, %v1384
    %1386 = vdwg.mxu0
    %v1387 = vmax.f32 %v1385, 0.0
    %v1388 = vmul.f32 %v1323, 2.0
    %v1389 = vadd.f32 %v1291, %v1388
    %v1390 = vmul.f32 %v1355, 2.0
    %v1391 = vadd.f32 %v1389, %v1390
    %v1392 = vadd.f32 %v1391, %v1387
    %v1393 = vmul.f32 %v1392, 0.010416667
    %1395 = vrot.lane.b32.xlu0 %v1393, 96
    %v1396 = vpop.permute.xlu0 %1395
    %v1398 = vadd.f32 %v1265, %v1396
    %1400 = vrot.lane.b32.xlu0 %v1398, 32
    %v1401 = vpop.permute.xlu0 %1400
    %v1402 = vsel %vm153, %v1401, 0
    %1404 = vmatpush.msra.mxu0 0.0
    %1405 = vmatpush.msra.mxu0 0.0
    %1406 = vmatpush.msra.mxu0 0.0
    %1407 = vmatpush.msra.mxu0 0.0
    %1408 = vmatpush.msra.mxu0 0.0
    %1409 = vmatpush.msra.mxu0 0.0
    %1410 = vmatpush.msra.mxu0 0.0
    %1411 = vmatpush.msra.mxu0 0.0
    %1412 = vmatpush.msra.mxu0 0.0
    %1413 = vmatpush.msra.mxu0 0.0
    %1414 = vmatpush.msra.mxu0 0.0
    %1415 = vmatpush.msra.mxu0 0.0
    %1416 = vmatpush.msra.mxu0 %v998
    %1417 = vmatpush.msra.mxu0 %v997
    %1418 = vmatpush.msra.mxu0 %v996
    %1419 = vmatpush.msra.mxu0 %v995
    %1420 = vmatmul.f32.gmra.mxu0 %v1402
    %v1421 = vpop.f32.mrf.mxu0
    %v1422 = vadd.f32 %v999, %v1421
    %1423 = vdwg.mxu0
    %v1424 = vmax.f32 %v1422, 0.0
    %v1425 = vmul.f32 %v1424, 0.03125
    %1427 = vrot.lane.b32.xlu0 %v1425, 96
    %v1428 = vpop.permute.xlu0 %1427
    %v1430 = vadd.f32 %v1398, %v1428
    %1432 = vrot.lane.b32.xlu0 %v1430, 32
    %v1433 = vpop.permute.xlu0 %1432
    %v1434 = vsel %vm153, %v1433, 0
    %1436 = vmatpush.msra.mxu0 0.0
    %1437 = vmatpush.msra.mxu0 0.0
    %1438 = vmatpush.msra.mxu0 0.0
    %1439 = vmatpush.msra.mxu0 0.0
    %1440 = vmatpush.msra.mxu0 0.0
    %1441 = vmatpush.msra.mxu0 0.0
    %1442 = vmatpush.msra.mxu0 0.0
    %1443 = vmatpush.msra.mxu0 0.0
    %1444 = vmatpush.msra.mxu0 0.0
    %1445 = vmatpush.msra.mxu0 0.0
    %1446 = vmatpush.msra.mxu0 0.0
    %1447 = vmatpush.msra.mxu0 0.0
    %1448 = vmatpush.msra.mxu0 %v998
    %1449 = vmatpush.msra.mxu0 %v997
    %1450 = vmatpush.msra.mxu0 %v996
    %1451 = vmatpush.msra.mxu0 %v995
    %1452 = vmatmul.f32.gmra.mxu0 %v1434
    %v1453 = vpop.f32.mrf.mxu0
    %v1454 = vadd.f32 %v999, %v1453
    %1455 = vdwg.mxu0
    %v1456 = vmax.f32 %v1454, 0.0
    %v1457 = vmul.f32 %v1456, 0.03125
    %1459 = vrot.lane.b32.xlu0 %v1457, 96
    %v1460 = vpop.permute.xlu0 %1459
    %v1462 = vadd.f32 %v1398, %v1460
    %1464 = vrot.lane.b32.xlu0 %v1462, 32
    %v1465 = vpop.permute.xlu0 %1464
    %v1466 = vsel %vm153, %v1465, 0
    %1468 = vmatpush.msra.mxu0 0.0
    %1469 = vmatpush.msra.mxu0 0.0
    %1470 = vmatpush.msra.mxu0 0.0
    %1471 = vmatpush.msra.mxu0 0.0
    %1472 = vmatpush.msra.mxu0 0.0
    %1473 = vmatpush.msra.mxu0 0.0
    %1474 = vmatpush.msra.mxu0 0.0
    %1475 = vmatpush.msra.mxu0 0.0
    %1476 = vmatpush.msra.mxu0 0.0
    %1477 = vmatpush.msra.mxu0 0.0
    %1478 = vmatpush.msra.mxu0 0.0
    %1479 = vmatpush.msra.mxu0 0.0
    %1480 = vmatpush.msra.mxu0 %v998
    %1481 = vmatpush.msra.mxu0 %v997
    %1482 = vmatpush.msra.mxu0 %v996
    %1483 = vmatpush.msra.mxu0 %v995
    %1484 = vmatmul.f32.gmra.mxu0 %v1466
    %v1485 = vpop.f32.mrf.mxu0
    %v1486 = vadd.f32 %v999, %v1485
    %1487 = vdwg.mxu0
    %v1488 = vmax.f32 %v1486, 0.0
    %v1489 = vmul.f32 %v1488, 0.0625
    %1491 = vrot.lane.b32.xlu0 %v1489, 96
    %v1492 = vpop.permute.xlu0 %1491
    %v1494 = vadd.f32 %v1398, %v1492
    %1496 = vrot.lane.b32.xlu0 %v1494, 32
    %v1497 = vpop.permute.xlu0 %1496
    %v1498 = vsel %vm153, %v1497, 0
    %1500 = vmatpush.msra.mxu0 0.0
    %1501 = vmatpush.msra.mxu0 0.0
    %1502 = vmatpush.msra.mxu0 0.0
    %1503 = vmatpush.msra.mxu0 0.0
    %1504 = vmatpush.msra.mxu0 0.0
    %1505 = vmatpush.msra.mxu0 0.0
    %1506 = vmatpush.msra.mxu0 0.0
    %1507 = vmatpush.msra.mxu0 0.0
    %1508 = vmatpush.msra.mxu0 0.0
    %1509 = vmatpush.msra.mxu0 0.0
    %1510 = vmatpush.msra.mxu0 0.0
    %1511 = vmatpush.msra.mxu0 0.0
    %1512 = vmatpush.msra.mxu0 %v998
    %1513 = vmatpush.msra.mxu0 %v997
    %1514 = vmatpush.msra.mxu0 %v996
    %1515 = vmatpush.msra.mxu0 %v995
    %1516 = vmatmul.f32.gmra.mxu0 %v1498
    %v1517 = vpop.f32.mrf.mxu0
    %v1518 = vadd.f32 %v999, %v1517
    %1519 = vdwg.mxu0
    %v1520 = vmax.f32 %v1518, 0.0
    %v1521 = vmul.f32 %v1456, 2.0
    %v1522 = vadd.f32 %v1424, %v1521
    %v1523 = vmul.f32 %v1488, 2.0
    %v1524 = vadd.f32 %v1522, %v1523
    %v1525 = vadd.f32 %v1524, %v1520
    %v1526 = vmul.f32 %v1525, 0.010416667
    %1528 = vrot.lane.b32.xlu0 %v1526, 96
    %v1529 = vpop.permute.xlu0 %1528
    %v1531 = vadd.f32 %v1398, %v1529
    %1533 = vrot.lane.b32.xlu0 %v1531, 32
    %v1534 = vpop.permute.xlu0 %1533
    %v1535 = vsel %vm153, %v1534, 0
    %1537 = vmatpush.msra.mxu0 0.0
    %1538 = vmatpush.msra.mxu0 0.0
    %1539 = vmatpush.msra.mxu0 0.0
    %1540 = vmatpush.msra.mxu0 0.0
    %1541 = vmatpush.msra.mxu0 0.0
    %1542 = vmatpush.msra.mxu0 0.0
    %1543 = vmatpush.msra.mxu0 0.0
    %1544 = vmatpush.msra.mxu0 0.0
    %1545 = vmatpush.msra.mxu0 0.0
    %1546 = vmatpush.msra.mxu0 0.0
    %1547 = vmatpush.msra.mxu0 0.0
    %1548 = vmatpush.msra.mxu0 0.0
    %1549 = vmatpush.msra.mxu0 %v998
    %1550 = vmatpush.msra.mxu0 %v997
    %1551 = vmatpush.msra.mxu0 %v996
    %1552 = vmatpush.msra.mxu0 %v995
    %1553 = vmatmul.f32.gmra.mxu0 %v1535
    %v1554 = vpop.f32.mrf.mxu0
    %v1555 = vadd.f32 %v999, %v1554
    %1556 = vdwg.mxu0
    %v1557 = vmax.f32 %v1555, 0.0
    %v1558 = vmul.f32 %v1557, 0.03125
    %1560 = vrot.lane.b32.xlu0 %v1558, 96
    %v1561 = vpop.permute.xlu0 %1560
    %v1563 = vadd.f32 %v1531, %v1561
    %1565 = vrot.lane.b32.xlu0 %v1563, 32
    %v1566 = vpop.permute.xlu0 %1565
    %v1567 = vsel %vm153, %v1566, 0
    %1569 = vmatpush.msra.mxu0 0.0
    %1570 = vmatpush.msra.mxu0 0.0
    %1571 = vmatpush.msra.mxu0 0.0
    %1572 = vmatpush.msra.mxu0 0.0
    %1573 = vmatpush.msra.mxu0 0.0
    %1574 = vmatpush.msra.mxu0 0.0
    %1575 = vmatpush.msra.mxu0 0.0
    %1576 = vmatpush.msra.mxu0 0.0
    %1577 = vmatpush.msra.mxu0 0.0
    %1578 = vmatpush.msra.mxu0 0.0
    %1579 = vmatpush.msra.mxu0 0.0
    %1580 = vmatpush.msra.mxu0 0.0
    %1581 = vmatpush.msra.mxu0 %v998
    %1582 = vmatpush.msra.mxu0 %v997
    %1583 = vmatpush.msra.mxu0 %v996
    %1584 = vmatpush.msra.mxu0 %v995
    %1585 = vmatmul.f32.gmra.mxu0 %v1567
    %v1586 = vpop.f32.mrf.mxu0
    %v1587 = vadd.f32 %v999, %v1586
    %1588 = vdwg.mxu0
    %v1589 = vmax.f32 %v1587, 0.0
    %v1590 = vmul.f32 %v1589, 0.03125
    %1592 = vrot.lane.b32.xlu0 %v1590, 96
    %v1593 = vpop.permute.xlu0 %1592
    %v1595 = vadd.f32 %v1531, %v1593
    %1597 = vrot.lane.b32.xlu0 %v1595, 32
    %v1598 = vpop.permute.xlu0 %1597
    %v1599 = vsel %vm153, %v1598, 0
    %1601 = vmatpush.msra.mxu0 0.0
    %1602 = vmatpush.msra.mxu0 0.0
    %1603 = vmatpush.msra.mxu0 0.0
    %1604 = vmatpush.msra.mxu0 0.0
    %1605 = vmatpush.msra.mxu0 0.0
    %1606 = vmatpush.msra.mxu0 0.0
    %1607 = vmatpush.msra.mxu0 0.0
    %1608 = vmatpush.msra.mxu0 0.0
    %1609 = vmatpush.msra.mxu0 0.0
    %1610 = vmatpush.msra.mxu0 0.0
    %1611 = vmatpush.msra.mxu0 0.0
    %1612 = vmatpush.msra.mxu0 0.0
    %1613 = vmatpush.msra.mxu0 %v998
    %1614 = vmatpush.msra.mxu0 %v997
    %1615 = vmatpush.msra.mxu0 %v996
    %1616 = vmatpush.msra.mxu0 %v995
    %1617 = vmatmul.f32.gmra.mxu0 %v1599
    %v1618 = vpop.f32.mrf.mxu0
    %v1619 = vadd.f32 %v999, %v1618
    %1620 = vdwg.mxu0
    %v1621 = vmax.f32 %v1619, 0.0
    %v1622 = vmul.f32 %v1621, 0.0625
    %1624 = vrot.lane.b32.xlu0 %v1622, 96
    %v1625 = vpop.permute.xlu0 %1624
    %v1627 = vadd.f32 %v1531, %v1625
    %1629 = vrot.lane.b32.xlu0 %v1627, 32
    %v1630 = vpop.permute.xlu0 %1629
    %v1631 = vsel %vm153, %v1630, 0
    %1633 = vmatpush.msra.mxu0 0.0
    %1634 = vmatpush.msra.mxu0 0.0
    %1635 = vmatpush.msra.mxu0 0.0
    %1636 = vmatpush.msra.mxu0 0.0
    %1637 = vmatpush.msra.mxu0 0.0
    %1638 = vmatpush.msra.mxu0 0.0
    %1639 = vmatpush.msra.mxu0 0.0
    %1640 = vmatpush.msra.mxu0 0.0
    %1641 = vmatpush.msra.mxu0 0.0
    %1642 = vmatpush.msra.mxu0 0.0
    %1643 = vmatpush.msra.mxu0 0.0
    %1644 = vmatpush.msra.mxu0 0.0
    %1645 = vmatpush.msra.mxu0 %v998
    %1646 = vmatpush.msra.mxu0 %v997
    %1647 = vmatpush.msra.mxu0 %v996
    %1648 = vmatpush.msra.mxu0 %v995
    %1649 = vmatmul.f32.gmra.mxu0 %v1631
    %v1650 = vpop.f32.mrf.mxu0
    %v1651 = vadd.f32 %v999, %v1650
    %1652 = vdwg.mxu0
    %v1653 = vmax.f32 %v1651, 0.0
    %v1654 = vmul.f32 %v1589, 2.0
    %v1655 = vadd.f32 %v1557, %v1654
    %v1656 = vmul.f32 %v1621, 2.0
    %v1657 = vadd.f32 %v1655, %v1656
    %v1658 = vadd.f32 %v1657, %v1653
    %v1659 = vmul.f32 %v1658, 0.010416667
    %1661 = vrot.lane.b32.xlu0 %v1659, 96
    %v1662 = vpop.permute.xlu0 %1661
    %v1664 = vadd.f32 %v1531, %v1662
    %1666 = vrot.lane.b32.xlu0 %v1664, 32
    %v1667 = vpop.permute.xlu0 %1666
    %v1668 = vsel %vm153, %v1667, 0
    %1670 = vmatpush.msra.mxu0 0.0
    %1671 = vmatpush.msra.mxu0 0.0
    %1672 = vmatpush.msra.mxu0 0.0
    %1673 = vmatpush.msra.mxu0 0.0
    %1674 = vmatpush.msra.mxu0 0.0
    %1675 = vmatpush.msra.mxu0 0.0
    %1676 = vmatpush.msra.mxu0 0.0
    %1677 = vmatpush.msra.mxu0 0.0
    %1678 = vmatpush.msra.mxu0 0.0
    %1679 = vmatpush.msra.mxu0 0.0
    %1680 = vmatpush.msra.mxu0 0.0
    %1681 = vmatpush.msra.mxu0 0.0
    %1682 = vmatpush.msra.mxu0 %v998
    %1683 = vmatpush.msra.mxu0 %v997
    %1684 = vmatpush.msra.mxu0 %v996
    %1685 = vmatpush.msra.mxu0 %v995
    %1686 = vmatmul.f32.gmra.mxu0 %v1668
    %v1687 = vpop.f32.mrf.mxu0
    %v1688 = vadd.f32 %v999, %v1687
    %1689 = vdwg.mxu0
    %v1690 = vmax.f32 %v1688, 0.0
    %v1691 = vmul.f32 %v1690, 0.03125
    %1693 = vrot.lane.b32.xlu0 %v1691, 96
    %v1694 = vpop.permute.xlu0 %1693
    %v1696 = vadd.f32 %v1664, %v1694
    %1698 = vrot.lane.b32.xlu0 %v1696, 32
    %v1699 = vpop.permute.xlu0 %1698
    %v1700 = vsel %vm153, %v1699, 0
    %1702 = vmatpush.msra.mxu0 0.0
    %1703 = vmatpush.msra.mxu0 0.0
    %1704 = vmatpush.msra.mxu0 0.0
    %1705 = vmatpush.msra.mxu0 0.0
    %1706 = vmatpush.msra.mxu0 0.0
    %1707 = vmatpush.msra.mxu0 0.0
    %1708 = vmatpush.msra.mxu0 0.0
    %1709 = vmatpush.msra.mxu0 0.0
    %1710 = vmatpush.msra.mxu0 0.0
    %1711 = vmatpush.msra.mxu0 0.0
    %1712 = vmatpush.msra.mxu0 0.0
    %1713 = vmatpush.msra.mxu0 0.0
    %1714 = vmatpush.msra.mxu0 %v998
    %1715 = vmatpush.msra.mxu0 %v997
    %1716 = vmatpush.msra.mxu0 %v996
    %1717 = vmatpush.msra.mxu0 %v995
    %1718 = vmatmul.f32.gmra.mxu0 %v1700
    %v1719 = vpop.f32.mrf.mxu0
    %v1720 = vadd.f32 %v999, %v1719
    %1721 = vdwg.mxu0
    %v1722 = vmax.f32 %v1720, 0.0
    %v1723 = vmul.f32 %v1722, 0.03125
    %1725 = vrot.lane.b32.xlu0 %v1723, 96
    %v1726 = vpop.permute.xlu0 %1725
    %v1728 = vadd.f32 %v1664, %v1726
    %1730 = vrot.lane.b32.xlu0 %v1728, 32
    %v1731 = vpop.permute.xlu0 %1730
    %v1732 = vsel %vm153, %v1731, 0
    %1734 = vmatpush.msra.mxu0 0.0
    %1735 = vmatpush.msra.mxu0 0.0
    %1736 = vmatpush.msra.mxu0 0.0
    %1737 = vmatpush.msra.mxu0 0.0
    %1738 = vmatpush.msra.mxu0 0.0
    %1739 = vmatpush.msra.mxu0 0.0
    %1740 = vmatpush.msra.mxu0 0.0
    %1741 = vmatpush.msra.mxu0 0.0
    %1742 = vmatpush.msra.mxu0 0.0
    %1743 = vmatpush.msra.mxu0 0.0
    %1744 = vmatpush.msra.mxu0 0.0
    %1745 = vmatpush.msra.mxu0 0.0
    %1746 = vmatpush.msra.mxu0 %v998
    %1747 = vmatpush.msra.mxu0 %v997
    %1748 = vmatpush.msra.mxu0 %v996
    %1749 = vmatpush.msra.mxu0 %v995
    %1750 = vmatmul.f32.gmra.mxu0 %v1732
    %v1751 = vpop.f32.mrf.mxu0
    %v1752 = vadd.f32 %v999, %v1751
    %1753 = vdwg.mxu0
    %v1754 = vmax.f32 %v1752, 0.0
    %v1755 = vmul.f32 %v1754, 0.0625
    %1757 = vrot.lane.b32.xlu0 %v1755, 96
    %v1758 = vpop.permute.xlu0 %1757
    %v1760 = vadd.f32 %v1664, %v1758
    %1762 = vrot.lane.b32.xlu0 %v1760, 32
    %v1763 = vpop.permute.xlu0 %1762
    %v1764 = vsel %vm153, %v1763, 0
    %1766 = vmatpush.msra.mxu0 0.0
    %1767 = vmatpush.msra.mxu0 0.0
    %1768 = vmatpush.msra.mxu0 0.0
    %1769 = vmatpush.msra.mxu0 0.0
    %1770 = vmatpush.msra.mxu0 0.0
    %1771 = vmatpush.msra.mxu0 0.0
    %1772 = vmatpush.msra.mxu0 0.0
    %1773 = vmatpush.msra.mxu0 0.0
    %1774 = vmatpush.msra.mxu0 0.0
    %1775 = vmatpush.msra.mxu0 0.0
    %1776 = vmatpush.msra.mxu0 0.0
    %1777 = vmatpush.msra.mxu0 0.0
    %1778 = vmatpush.msra.mxu0 %v998
    %1779 = vmatpush.msra.mxu0 %v997
    %1780 = vmatpush.msra.mxu0 %v996
    %1781 = vmatpush.msra.mxu0 %v995
    %1782 = vmatmul.f32.gmra.mxu0 %v1764
    %v1783 = vpop.f32.mrf.mxu0
    %v1784 = vadd.f32 %v999, %v1783
    %1785 = vdwg.mxu0
    %v1786 = vmax.f32 %v1784, 0.0
    %v1787 = vmul.f32 %v1722, 2.0
    %v1788 = vadd.f32 %v1690, %v1787
    %v1789 = vmul.f32 %v1754, 2.0
    %v1790 = vadd.f32 %v1788, %v1789
    %v1791 = vadd.f32 %v1790, %v1786
    %v1792 = vmul.f32 %v1791, 0.010416667
    %1794 = vrot.lane.b32.xlu0 %v1792, 96
    %v1795 = vpop.permute.xlu0 %1794
    %v1797 = vadd.f32 %v1664, %v1795
    %1799 = vrot.lane.b32.xlu0 %v1797, 32
    %v1800 = vpop.permute.xlu0 %1799
    %v1801 = vsel %vm153, %v1800, 0
    %1803 = vmatpush.msra.mxu0 0.0
    %1804 = vmatpush.msra.mxu0 0.0
    %1805 = vmatpush.msra.mxu0 0.0
    %1806 = vmatpush.msra.mxu0 0.0
    %1807 = vmatpush.msra.mxu0 0.0
    %1808 = vmatpush.msra.mxu0 0.0
    %1809 = vmatpush.msra.mxu0 0.0
    %1810 = vmatpush.msra.mxu0 0.0
    %1811 = vmatpush.msra.mxu0 0.0
    %1812 = vmatpush.msra.mxu0 0.0
    %1813 = vmatpush.msra.mxu0 0.0
    %1814 = vmatpush.msra.mxu0 0.0
    %1815 = vmatpush.msra.mxu0 %v998
    %1816 = vmatpush.msra.mxu0 %v997
    %1817 = vmatpush.msra.mxu0 %v996
    %1818 = vmatpush.msra.mxu0 %v995
    %1819 = vmatmul.f32.gmra.mxu0 %v1801
    %v1820 = vpop.f32.mrf.mxu0
    %v1821 = vadd.f32 %v999, %v1820
    %1822 = vdwg.mxu0
    %v1823 = vmax.f32 %v1821, 0.0
    %v1824 = vmul.f32 %v1823, 0.03125
    %1826 = vrot.lane.b32.xlu0 %v1824, 96
    %v1827 = vpop.permute.xlu0 %1826
    %v1829 = vadd.f32 %v1797, %v1827
    %1831 = vrot.lane.b32.xlu0 %v1829, 32
    %v1832 = vpop.permute.xlu0 %1831
    %v1833 = vsel %vm153, %v1832, 0
    %1835 = vmatpush.msra.mxu0 0.0
    %1836 = vmatpush.msra.mxu0 0.0
    %1837 = vmatpush.msra.mxu0 0.0
    %1838 = vmatpush.msra.mxu0 0.0
    %1839 = vmatpush.msra.mxu0 0.0
    %1840 = vmatpush.msra.mxu0 0.0
    %1841 = vmatpush.msra.mxu0 0.0
    %1842 = vmatpush.msra.mxu0 0.0
    %1843 = vmatpush.msra.mxu0 0.0
    %1844 = vmatpush.msra.mxu0 0.0
    %1845 = vmatpush.msra.mxu0 0.0
    %1846 = vmatpush.msra.mxu0 0.0
    %1847 = vmatpush.msra.mxu0 %v998
    %1848 = vmatpush.msra.mxu0 %v997
    %1849 = vmatpush.msra.mxu0 %v996
    %1850 = vmatpush.msra.mxu0 %v995
    %1851 = vmatmul.f32.gmra.mxu0 %v1833
    %v1852 = vpop.f32.mrf.mxu0
    %v1853 = vadd.f32 %v999, %v1852
    %1854 = vdwg.mxu0
    %v1855 = vmax.f32 %v1853, 0.0
    %v1856 = vmul.f32 %v1855, 0.03125
    %1858 = vrot.lane.b32.xlu0 %v1856, 96
    %v1859 = vpop.permute.xlu0 %1858
    %v1861 = vadd.f32 %v1797, %v1859
    %1863 = vrot.lane.b32.xlu0 %v1861, 32
    %v1864 = vpop.permute.xlu0 %1863
    %v1865 = vsel %vm153, %v1864, 0
    %1867 = vmatpush.msra.mxu0 0.0
    %1868 = vmatpush.msra.mxu0 0.0
    %1869 = vmatpush.msra.mxu0 0.0
    %1870 = vmatpush.msra.mxu0 0.0
    %1871 = vmatpush.msra.mxu0 0.0
    %1872 = vmatpush.msra.mxu0 0.0
    %1873 = vmatpush.msra.mxu0 0.0
    %1874 = vmatpush.msra.mxu0 0.0
    %1875 = vmatpush.msra.mxu0 0.0
    %1876 = vmatpush.msra.mxu0 0.0
    %1877 = vmatpush.msra.mxu0 0.0
    %1878 = vmatpush.msra.mxu0 0.0
    %1879 = vmatpush.msra.mxu0 %v998
    %1880 = vmatpush.msra.mxu0 %v997
    %1881 = vmatpush.msra.mxu0 %v996
    %1882 = vmatpush.msra.mxu0 %v995
    %1883 = vmatmul.f32.gmra.mxu0 %v1865
    %v1884 = vpop.f32.mrf.mxu0
    %v1885 = vadd.f32 %v999, %v1884
    %1886 = vdwg.mxu0
    %v1887 = vmax.f32 %v1885, 0.0
    %v1888 = vmul.f32 %v1887, 0.0625
    %1890 = vrot.lane.b32.xlu0 %v1888, 96
    %v1891 = vpop.permute.xlu0 %1890
    %v1893 = vadd.f32 %v1797, %v1891
    %1895 = vrot.lane.b32.xlu0 %v1893, 32
    %v1896 = vpop.permute.xlu0 %1895
    %v1897 = vsel %vm153, %v1896, 0
    %1899 = vmatpush.msra.mxu0 0.0
    %1900 = vmatpush.msra.mxu0 0.0
    %1901 = vmatpush.msra.mxu0 0.0
    %1902 = vmatpush.msra.mxu0 0.0
    %1903 = vmatpush.msra.mxu0 0.0
    %1904 = vmatpush.msra.mxu0 0.0
    %1905 = vmatpush.msra.mxu0 0.0
    %1906 = vmatpush.msra.mxu0 0.0
    %1907 = vmatpush.msra.mxu0 0.0
    %1908 = vmatpush.msra.mxu0 0.0
    %1909 = vmatpush.msra.mxu0 0.0
    %1910 = vmatpush.msra.mxu0 0.0
    %1911 = vmatpush.msra.mxu0 %v998
    %1912 = vmatpush.msra.mxu0 %v997
    %1913 = vmatpush.msra.mxu0 %v996
    %1914 = vmatpush.msra.mxu0 %v995
    %1915 = vmatmul.f32.gmra.mxu0 %v1897
    %v1916 = vpop.f32.mrf.mxu0
    %v1917 = vadd.f32 %v999, %v1916
    %1918 = vdwg.mxu0
    %v1919 = vmax.f32 %v1917, 0.0
    %v1920 = vmul.f32 %v1855, 2.0
    %v1921 = vadd.f32 %v1823, %v1920
    %v1922 = vmul.f32 %v1887, 2.0
    %v1923 = vadd.f32 %v1921, %v1922
    %v1924 = vadd.f32 %v1923, %v1919
    %v1925 = vmul.f32 %v1924, 0.010416667
    %1927 = vrot.lane.b32.xlu0 %v1925, 96
    %v1928 = vpop.permute.xlu0 %1927
    %v1930 = vadd.f32 %v1797, %v1928
    %1932 = vrot.lane.b32.xlu0 %v1930, 32
    %v1933 = vpop.permute.xlu0 %1932
    %v1934 = vsel %vm153, %v1933, 0
    %1936 = vmatpush.msra.mxu0 0.0
    %1937 = vmatpush.msra.mxu0 0.0
    %1938 = vmatpush.msra.mxu0 0.0
    %1939 = vmatpush.msra.mxu0 0.0
    %1940 = vmatpush.msra.mxu0 0.0
    %1941 = vmatpush.msra.mxu0 0.0
    %1942 = vmatpush.msra.mxu0 0.0
    %1943 = vmatpush.msra.mxu0 0.0
    %1944 = vmatpush.msra.mxu0 0.0
    %1945 = vmatpush.msra.mxu0 0.0
    %1946 = vmatpush.msra.mxu0 0.0
    %1947 = vmatpush.msra.mxu0 0.0
    %1948 = vmatpush.msra.mxu0 %v998
    %1949 = vmatpush.msra.mxu0 %v997
    %1950 = vmatpush.msra.mxu0 %v996
    %1951 = vmatpush.msra.mxu0 %v995
    %1952 = vmatmul.f32.gmra.mxu0 %v1934
    %v1953 = vpop.f32.mrf.mxu0
    %v1954 = vadd.f32 %v999, %v1953
    %1955 = vdwg.mxu0
    %v1956 = vmax.f32 %v1954, 0.0
    %v1957 = vmul.f32 %v1956, 0.03125
    %1959 = vrot.lane.b32.xlu0 %v1957, 96
    %v1960 = vpop.permute.xlu0 %1959
    %v1962 = vadd.f32 %v1930, %v1960
    %1964 = vrot.lane.b32.xlu0 %v1962, 32
    %v1965 = vpop.permute.xlu0 %1964
    %v1966 = vsel %vm153, %v1965, 0
    %1968 = vmatpush.msra.mxu0 0.0
    %1969 = vmatpush.msra.mxu0 0.0
    %1970 = vmatpush.msra.mxu0 0.0
    %1971 = vmatpush.msra.mxu0 0.0
    %1972 = vmatpush.msra.mxu0 0.0
    %1973 = vmatpush.msra.mxu0 0.0
    %1974 = vmatpush.msra.mxu0 0.0
    %1975 = vmatpush.msra.mxu0 0.0
    %1976 = vmatpush.msra.mxu0 0.0
    %1977 = vmatpush.msra.mxu0 0.0
    %1978 = vmatpush.msra.mxu0 0.0
    %1979 = vmatpush.msra.mxu0 0.0
    %1980 = vmatpush.msra.mxu0 %v998
    %1981 = vmatpush.msra.mxu0 %v997
    %1982 = vmatpush.msra.mxu0 %v996
    %1983 = vmatpush.msra.mxu0 %v995
    %1984 = vmatmul.f32.gmra.mxu0 %v1966
    %v1985 = vpop.f32.mrf.mxu0
    %v1986 = vadd.f32 %v999, %v1985
    %1987 = vdwg.mxu0
    %v1988 = vmax.f32 %v1986, 0.0
    %v1989 = vmul.f32 %v1988, 0.03125
    %1991 = vrot.lane.b32.xlu0 %v1989, 96
    %v1992 = vpop.permute.xlu0 %1991
    %v1994 = vadd.f32 %v1930, %v1992
    %1996 = vrot.lane.b32.xlu0 %v1994, 32
    %v1997 = vpop.permute.xlu0 %1996
    %v1998 = vsel %vm153, %v1997, 0
    %2000 = vmatpush.msra.mxu0 0.0
    %2001 = vmatpush.msra.mxu0 0.0
    %2002 = vmatpush.msra.mxu0 0.0
    %2003 = vmatpush.msra.mxu0 0.0
    %2004 = vmatpush.msra.mxu0 0.0
    %2005 = vmatpush.msra.mxu0 0.0
    %2006 = vmatpush.msra.mxu0 0.0
    %2007 = vmatpush.msra.mxu0 0.0
    %2008 = vmatpush.msra.mxu0 0.0
    %2009 = vmatpush.msra.mxu0 0.0
    %2010 = vmatpush.msra.mxu0 0.0
    %2011 = vmatpush.msra.mxu0 0.0
    %2012 = vmatpush.msra.mxu0 %v998
    %2013 = vmatpush.msra.mxu0 %v997
    %2014 = vmatpush.msra.mxu0 %v996
    %2015 = vmatpush.msra.mxu0 %v995
    %2016 = vmatmul.f32.gmra.mxu0 %v1998
    %v2017 = vpop.f32.mrf.mxu0
    %v2018 = vadd.f32 %v999, %v2017
    %2019 = vdwg.mxu0
    %v2020 = vmax.f32 %v2018, 0.0
    %v2021 = vmul.f32 %v2020, 0.0625
    %2023 = vrot.lane.b32.xlu0 %v2021, 96
    %v2024 = vpop.permute.xlu0 %2023
    %v2026 = vadd.f32 %v1930, %v2024
    %2028 = vrot.lane.b32.xlu0 %v2026, 32
    %v2029 = vpop.permute.xlu0 %2028
    %v2030 = vsel %vm153, %v2029, 0
    %2032 = vmatpush.msra.mxu0 0.0
    %2033 = vmatpush.msra.mxu0 0.0
    %2034 = vmatpush.msra.mxu0 0.0
    %2035 = vmatpush.msra.mxu0 0.0
    %2036 = vmatpush.msra.mxu0 0.0
    %2037 = vmatpush.msra.mxu0 0.0
    %2038 = vmatpush.msra.mxu0 0.0
    %2039 = vmatpush.msra.mxu0 0.0
    %2040 = vmatpush.msra.mxu0 0.0
    %2041 = vmatpush.msra.mxu0 0.0
    %2042 = vmatpush.msra.mxu0 0.0
    %2043 = vmatpush.msra.mxu0 0.0
    %2044 = vmatpush.msra.mxu0 %v998
    %2045 = vmatpush.msra.mxu0 %v997
    %2046 = vmatpush.msra.mxu0 %v996
    %2047 = vmatpush.msra.mxu0 %v995
    %2048 = vmatmul.f32.gmra.mxu0 %v2030
    %v2049 = vpop.f32.mrf.mxu0
    %v2050 = vadd.f32 %v999, %v2049
    %2051 = vdwg.mxu0
    %v2052 = vmax.f32 %v2050, 0.0
    %v2053 = vmul.f32 %v1988, 2.0
    %v2054 = vadd.f32 %v1956, %v2053
    %v2055 = vmul.f32 %v2020, 2.0
    %v2056 = vadd.f32 %v2054, %v2055
    %v2057 = vadd.f32 %v2056, %v2052
    %v2058 = vmul.f32 %v2057, 0.010416667
    %2060 = vrot.lane.b32.xlu0 %v2058, 96
    %v2061 = vpop.permute.xlu0 %2060
    %v2063 = vadd.f32 %v1930, %v2061
    %2065 = vrot.lane.b32.xlu0 %v2063, 32
    %v2066 = vpop.permute.xlu0 %2065
    %v2067 = vsel %vm153, %v2066, 0
    %2069 = vmatpush.msra.mxu0 0.0
    %2070 = vmatpush.msra.mxu0 0.0
    %2071 = vmatpush.msra.mxu0 0.0
    %2072 = vmatpush.msra.mxu0 0.0
    %2073 = vmatpush.msra.mxu0 0.0
    %2074 = vmatpush.msra.mxu0 0.0
    %2075 = vmatpush.msra.mxu0 0.0
    %2076 = vmatpush.msra.mxu0 0.0
    %2077 = vmatpush.msra.mxu0 0.0
    %2078 = vmatpush.msra.mxu0 0.0
    %2079 = vmatpush.msra.mxu0 0.0
    %2080 = vmatpush.msra.mxu0 0.0
    %2081 = vmatpush.msra.mxu0 %v998
    %2082 = vmatpush.msra.mxu0 %v997
    %2083 = vmatpush.msra.mxu0 %v996
    %2084 = vmatpush.msra.mxu0 %v995
    %2085 = vmatmul.f32.gmra.mxu0 %v2067
    %v2086 = vpop.f32.mrf.mxu0
    %v2087 = vadd.f32 %v999, %v2086
    %2088 = vdwg.mxu0
    %v2089 = vmax.f32 %v2087, 0.0
    %v2090 = vmul.f32 %v2089, 0.03125
    %2092 = vrot.lane.b32.xlu0 %v2090, 96
    %v2093 = vpop.permute.xlu0 %2092
    %v2095 = vadd.f32 %v2063, %v2093
    %2097 = vrot.lane.b32.xlu0 %v2095, 32
    %v2098 = vpop.permute.xlu0 %2097
    %v2099 = vsel %vm153, %v2098, 0
    %2101 = vmatpush.msra.mxu0 0.0
    %2102 = vmatpush.msra.mxu0 0.0
    %2103 = vmatpush.msra.mxu0 0.0
    %2104 = vmatpush.msra.mxu0 0.0
    %2105 = vmatpush.msra.mxu0 0.0
    %2106 = vmatpush.msra.mxu0 0.0
    %2107 = vmatpush.msra.mxu0 0.0
    %2108 = vmatpush.msra.mxu0 0.0
    %2109 = vmatpush.msra.mxu0 0.0
    %2110 = vmatpush.msra.mxu0 0.0
    %2111 = vmatpush.msra.mxu0 0.0
    %2112 = vmatpush.msra.mxu0 0.0
    %2113 = vmatpush.msra.mxu0 %v998
    %2114 = vmatpush.msra.mxu0 %v997
    %2115 = vmatpush.msra.mxu0 %v996
    %2116 = vmatpush.msra.mxu0 %v995
    %2117 = vmatmul.f32.gmra.mxu0 %v2099
    %v2118 = vpop.f32.mrf.mxu0
    %v2119 = vadd.f32 %v999, %v2118
    %2120 = vdwg.mxu0
    %v2121 = vmax.f32 %v2119, 0.0
    %v2122 = vmul.f32 %v2121, 0.03125
    %2124 = vrot.lane.b32.xlu0 %v2122, 96
    %v2125 = vpop.permute.xlu0 %2124
    %v2127 = vadd.f32 %v2063, %v2125
    %2129 = vrot.lane.b32.xlu0 %v2127, 32
    %v2130 = vpop.permute.xlu0 %2129
    %v2131 = vsel %vm153, %v2130, 0
    %2133 = vmatpush.msra.mxu0 0.0
    %2134 = vmatpush.msra.mxu0 0.0
    %2135 = vmatpush.msra.mxu0 0.0
    %2136 = vmatpush.msra.mxu0 0.0
    %2137 = vmatpush.msra.mxu0 0.0
    %2138 = vmatpush.msra.mxu0 0.0
    %2139 = vmatpush.msra.mxu0 0.0
    %2140 = vmatpush.msra.mxu0 0.0
    %2141 = vmatpush.msra.mxu0 0.0
    %2142 = vmatpush.msra.mxu0 0.0
    %2143 = vmatpush.msra.mxu0 0.0
    %2144 = vmatpush.msra.mxu0 0.0
    %2145 = vmatpush.msra.mxu0 %v998
    %2146 = vmatpush.msra.mxu0 %v997
    %2147 = vmatpush.msra.mxu0 %v996
    %2148 = vmatpush.msra.mxu0 %v995
    %2149 = vmatmul.f32.gmra.mxu0 %v2131
    %v2150 = vpop.f32.mrf.mxu0
    %v2151 = vadd.f32 %v999, %v2150
    %2152 = vdwg.mxu0
    %v2153 = vmax.f32 %v2151, 0.0
    %v2154 = vmul.f32 %v2153, 0.0625
    %2156 = vrot.lane.b32.xlu0 %v2154, 96
    %v2157 = vpop.permute.xlu0 %2156
    %v2159 = vadd.f32 %v2063, %v2157
    %2161 = vrot.lane.b32.xlu0 %v2159, 32
    %v2162 = vpop.permute.xlu0 %2161
    %v2163 = vsel %vm153, %v2162, 0
    %2165 = vmatpush.msra.mxu0 0.0
    %2166 = vmatpush.msra.mxu0 0.0
    %2167 = vmatpush.msra.mxu0 0.0
    %2168 = vmatpush.msra.mxu0 0.0
    %2169 = vmatpush.msra.mxu0 0.0
    %2170 = vmatpush.msra.mxu0 0.0
    %2171 = vmatpush.msra.mxu0 0.0
    %2172 = vmatpush.msra.mxu0 0.0
    %2173 = vmatpush.msra.mxu0 0.0
    %2174 = vmatpush.msra.mxu0 0.0
    %2175 = vmatpush.msra.mxu0 0.0
    %2176 = vmatpush.msra.mxu0 0.0
    %2177 = vmatpush.msra.mxu0 %v998
    %2178 = vmatpush.msra.mxu0 %v997
    %2179 = vmatpush.msra.mxu0 %v996
    %2180 = vmatpush.msra.mxu0 %v995
    %2181 = vmatmul.f32.gmra.mxu0 %v2163
    %v2182 = vpop.f32.mrf.mxu0
    %v2183 = vadd.f32 %v999, %v2182
    %2184 = vdwg.mxu0
    %v2185 = vmax.f32 %v2183, 0.0
    %v2186 = vmul.f32 %v2121, 2.0
    %v2187 = vadd.f32 %v2089, %v2186
    %v2188 = vmul.f32 %v2153, 2.0
    %v2189 = vadd.f32 %v2187, %v2188
    %v2190 = vadd.f32 %v2189, %v2185
    %v2191 = vmul.f32 %v2190, 0.010416667
    %2193 = vrot.lane.b32.xlu0 %v2191, 96
    %v2194 = vpop.permute.xlu0 %2193
    %v2196 = vadd.f32 %v2063, %v2194
    %2198 = vrot.lane.b32.xlu0 %v2196, 32
    %v2199 = vpop.permute.xlu0 %2198
    %v2200 = vsel %vm153, %v2199, 0
    %2202 = vmatpush.msra.mxu0 0.0
    %2203 = vmatpush.msra.mxu0 0.0
    %2204 = vmatpush.msra.mxu0 0.0
    %2205 = vmatpush.msra.mxu0 0.0
    %2206 = vmatpush.msra.mxu0 0.0
    %2207 = vmatpush.msra.mxu0 0.0
    %2208 = vmatpush.msra.mxu0 0.0
    %2209 = vmatpush.msra.mxu0 0.0
    %2210 = vmatpush.msra.mxu0 0.0
    %2211 = vmatpush.msra.mxu0 0.0
    %2212 = vmatpush.msra.mxu0 0.0
    %2213 = vmatpush.msra.mxu0 0.0
    %2214 = vmatpush.msra.mxu0 %v998
    %2215 = vmatpush.msra.mxu0 %v997
    %2216 = vmatpush.msra.mxu0 %v996
    %2217 = vmatpush.msra.mxu0 %v995
    %2218 = vmatmul.f32.gmra.mxu0 %v2200
    %v2219 = vpop.f32.mrf.mxu0
    %v2220 = vadd.f32 %v999, %v2219
    %2221 = vdwg.mxu0
    %v2222 = vmax.f32 %v2220, 0.0
    %v2223 = vmul.f32 %v2222, 0.03125
    %2225 = vrot.lane.b32.xlu0 %v2223, 96
    %v2226 = vpop.permute.xlu0 %2225
    %v2228 = vadd.f32 %v2196, %v2226
    %2230 = vrot.lane.b32.xlu0 %v2228, 32
    %v2231 = vpop.permute.xlu0 %2230
    %v2232 = vsel %vm153, %v2231, 0
    %2234 = vmatpush.msra.mxu0 0.0
    %2235 = vmatpush.msra.mxu0 0.0
    %2236 = vmatpush.msra.mxu0 0.0
    %2237 = vmatpush.msra.mxu0 0.0
    %2238 = vmatpush.msra.mxu0 0.0
    %2239 = vmatpush.msra.mxu0 0.0
    %2240 = vmatpush.msra.mxu0 0.0
    %2241 = vmatpush.msra.mxu0 0.0
    %2242 = vmatpush.msra.mxu0 0.0
    %2243 = vmatpush.msra.mxu0 0.0
    %2244 = vmatpush.msra.mxu0 0.0
    %2245 = vmatpush.msra.mxu0 0.0
    %2246 = vmatpush.msra.mxu0 %v998
    %2247 = vmatpush.msra.mxu0 %v997
    %2248 = vmatpush.msra.mxu0 %v996
    %2249 = vmatpush.msra.mxu0 %v995
    %2250 = vmatmul.f32.gmra.mxu0 %v2232
    %v2251 = vpop.f32.mrf.mxu0
    %v2252 = vadd.f32 %v999, %v2251
    %2253 = vdwg.mxu0
    %v2254 = vmax.f32 %v2252, 0.0
    %v2255 = vmul.f32 %v2254, 0.03125
    %2257 = vrot.lane.b32.xlu0 %v2255, 96
    %v2258 = vpop.permute.xlu0 %2257
    %v2260 = vadd.f32 %v2196, %v2258
    %2262 = vrot.lane.b32.xlu0 %v2260, 32
    %v2263 = vpop.permute.xlu0 %2262
    %v2264 = vsel %vm153, %v2263, 0
    %2266 = vmatpush.msra.mxu0 0.0
    %2267 = vmatpush.msra.mxu0 0.0
    %2268 = vmatpush.msra.mxu0 0.0
    %2269 = vmatpush.msra.mxu0 0.0
    %2270 = vmatpush.msra.mxu0 0.0
    %2271 = vmatpush.msra.mxu0 0.0
    %2272 = vmatpush.msra.mxu0 0.0
    %2273 = vmatpush.msra.mxu0 0.0
    %2274 = vmatpush.msra.mxu0 0.0
    %2275 = vmatpush.msra.mxu0 0.0
    %2276 = vmatpush.msra.mxu0 0.0
    %2277 = vmatpush.msra.mxu0 0.0
    %2278 = vmatpush.msra.mxu0 %v998
    %2279 = vmatpush.msra.mxu0 %v997
    %2280 = vmatpush.msra.mxu0 %v996
    %2281 = vmatpush.msra.mxu0 %v995
    %2282 = vmatmul.f32.gmra.mxu0 %v2264
    %v2283 = vpop.f32.mrf.mxu0
    %v2284 = vadd.f32 %v999, %v2283
    %2285 = vdwg.mxu0
    %v2286 = vmax.f32 %v2284, 0.0
    %v2287 = vmul.f32 %v2286, 0.0625
    %2289 = vrot.lane.b32.xlu0 %v2287, 96
    %v2290 = vpop.permute.xlu0 %2289
    %v2292 = vadd.f32 %v2196, %v2290
    %2294 = vrot.lane.b32.xlu0 %v2292, 32
    %v2295 = vpop.permute.xlu0 %2294
    %v2296 = vsel %vm153, %v2295, 0
    %2298 = vmatpush.msra.mxu0 0.0
    %2299 = vmatpush.msra.mxu0 0.0
    %2300 = vmatpush.msra.mxu0 0.0
    %2301 = vmatpush.msra.mxu0 0.0
    %2302 = vmatpush.msra.mxu0 0.0
    %2303 = vmatpush.msra.mxu0 0.0
    %2304 = vmatpush.msra.mxu0 0.0
    %2305 = vmatpush.msra.mxu0 0.0
    %2306 = vmatpush.msra.mxu0 0.0
    %2307 = vmatpush.msra.mxu0 0.0
    %2308 = vmatpush.msra.mxu0 0.0
    %2309 = vmatpush.msra.mxu0 0.0
    %2310 = vmatpush.msra.mxu0 %v998
    %2311 = vmatpush.msra.mxu0 %v997
    %2312 = vmatpush.msra.mxu0 %v996
    %2313 = vmatpush.msra.mxu0 %v995
    %2314 = vmatmul.f32.gmra.mxu0 %v2296
    %v2315 = vpop.f32.mrf.mxu0
    %v2316 = vadd.f32 %v999, %v2315
    %2317 = vdwg.mxu0
    %v2318 = vmax.f32 %v2316, 0.0
    %v2319 = vmul.f32 %v2254, 2.0
    %v2320 = vadd.f32 %v2222, %v2319
    %v2321 = vmul.f32 %v2286, 2.0
    %v2322 = vadd.f32 %v2320, %v2321
    %v2323 = vadd.f32 %v2322, %v2318
    %v2324 = vmul.f32 %v2323, 0.010416667
    %2326 = vrot.lane.b32.xlu0 %v2324, 96
    %v2327 = vpop.permute.xlu0 %2326
    %v2329 = vadd.f32 %v2196, %v2327
    %2331 = vrot.lane.b32.xlu0 %v2329, 32
    %v2332 = vpop.permute.xlu0 %2331
    %v2333 = vsel %vm153, %v2332, 0
    %2335 = vmatpush.msra.mxu0 0.0
    %2336 = vmatpush.msra.mxu0 0.0
    %2337 = vmatpush.msra.mxu0 0.0
    %2338 = vmatpush.msra.mxu0 0.0
    %2339 = vmatpush.msra.mxu0 0.0
    %2340 = vmatpush.msra.mxu0 0.0
    %2341 = vmatpush.msra.mxu0 0.0
    %2342 = vmatpush.msra.mxu0 0.0
    %2343 = vmatpush.msra.mxu0 0.0
    %2344 = vmatpush.msra.mxu0 0.0
    %2345 = vmatpush.msra.mxu0 0.0
    %2346 = vmatpush.msra.mxu0 0.0
    %2347 = vmatpush.msra.mxu0 %v998
    %2348 = vmatpush.msra.mxu0 %v997
    %2349 = vmatpush.msra.mxu0 %v996
    %2350 = vmatpush.msra.mxu0 %v995
    %2351 = vmatmul.f32.gmra.mxu0 %v2333
    %v2352 = vpop.f32.mrf.mxu0
    %v2353 = vadd.f32 %v999, %v2352
    %2354 = vdwg.mxu0
    %v2355 = vmax.f32 %v2353, 0.0
    %v2356 = vmul.f32 %v2355, 0.03125
    %2358 = vrot.lane.b32.xlu0 %v2356, 96
    %v2359 = vpop.permute.xlu0 %2358
    %v2361 = vadd.f32 %v2329, %v2359
    %2363 = vrot.lane.b32.xlu0 %v2361, 32
    %v2364 = vpop.permute.xlu0 %2363
    %v2365 = vsel %vm153, %v2364, 0
    %2367 = vmatpush.msra.mxu0 0.0
    %2368 = vmatpush.msra.mxu0 0.0
    %2369 = vmatpush.msra.mxu0 0.0
    %2370 = vmatpush.msra.mxu0 0.0
    %2371 = vmatpush.msra.mxu0 0.0
    %2372 = vmatpush.msra.mxu0 0.0
    %2373 = vmatpush.msra.mxu0 0.0
    %2374 = vmatpush.msra.mxu0 0.0
    %2375 = vmatpush.msra.mxu0 0.0
    %2376 = vmatpush.msra.mxu0 0.0
    %2377 = vmatpush.msra.mxu0 0.0
    %2378 = vmatpush.msra.mxu0 0.0
    %2379 = vmatpush.msra.mxu0 %v998
    %2380 = vmatpush.msra.mxu0 %v997
    %2381 = vmatpush.msra.mxu0 %v996
    %2382 = vmatpush.msra.mxu0 %v995
    %2383 = vmatmul.f32.gmra.mxu0 %v2365
    %v2384 = vpop.f32.mrf.mxu0
    %v2385 = vadd.f32 %v999, %v2384
    %2386 = vdwg.mxu0
    %v2387 = vmax.f32 %v2385, 0.0
    %v2388 = vmul.f32 %v2387, 0.03125
    %2390 = vrot.lane.b32.xlu0 %v2388, 96
    %v2391 = vpop.permute.xlu0 %2390
    %v2393 = vadd.f32 %v2329, %v2391
    %2395 = vrot.lane.b32.xlu0 %v2393, 32
    %v2396 = vpop.permute.xlu0 %2395
    %v2397 = vsel %vm153, %v2396, 0
    %2399 = vmatpush.msra.mxu0 0.0
    %2400 = vmatpush.msra.mxu0 0.0
    %2401 = vmatpush.msra.mxu0 0.0
    %2402 = vmatpush.msra.mxu0 0.0
    %2403 = vmatpush.msra.mxu0 0.0
    %2404 = vmatpush.msra.mxu0 0.0
    %2405 = vmatpush.msra.mxu0 0.0
    %2406 = vmatpush.msra.mxu0 0.0
    %2407 = vmatpush.msra.mxu0 0.0
    %2408 = vmatpush.msra.mxu0 0.0
    %2409 = vmatpush.msra.mxu0 0.0
    %2410 = vmatpush.msra.mxu0 0.0
    %2411 = vmatpush.msra.mxu0 %v998
    %2412 = vmatpush.msra.mxu0 %v997
    %2413 = vmatpush.msra.mxu0 %v996
    %2414 = vmatpush.msra.mxu0 %v995
    %2415 = vmatmul.f32.gmra.mxu0 %v2397
    %v2416 = vpop.f32.mrf.mxu0
    %v2417 = vadd.f32 %v999, %v2416
    %2418 = vdwg.mxu0
    %v2419 = vmax.f32 %v2417, 0.0
    %v2420 = vmul.f32 %v2419, 0.0625
    %2422 = vrot.lane.b32.xlu0 %v2420, 96
    %v2423 = vpop.permute.xlu0 %2422
    %v2425 = vadd.f32 %v2329, %v2423
    %2427 = vrot.lane.b32.xlu0 %v2425, 32
    %v2428 = vpop.permute.xlu0 %2427
    %v2429 = vsel %vm153, %v2428, 0
    %2431 = vmatpush.msra.mxu0 0.0
    %2432 = vmatpush.msra.mxu0 0.0
    %2433 = vmatpush.msra.mxu0 0.0
    %2434 = vmatpush.msra.mxu0 0.0
    %2435 = vmatpush.msra.mxu0 0.0
    %2436 = vmatpush.msra.mxu0 0.0
    %2437 = vmatpush.msra.mxu0 0.0
    %2438 = vmatpush.msra.mxu0 0.0
    %2439 = vmatpush.msra.mxu0 0.0
    %2440 = vmatpush.msra.mxu0 0.0
    %2441 = vmatpush.msra.mxu0 0.0
    %2442 = vmatpush.msra.mxu0 0.0
    %2443 = vmatpush.msra.mxu0 %v998
    %2444 = vmatpush.msra.mxu0 %v997
    %2445 = vmatpush.msra.mxu0 %v996
    %2446 = vmatpush.msra.mxu0 %v995
    %2447 = vmatmul.f32.gmra.mxu0 %v2429
    %v2448 = vpop.f32.mrf.mxu0
    %v2449 = vadd.f32 %v999, %v2448
    %2450 = vdwg.mxu0
    %v2451 = vmax.f32 %v2449, 0.0
    %v2452 = vmul.f32 %v2387, 2.0
    %v2453 = vadd.f32 %v2355, %v2452
    %v2454 = vmul.f32 %v2419, 2.0
    %v2455 = vadd.f32 %v2453, %v2454
    %v2456 = vadd.f32 %v2455, %v2451
    %v2457 = vmul.f32 %v2456, 0.010416667
    %2459 = vrot.lane.b32.xlu0 %v2457, 96
    %v2460 = vpop.permute.xlu0 %2459
    %v2462 = vadd.f32 %v2329, %v2460
    %2464 = vrot.lane.b32.xlu0 %v2462, 32
    %v2465 = vpop.permute.xlu0 %2464
    %v2466 = vsel %vm153, %v2465, 0
    %2468 = vmatpush.msra.mxu0 0.0
    %2469 = vmatpush.msra.mxu0 0.0
    %2470 = vmatpush.msra.mxu0 0.0
    %2471 = vmatpush.msra.mxu0 0.0
    %2472 = vmatpush.msra.mxu0 0.0
    %2473 = vmatpush.msra.mxu0 0.0
    %2474 = vmatpush.msra.mxu0 0.0
    %2475 = vmatpush.msra.mxu0 0.0
    %2476 = vmatpush.msra.mxu0 0.0
    %2477 = vmatpush.msra.mxu0 0.0
    %2478 = vmatpush.msra.mxu0 0.0
    %2479 = vmatpush.msra.mxu0 0.0
    %2480 = vmatpush.msra.mxu0 %v998
    %2481 = vmatpush.msra.mxu0 %v997
    %2482 = vmatpush.msra.mxu0 %v996
    %2483 = vmatpush.msra.mxu0 %v995
    %2484 = vmatmul.f32.gmra.mxu0 %v2466
    %v2485 = vpop.f32.mrf.mxu0
    %v2486 = vadd.f32 %v999, %v2485
    %2487 = vdwg.mxu0
    %v2488 = vmax.f32 %v2486, 0.0
    %v2489 = vmul.f32 %v2488, 0.03125
    %2491 = vrot.lane.b32.xlu0 %v2489, 96
    %v2492 = vpop.permute.xlu0 %2491
    %v2494 = vadd.f32 %v2462, %v2492
    %2496 = vrot.lane.b32.xlu0 %v2494, 32
    %v2497 = vpop.permute.xlu0 %2496
    %v2498 = vsel %vm153, %v2497, 0
    %2500 = vmatpush.msra.mxu0 0.0
    %2501 = vmatpush.msra.mxu0 0.0
    %2502 = vmatpush.msra.mxu0 0.0
    %2503 = vmatpush.msra.mxu0 0.0
    %2504 = vmatpush.msra.mxu0 0.0
    %2505 = vmatpush.msra.mxu0 0.0
    %2506 = vmatpush.msra.mxu0 0.0
    %2507 = vmatpush.msra.mxu0 0.0
    %2508 = vmatpush.msra.mxu0 0.0
    %2509 = vmatpush.msra.mxu0 0.0
    %2510 = vmatpush.msra.mxu0 0.0
    %2511 = vmatpush.msra.mxu0 0.0
    %2512 = vmatpush.msra.mxu0 %v998
    %2513 = vmatpush.msra.mxu0 %v997
    %2514 = vmatpush.msra.mxu0 %v996
    %2515 = vmatpush.msra.mxu0 %v995
    %2516 = vmatmul.f32.gmra.mxu0 %v2498
    %v2517 = vpop.f32.mrf.mxu0
    %v2518 = vadd.f32 %v999, %v2517
    %2519 = vdwg.mxu0
    %v2520 = vmax.f32 %v2518, 0.0
    %v2521 = vmul.f32 %v2520, 0.03125
    %2523 = vrot.lane.b32.xlu0 %v2521, 96
    %v2524 = vpop.permute.xlu0 %2523
    %v2526 = vadd.f32 %v2462, %v2524
    %2528 = vrot.lane.b32.xlu0 %v2526, 32
    %v2529 = vpop.permute.xlu0 %2528
    %v2530 = vsel %vm153, %v2529, 0
    %2532 = vmatpush.msra.mxu0 0.0
    %2533 = vmatpush.msra.mxu0 0.0
    %2534 = vmatpush.msra.mxu0 0.0
    %2535 = vmatpush.msra.mxu0 0.0
    %2536 = vmatpush.msra.mxu0 0.0
    %2537 = vmatpush.msra.mxu0 0.0
    %2538 = vmatpush.msra.mxu0 0.0
    %2539 = vmatpush.msra.mxu0 0.0
    %2540 = vmatpush.msra.mxu0 0.0
    %2541 = vmatpush.msra.mxu0 0.0
    %2542 = vmatpush.msra.mxu0 0.0
    %2543 = vmatpush.msra.mxu0 0.0
    %2544 = vmatpush.msra.mxu0 %v998
    %2545 = vmatpush.msra.mxu0 %v997
    %2546 = vmatpush.msra.mxu0 %v996
    %2547 = vmatpush.msra.mxu0 %v995
    %2548 = vmatmul.f32.gmra.mxu0 %v2530
    %v2549 = vpop.f32.mrf.mxu0
    %v2550 = vadd.f32 %v999, %v2549
    %2551 = vdwg.mxu0
    %v2552 = vmax.f32 %v2550, 0.0
    %v2553 = vmul.f32 %v2552, 0.0625
    %2555 = vrot.lane.b32.xlu0 %v2553, 96
    %v2556 = vpop.permute.xlu0 %2555
    %v2558 = vadd.f32 %v2462, %v2556
    %2560 = vrot.lane.b32.xlu0 %v2558, 32
    %v2561 = vpop.permute.xlu0 %2560
    %v2562 = vsel %vm153, %v2561, 0
    %2564 = vmatpush.msra.mxu0 0.0
    %2565 = vmatpush.msra.mxu0 0.0
    %2566 = vmatpush.msra.mxu0 0.0
    %2567 = vmatpush.msra.mxu0 0.0
    %2568 = vmatpush.msra.mxu0 0.0
    %2569 = vmatpush.msra.mxu0 0.0
    %2570 = vmatpush.msra.mxu0 0.0
    %2571 = vmatpush.msra.mxu0 0.0
    %2572 = vmatpush.msra.mxu0 0.0
    %2573 = vmatpush.msra.mxu0 0.0
    %2574 = vmatpush.msra.mxu0 0.0
    %2575 = vmatpush.msra.mxu0 0.0
    %2576 = vmatpush.msra.mxu0 %v998
    %2577 = vmatpush.msra.mxu0 %v997
    %2578 = vmatpush.msra.mxu0 %v996
    %2579 = vmatpush.msra.mxu0 %v995
    %2580 = vmatmul.f32.gmra.mxu0 %v2562
    %v2581 = vpop.f32.mrf.mxu0
    %v2582 = vadd.f32 %v999, %v2581
    %2583 = vdwg.mxu0
    %v2584 = vmax.f32 %v2582, 0.0
    %v2585 = vmul.f32 %v2520, 2.0
    %v2586 = vadd.f32 %v2488, %v2585
    %v2587 = vmul.f32 %v2552, 2.0
    %v2588 = vadd.f32 %v2586, %v2587
    %v2589 = vadd.f32 %v2588, %v2584
    %v2590 = vmul.f32 %v2589, 0.010416667
    %2592 = vrot.lane.b32.xlu0 %v2590, 96
    %v2593 = vpop.permute.xlu0 %2592
    %v2595 = vadd.f32 %v2462, %v2593
    %2597 = vrot.lane.b32.xlu0 %v2595, 32
    %v2598 = vpop.permute.xlu0 %2597
    %v2599 = vsel %vm153, %v2598, 0
    %2601 = vmatpush.msra.mxu0 0.0
    %2602 = vmatpush.msra.mxu0 0.0
    %2603 = vmatpush.msra.mxu0 0.0
    %2604 = vmatpush.msra.mxu0 0.0
    %2605 = vmatpush.msra.mxu0 0.0
    %2606 = vmatpush.msra.mxu0 0.0
    %2607 = vmatpush.msra.mxu0 0.0
    %2608 = vmatpush.msra.mxu0 0.0
    %2609 = vmatpush.msra.mxu0 0.0
    %2610 = vmatpush.msra.mxu0 0.0
    %2611 = vmatpush.msra.mxu0 0.0
    %2612 = vmatpush.msra.mxu0 0.0
    %2613 = vmatpush.msra.mxu0 %v998
    %2614 = vmatpush.msra.mxu0 %v997
    %2615 = vmatpush.msra.mxu0 %v996
    %2616 = vmatpush.msra.mxu0 %v995
    %2617 = vmatmul.f32.gmra.mxu0 %v2599
    %v2618 = vpop.f32.mrf.mxu0
    %v2619 = vadd.f32 %v999, %v2618
    %2620 = vdwg.mxu0
    %v2621 = vmax.f32 %v2619, 0.0
    %v2622 = vmul.f32 %v2621, 0.03125
    %2624 = vrot.lane.b32.xlu0 %v2622, 96
    %v2625 = vpop.permute.xlu0 %2624
    %v2627 = vadd.f32 %v2595, %v2625
    %2629 = vrot.lane.b32.xlu0 %v2627, 32
    %v2630 = vpop.permute.xlu0 %2629
    %v2631 = vsel %vm153, %v2630, 0
    %2633 = vmatpush.msra.mxu0 0.0
    %2634 = vmatpush.msra.mxu0 0.0
    %2635 = vmatpush.msra.mxu0 0.0
    %2636 = vmatpush.msra.mxu0 0.0
    %2637 = vmatpush.msra.mxu0 0.0
    %2638 = vmatpush.msra.mxu0 0.0
    %2639 = vmatpush.msra.mxu0 0.0
    %2640 = vmatpush.msra.mxu0 0.0
    %2641 = vmatpush.msra.mxu0 0.0
    %2642 = vmatpush.msra.mxu0 0.0
    %2643 = vmatpush.msra.mxu0 0.0
    %2644 = vmatpush.msra.mxu0 0.0
    %2645 = vmatpush.msra.mxu0 %v998
    %2646 = vmatpush.msra.mxu0 %v997
    %2647 = vmatpush.msra.mxu0 %v996
    %2648 = vmatpush.msra.mxu0 %v995
    %2649 = vmatmul.f32.gmra.mxu0 %v2631
    %v2650 = vpop.f32.mrf.mxu0
    %v2651 = vadd.f32 %v999, %v2650
    %2652 = vdwg.mxu0
    %v2653 = vmax.f32 %v2651, 0.0
    %v2654 = vmul.f32 %v2653, 0.03125
    %2656 = vrot.lane.b32.xlu0 %v2654, 96
    %v2657 = vpop.permute.xlu0 %2656
    %v2659 = vadd.f32 %v2595, %v2657
    %2661 = vrot.lane.b32.xlu0 %v2659, 32
    %v2662 = vpop.permute.xlu0 %2661
    %v2663 = vsel %vm153, %v2662, 0
    %2665 = vmatpush.msra.mxu0 0.0
    %2666 = vmatpush.msra.mxu0 0.0
    %2667 = vmatpush.msra.mxu0 0.0
    %2668 = vmatpush.msra.mxu0 0.0
    %2669 = vmatpush.msra.mxu0 0.0
    %2670 = vmatpush.msra.mxu0 0.0
    %2671 = vmatpush.msra.mxu0 0.0
    %2672 = vmatpush.msra.mxu0 0.0
    %2673 = vmatpush.msra.mxu0 0.0
    %2674 = vmatpush.msra.mxu0 0.0
    %2675 = vmatpush.msra.mxu0 0.0
    %2676 = vmatpush.msra.mxu0 0.0
    %2677 = vmatpush.msra.mxu0 %v998
    %2678 = vmatpush.msra.mxu0 %v997
    %2679 = vmatpush.msra.mxu0 %v996
    %2680 = vmatpush.msra.mxu0 %v995
    %2681 = vmatmul.f32.gmra.mxu0 %v2663
    %v2682 = vpop.f32.mrf.mxu0
    %v2683 = vadd.f32 %v999, %v2682
    %2684 = vdwg.mxu0
    %v2685 = vmax.f32 %v2683, 0.0
    %v2686 = vmul.f32 %v2685, 0.0625
    %2688 = vrot.lane.b32.xlu0 %v2686, 96
    %v2689 = vpop.permute.xlu0 %2688
    %v2691 = vadd.f32 %v2595, %v2689
    %2693 = vrot.lane.b32.xlu0 %v2691, 32
    %v2694 = vpop.permute.xlu0 %2693
    %v2695 = vsel %vm153, %v2694, 0
    %2697 = vmatpush.msra.mxu0 0.0
    %2698 = vmatpush.msra.mxu0 0.0
    %2699 = vmatpush.msra.mxu0 0.0
    %2700 = vmatpush.msra.mxu0 0.0
    %2701 = vmatpush.msra.mxu0 0.0
    %2702 = vmatpush.msra.mxu0 0.0
    %2703 = vmatpush.msra.mxu0 0.0
    %2704 = vmatpush.msra.mxu0 0.0
    %2705 = vmatpush.msra.mxu0 0.0
    %2706 = vmatpush.msra.mxu0 0.0
    %2707 = vmatpush.msra.mxu0 0.0
    %2708 = vmatpush.msra.mxu0 0.0
    %2709 = vmatpush.msra.mxu0 %v998
    %2710 = vmatpush.msra.mxu0 %v997
    %2711 = vmatpush.msra.mxu0 %v996
    %2712 = vmatpush.msra.mxu0 %v995
    %2713 = vmatmul.f32.gmra.mxu0 %v2695
    %v2714 = vpop.f32.mrf.mxu0
    %v2715 = vadd.f32 %v999, %v2714
    %2716 = vdwg.mxu0
    %v2717 = vmax.f32 %v2715, 0.0
    %v2718 = vmul.f32 %v2653, 2.0
    %v2719 = vadd.f32 %v2621, %v2718
    %v2720 = vmul.f32 %v2685, 2.0
    %v2721 = vadd.f32 %v2719, %v2720
    %v2722 = vadd.f32 %v2721, %v2717
    %v2723 = vmul.f32 %v2722, 0.010416667
    %2725 = vrot.lane.b32.xlu0 %v2723, 96
    %v2726 = vpop.permute.xlu0 %2725
    %v2728 = vadd.f32 %v2595, %v2726
    %2730 = vrot.lane.b32.xlu0 %v2728, 32
    %v2731 = vpop.permute.xlu0 %2730
    %v2732 = vsel %vm153, %v2731, 0
    %2734 = vmatpush.msra.mxu0 0.0
    %2735 = vmatpush.msra.mxu0 0.0
    %2736 = vmatpush.msra.mxu0 0.0
    %2737 = vmatpush.msra.mxu0 0.0
    %2738 = vmatpush.msra.mxu0 0.0
    %2739 = vmatpush.msra.mxu0 0.0
    %2740 = vmatpush.msra.mxu0 0.0
    %2741 = vmatpush.msra.mxu0 0.0
    %2742 = vmatpush.msra.mxu0 0.0
    %2743 = vmatpush.msra.mxu0 0.0
    %2744 = vmatpush.msra.mxu0 0.0
    %2745 = vmatpush.msra.mxu0 0.0
    %2746 = vmatpush.msra.mxu0 %v998
    %2747 = vmatpush.msra.mxu0 %v997
    %2748 = vmatpush.msra.mxu0 %v996
    %2749 = vmatpush.msra.mxu0 %v995
    %2750 = vmatmul.f32.gmra.mxu0 %v2732
    %v2751 = vpop.f32.mrf.mxu0
    %v2752 = vadd.f32 %v999, %v2751
    %2753 = vdwg.mxu0
    %v2754 = vmax.f32 %v2752, 0.0
    %v2755 = vmul.f32 %v2754, 0.03125
    %2757 = vrot.lane.b32.xlu0 %v2755, 96
    %v2758 = vpop.permute.xlu0 %2757
    %v2760 = vadd.f32 %v2728, %v2758
    %2762 = vrot.lane.b32.xlu0 %v2760, 32
    %v2763 = vpop.permute.xlu0 %2762
    %v2764 = vsel %vm153, %v2763, 0
    %2766 = vmatpush.msra.mxu0 0.0
    %2767 = vmatpush.msra.mxu0 0.0
    %2768 = vmatpush.msra.mxu0 0.0
    %2769 = vmatpush.msra.mxu0 0.0
    %2770 = vmatpush.msra.mxu0 0.0
    %2771 = vmatpush.msra.mxu0 0.0
    %2772 = vmatpush.msra.mxu0 0.0
    %2773 = vmatpush.msra.mxu0 0.0
    %2774 = vmatpush.msra.mxu0 0.0
    %2775 = vmatpush.msra.mxu0 0.0
    %2776 = vmatpush.msra.mxu0 0.0
    %2777 = vmatpush.msra.mxu0 0.0
    %2778 = vmatpush.msra.mxu0 %v998
    %2779 = vmatpush.msra.mxu0 %v997
    %2780 = vmatpush.msra.mxu0 %v996
    %2781 = vmatpush.msra.mxu0 %v995
    %2782 = vmatmul.f32.gmra.mxu0 %v2764
    %v2783 = vpop.f32.mrf.mxu0
    %v2784 = vadd.f32 %v999, %v2783
    %2785 = vdwg.mxu0
    %v2786 = vmax.f32 %v2784, 0.0
    %v2787 = vmul.f32 %v2786, 0.03125
    %2789 = vrot.lane.b32.xlu0 %v2787, 96
    %v2790 = vpop.permute.xlu0 %2789
    %v2792 = vadd.f32 %v2728, %v2790
    %2794 = vrot.lane.b32.xlu0 %v2792, 32
    %v2795 = vpop.permute.xlu0 %2794
    %v2796 = vsel %vm153, %v2795, 0
    %2798 = vmatpush.msra.mxu0 0.0
    %2799 = vmatpush.msra.mxu0 0.0
    %2800 = vmatpush.msra.mxu0 0.0
    %2801 = vmatpush.msra.mxu0 0.0
    %2802 = vmatpush.msra.mxu0 0.0
    %2803 = vmatpush.msra.mxu0 0.0
    %2804 = vmatpush.msra.mxu0 0.0
    %2805 = vmatpush.msra.mxu0 0.0
    %2806 = vmatpush.msra.mxu0 0.0
    %2807 = vmatpush.msra.mxu0 0.0
    %2808 = vmatpush.msra.mxu0 0.0
    %2809 = vmatpush.msra.mxu0 0.0
    %2810 = vmatpush.msra.mxu0 %v998
    %2811 = vmatpush.msra.mxu0 %v997
    %2812 = vmatpush.msra.mxu0 %v996
    %2813 = vmatpush.msra.mxu0 %v995
    %2814 = vmatmul.f32.gmra.mxu0 %v2796
    %v2815 = vpop.f32.mrf.mxu0
    %v2816 = vadd.f32 %v999, %v2815
    %2817 = vdwg.mxu0
    %v2818 = vmax.f32 %v2816, 0.0
    %v2819 = vmul.f32 %v2818, 0.0625
    %2821 = vrot.lane.b32.xlu0 %v2819, 96
    %v2822 = vpop.permute.xlu0 %2821
    %v2824 = vadd.f32 %v2728, %v2822
    %2826 = vrot.lane.b32.xlu0 %v2824, 32
    %v2827 = vpop.permute.xlu0 %2826
    %v2828 = vsel %vm153, %v2827, 0
    %2830 = vmatpush.msra.mxu0 0.0
    %2831 = vmatpush.msra.mxu0 0.0
    %2832 = vmatpush.msra.mxu0 0.0
    %2833 = vmatpush.msra.mxu0 0.0
    %2834 = vmatpush.msra.mxu0 0.0
    %2835 = vmatpush.msra.mxu0 0.0
    %2836 = vmatpush.msra.mxu0 0.0
    %2837 = vmatpush.msra.mxu0 0.0
    %2838 = vmatpush.msra.mxu0 0.0
    %2839 = vmatpush.msra.mxu0 0.0
    %2840 = vmatpush.msra.mxu0 0.0
    %2841 = vmatpush.msra.mxu0 0.0
    %2842 = vmatpush.msra.mxu0 %v998
    %2843 = vmatpush.msra.mxu0 %v997
    %2844 = vmatpush.msra.mxu0 %v996
    %2845 = vmatpush.msra.mxu0 %v995
    %2846 = vmatmul.f32.gmra.mxu0 %v2828
    %v2847 = vpop.f32.mrf.mxu0
    %v2848 = vadd.f32 %v999, %v2847
    %2849 = vdwg.mxu0
    %v2850 = vmax.f32 %v2848, 0.0
    %v2851 = vmul.f32 %v2786, 2.0
    %v2852 = vadd.f32 %v2754, %v2851
    %v2853 = vmul.f32 %v2818, 2.0
    %v2854 = vadd.f32 %v2852, %v2853
    %v2855 = vadd.f32 %v2854, %v2850
    %v2856 = vmul.f32 %v2855, 0.010416667
    %2858 = vrot.lane.b32.xlu0 %v2856, 96
    %v2859 = vpop.permute.xlu0 %2858
    %v2861 = vadd.f32 %v2728, %v2859
    %2863 = vrot.lane.b32.xlu0 %v2861, 32
    %v2864 = vpop.permute.xlu0 %2863
    %v2865 = vsel %vm153, %v2864, 0
    %2867 = vmatpush.msra.mxu0 0.0
    %2868 = vmatpush.msra.mxu0 0.0
    %2869 = vmatpush.msra.mxu0 0.0
    %2870 = vmatpush.msra.mxu0 0.0
    %2871 = vmatpush.msra.mxu0 0.0
    %2872 = vmatpush.msra.mxu0 0.0
    %2873 = vmatpush.msra.mxu0 0.0
    %2874 = vmatpush.msra.mxu0 0.0
    %2875 = vmatpush.msra.mxu0 0.0
    %2876 = vmatpush.msra.mxu0 0.0
    %2877 = vmatpush.msra.mxu0 0.0
    %2878 = vmatpush.msra.mxu0 0.0
    %2879 = vmatpush.msra.mxu0 %v998
    %2880 = vmatpush.msra.mxu0 %v997
    %2881 = vmatpush.msra.mxu0 %v996
    %2882 = vmatpush.msra.mxu0 %v995
    %2883 = vmatmul.f32.gmra.mxu0 %v2865
    %v2884 = vpop.f32.mrf.mxu0
    %v2885 = vadd.f32 %v999, %v2884
    %2886 = vdwg.mxu0
    %v2887 = vmax.f32 %v2885, 0.0
    %v2888 = vmul.f32 %v2887, 0.03125
    %2890 = vrot.lane.b32.xlu0 %v2888, 96
    %v2891 = vpop.permute.xlu0 %2890
    %v2893 = vadd.f32 %v2861, %v2891
    %2895 = vrot.lane.b32.xlu0 %v2893, 32
    %v2896 = vpop.permute.xlu0 %2895
    %v2897 = vsel %vm153, %v2896, 0
    %2899 = vmatpush.msra.mxu0 0.0
    %2900 = vmatpush.msra.mxu0 0.0
    %2901 = vmatpush.msra.mxu0 0.0
    %2902 = vmatpush.msra.mxu0 0.0
    %2903 = vmatpush.msra.mxu0 0.0
    %2904 = vmatpush.msra.mxu0 0.0
    %2905 = vmatpush.msra.mxu0 0.0
    %2906 = vmatpush.msra.mxu0 0.0
    %2907 = vmatpush.msra.mxu0 0.0
    %2908 = vmatpush.msra.mxu0 0.0
    %2909 = vmatpush.msra.mxu0 0.0
    %2910 = vmatpush.msra.mxu0 0.0
    %2911 = vmatpush.msra.mxu0 %v998
    %2912 = vmatpush.msra.mxu0 %v997
    %2913 = vmatpush.msra.mxu0 %v996
    %2914 = vmatpush.msra.mxu0 %v995
    %2915 = vmatmul.f32.gmra.mxu0 %v2897
    %v2916 = vpop.f32.mrf.mxu0
    %v2917 = vadd.f32 %v999, %v2916
    %2918 = vdwg.mxu0
    %v2919 = vmax.f32 %v2917, 0.0
    %v2920 = vmul.f32 %v2919, 0.03125
    %2922 = vrot.lane.b32.xlu0 %v2920, 96
    %v2923 = vpop.permute.xlu0 %2922
    %v2925 = vadd.f32 %v2861, %v2923
    %2927 = vrot.lane.b32.xlu0 %v2925, 32
    %v2928 = vpop.permute.xlu0 %2927
    %v2929 = vsel %vm153, %v2928, 0
    %2931 = vmatpush.msra.mxu0 0.0
    %2932 = vmatpush.msra.mxu0 0.0
    %2933 = vmatpush.msra.mxu0 0.0
    %2934 = vmatpush.msra.mxu0 0.0
    %2935 = vmatpush.msra.mxu0 0.0
    %2936 = vmatpush.msra.mxu0 0.0
    %2937 = vmatpush.msra.mxu0 0.0
    %2938 = vmatpush.msra.mxu0 0.0
    %2939 = vmatpush.msra.mxu0 0.0
    %2940 = vmatpush.msra.mxu0 0.0
    %2941 = vmatpush.msra.mxu0 0.0
    %2942 = vmatpush.msra.mxu0 0.0
    %2943 = vmatpush.msra.mxu0 %v998
    %2944 = vmatpush.msra.mxu0 %v997
    %2945 = vmatpush.msra.mxu0 %v996
    %2946 = vmatpush.msra.mxu0 %v995
    %2947 = vmatmul.f32.gmra.mxu0 %v2929
    %v2948 = vpop.f32.mrf.mxu0
    %v2949 = vadd.f32 %v999, %v2948
    %2950 = vdwg.mxu0
    %v2951 = vmax.f32 %v2949, 0.0
    %v2952 = vmul.f32 %v2951, 0.0625
    %2954 = vrot.lane.b32.xlu0 %v2952, 96
    %v2955 = vpop.permute.xlu0 %2954
    %v2957 = vadd.f32 %v2861, %v2955
    %2959 = vrot.lane.b32.xlu0 %v2957, 32
    %v2960 = vpop.permute.xlu0 %2959
    %v2961 = vsel %vm153, %v2960, 0
    %2963 = vmatpush.msra.mxu0 0.0
    %2964 = vmatpush.msra.mxu0 0.0
    %2965 = vmatpush.msra.mxu0 0.0
    %2966 = vmatpush.msra.mxu0 0.0
    %2967 = vmatpush.msra.mxu0 0.0
    %2968 = vmatpush.msra.mxu0 0.0
    %2969 = vmatpush.msra.mxu0 0.0
    %2970 = vmatpush.msra.mxu0 0.0
    %2971 = vmatpush.msra.mxu0 0.0
    %2972 = vmatpush.msra.mxu0 0.0
    %2973 = vmatpush.msra.mxu0 0.0
    %2974 = vmatpush.msra.mxu0 0.0
    %2975 = vmatpush.msra.mxu0 %v998
    %2976 = vmatpush.msra.mxu0 %v997
    %2977 = vmatpush.msra.mxu0 %v996
    %2978 = vmatpush.msra.mxu0 %v995
    %2979 = vmatmul.f32.gmra.mxu0 %v2961
    %v2980 = vpop.f32.mrf.mxu0
    %v2981 = vadd.f32 %v999, %v2980
    %2982 = vdwg.mxu0
    %v2983 = vmax.f32 %v2981, 0.0
    %v2984 = vmul.f32 %v2919, 2.0
    %v2985 = vadd.f32 %v2887, %v2984
    %v2986 = vmul.f32 %v2951, 2.0
    %v2987 = vadd.f32 %v2985, %v2986
    %v2988 = vadd.f32 %v2987, %v2983
    %v2989 = vmul.f32 %v2988, 0.010416667
    %2991 = vrot.lane.b32.xlu0 %v2989, 96
    %v2992 = vpop.permute.xlu0 %2991
    %v2994 = vadd.f32 %v2861, %v2992
    %2996 = vrot.lane.b32.xlu0 %v2994, 32
    %v2997 = vpop.permute.xlu0 %2996
    %v2998 = vsel %vm153, %v2997, 0
    %3000 = vmatpush.msra.mxu0 0.0
    %3001 = vmatpush.msra.mxu0 0.0
    %3002 = vmatpush.msra.mxu0 0.0
    %3003 = vmatpush.msra.mxu0 0.0
    %3004 = vmatpush.msra.mxu0 0.0
    %3005 = vmatpush.msra.mxu0 0.0
    %3006 = vmatpush.msra.mxu0 0.0
    %3007 = vmatpush.msra.mxu0 0.0
    %3008 = vmatpush.msra.mxu0 0.0
    %3009 = vmatpush.msra.mxu0 0.0
    %3010 = vmatpush.msra.mxu0 0.0
    %3011 = vmatpush.msra.mxu0 0.0
    %3012 = vmatpush.msra.mxu0 %v998
    %3013 = vmatpush.msra.mxu0 %v997
    %3014 = vmatpush.msra.mxu0 %v996
    %3015 = vmatpush.msra.mxu0 %v995
    %3016 = vmatmul.f32.gmra.mxu0 %v2998
    %v3017 = vpop.f32.mrf.mxu0
    %v3018 = vadd.f32 %v999, %v3017
    %3019 = vdwg.mxu0
    %v3020 = vmax.f32 %v3018, 0.0
    %v3021 = vmul.f32 %v3020, 0.03125
    %3023 = vrot.lane.b32.xlu0 %v3021, 96
    %v3024 = vpop.permute.xlu0 %3023
    %v3026 = vadd.f32 %v2994, %v3024
    %3028 = vrot.lane.b32.xlu0 %v3026, 32
    %v3029 = vpop.permute.xlu0 %3028
    %v3030 = vsel %vm153, %v3029, 0
    %3032 = vmatpush.msra.mxu0 0.0
    %3033 = vmatpush.msra.mxu0 0.0
    %3034 = vmatpush.msra.mxu0 0.0
    %3035 = vmatpush.msra.mxu0 0.0
    %3036 = vmatpush.msra.mxu0 0.0
    %3037 = vmatpush.msra.mxu0 0.0
    %3038 = vmatpush.msra.mxu0 0.0
    %3039 = vmatpush.msra.mxu0 0.0
    %3040 = vmatpush.msra.mxu0 0.0
    %3041 = vmatpush.msra.mxu0 0.0
    %3042 = vmatpush.msra.mxu0 0.0
    %3043 = vmatpush.msra.mxu0 0.0
    %3044 = vmatpush.msra.mxu0 %v998
    %3045 = vmatpush.msra.mxu0 %v997
    %3046 = vmatpush.msra.mxu0 %v996
    %3047 = vmatpush.msra.mxu0 %v995
    %3048 = vmatmul.f32.gmra.mxu0 %v3030
    %v3049 = vpop.f32.mrf.mxu0
    %v3050 = vadd.f32 %v999, %v3049
    %3051 = vdwg.mxu0
    %v3052 = vmax.f32 %v3050, 0.0
    %v3053 = vmul.f32 %v3052, 0.03125
    %3055 = vrot.lane.b32.xlu0 %v3053, 96
    %v3056 = vpop.permute.xlu0 %3055
    %v3058 = vadd.f32 %v2994, %v3056
    %3060 = vrot.lane.b32.xlu0 %v3058, 32
    %v3061 = vpop.permute.xlu0 %3060
    %v3062 = vsel %vm153, %v3061, 0
    %3064 = vmatpush.msra.mxu0 0.0
    %3065 = vmatpush.msra.mxu0 0.0
    %3066 = vmatpush.msra.mxu0 0.0
    %3067 = vmatpush.msra.mxu0 0.0
    %3068 = vmatpush.msra.mxu0 0.0
    %3069 = vmatpush.msra.mxu0 0.0
    %3070 = vmatpush.msra.mxu0 0.0
    %3071 = vmatpush.msra.mxu0 0.0
    %3072 = vmatpush.msra.mxu0 0.0
    %3073 = vmatpush.msra.mxu0 0.0
    %3074 = vmatpush.msra.mxu0 0.0
    %3075 = vmatpush.msra.mxu0 0.0
    %3076 = vmatpush.msra.mxu0 %v998
    %3077 = vmatpush.msra.mxu0 %v997
    %3078 = vmatpush.msra.mxu0 %v996
    %3079 = vmatpush.msra.mxu0 %v995
    %3080 = vmatmul.f32.gmra.mxu0 %v3062
    %v3081 = vpop.f32.mrf.mxu0
    %v3082 = vadd.f32 %v999, %v3081
    %3083 = vdwg.mxu0
    %v3084 = vmax.f32 %v3082, 0.0
    %v3085 = vmul.f32 %v3084, 0.0625
    %3087 = vrot.lane.b32.xlu0 %v3085, 96
    %v3088 = vpop.permute.xlu0 %3087
    %v3090 = vadd.f32 %v2994, %v3088
    %3092 = vrot.lane.b32.xlu0 %v3090, 32
    %v3093 = vpop.permute.xlu0 %3092
    %v3094 = vsel %vm153, %v3093, 0
    %3096 = vmatpush.msra.mxu0 0.0
    %3097 = vmatpush.msra.mxu0 0.0
    %3098 = vmatpush.msra.mxu0 0.0
    %3099 = vmatpush.msra.mxu0 0.0
    %3100 = vmatpush.msra.mxu0 0.0
    %3101 = vmatpush.msra.mxu0 0.0
    %3102 = vmatpush.msra.mxu0 0.0
    %3103 = vmatpush.msra.mxu0 0.0
    %3104 = vmatpush.msra.mxu0 0.0
    %3105 = vmatpush.msra.mxu0 0.0
    %3106 = vmatpush.msra.mxu0 0.0
    %3107 = vmatpush.msra.mxu0 0.0
    %3108 = vmatpush.msra.mxu0 %v998
    %3109 = vmatpush.msra.mxu0 %v997
    %3110 = vmatpush.msra.mxu0 %v996
    %3111 = vmatpush.msra.mxu0 %v995
    %3112 = vmatmul.f32.gmra.mxu0 %v3094
    %v3113 = vpop.f32.mrf.mxu0
    %v3114 = vadd.f32 %v999, %v3113
    %3115 = vdwg.mxu0
    %v3116 = vmax.f32 %v3114, 0.0
    %v3117 = vmul.f32 %v3052, 2.0
    %v3118 = vadd.f32 %v3020, %v3117
    %v3119 = vmul.f32 %v3084, 2.0
    %v3120 = vadd.f32 %v3118, %v3119
    %v3121 = vadd.f32 %v3120, %v3116
    %v3122 = vmul.f32 %v3121, 0.010416667
    %3124 = vrot.lane.b32.xlu0 %v3122, 96
    %v3125 = vpop.permute.xlu0 %3124
    %v3127 = vadd.f32 %v2994, %v3125
    %v3128 = vld [vmem:[#allocation3 + $0x90] sm:$0xff]
    %v3129 = vld [vmem:[#allocation3 + $0xa0] sm:$0xff]
    %v3130 = vld [vmem:[#allocation3 + $0xb0] sm:$0xff]
    %v3131 = vld [vmem:[#allocation3 + $0xc0] sm:$0xff]
    %v3132 = vld [vmem:[#allocation3 + $0x110] sm:$0x30]
    %v3133 = vld [vmem:[#allocation3 + $0x113] ss:$0 sm:$0xff]
    %v3134 = vld [vmem:[%s0 + $0x40] sm:$0xff]
    %3136 = vset.pattern.permute.xlu0 0
    %3137 = vperm.xlu0 %3136, %v3134
    %v3138 = vpop.permute.xlu0 %3137
    %v3140 = vperm.slane %v3132, 4
    %v3141 = vmul.f32 %v3138, %v3140
    %3142 = vset.pattern.permute.xlu0 1
    %3143 = vperm.xlu0 %3142, %v3134
    %v3144 = vpop.permute.xlu0 %3143
    %v3146 = vperm.slane %v3132, 5
    %v3147 = vmul.f32 %v3144, %v3146
    %v3148 = vadd.f32 %v3141, %v3147
    %3150 = vrot.lane.b32.xlu0 %v3127, 32
    %v3151 = vpop.permute.xlu0 %3150
    %v3152 = vsel %vm153, %v3151, 0
    %3154 = vmatpush.msra.mxu0 0.0
    %3155 = vmatpush.msra.mxu0 0.0
    %3156 = vmatpush.msra.mxu0 0.0
    %3157 = vmatpush.msra.mxu0 0.0
    %3158 = vmatpush.msra.mxu0 0.0
    %3159 = vmatpush.msra.mxu0 0.0
    %3160 = vmatpush.msra.mxu0 0.0
    %3161 = vmatpush.msra.mxu0 0.0
    %3162 = vmatpush.msra.mxu0 0.0
    %3163 = vmatpush.msra.mxu0 0.0
    %3164 = vmatpush.msra.mxu0 0.0
    %3165 = vmatpush.msra.mxu0 0.0
    %3166 = vmatpush.msra.mxu0 %v3131
    %3167 = vmatpush.msra.mxu0 %v3130
    %3168 = vmatpush.msra.mxu0 %v3129
    %3169 = vmatpush.msra.mxu0 %v3128
    %3170 = vmatmul.f32.gmra.mxu0 %v3152
    %v3171 = vpop.f32.mrf.mxu0
    %v3172 = vadd.f32 %v3148, %v3171
    %3173 = vdwg.mxu0
    %v3174 = vadd.f32 %v3172, %v3133
    %3175 = vst [vmem:[#allocation6] sm:$0xff] %v3174
    // Predicated region
    $region14: #{tpu_custom_call.1} parent=1 // pred_check
      _
    $region15: #{tpu_custom_call.1} parent=1 // pred_check_branch
      %3177 = sbr.rel (0) target = $region17
    $region16: #{tpu_custom_call.1} parent=1 // pred_region
      %3179 = vsyncadd [#allocation5], 0
      %s3181 = sshll.u32 [#allocation6], 4
      %s3182 = int_to_ptr.vmem [resolvable:$true] %s3181
      %s3183 = sshll.u32 %s2, 4
      %s3184 = int_to_ptr.hbm [resolvable:$true] %s3183
      %3186 = dma.vmem_to_hbm [thread:$0]  %s3182, 128, %s3184, [#allocation5]
    $region17: #{tpu_custom_call.1} parent=1 // pred_fallthru
      _
    // Predicated region
    $region18: #{tpu_custom_call.1} parent=1 // pred_check
      _
    $region19: #{tpu_custom_call.1} parent=1 // pred_check_branch
      %3188 = sbr.rel (0) target = $region21
    $region20: #{tpu_custom_call.1} parent=1 // pred_region
      %3190 = dma.done [#allocation5], 128
    $region21: #{tpu_custom_call.1} parent=1 // pred_fallthru
      _
    %3191 = vsyncpa [#allocation4], 1
    %3192 = vsyncpa [#allocation5], 1

</llo_original>
